<compile_context>
chip_gen: v5e
topology: v5e:2x2
jax: 0.10.0
libtpu: 0.0.40
codegen_flags: <defaults>
</compile_context>

<pallas_src>
import functools
import math

import jax
import jax.numpy as jnp
from jax import lax
from jax.experimental import pallas as pl
from jax.experimental.pallas import tpu as pltpu

NEG_SLOPE = 0.01          # nn.LeakyReLU default
EPS = 1e-5                # gnn.InstanceNorm default eps
BF16 = jnp.bfloat16


def _vmem_cap_bytes():
    """Physical per-core VMEM; fall back to the conservative 64 MiB if unknown."""
    try:
        info = pltpu.get_tpu_info()
        cap = getattr(info, "vmem_capacity_bytes", None)
        if cap:
            return int(cap)
    except Exception:
        pass
    return 64 * 1024 * 1024


_VMEM_CAP = _vmem_cap_bytes()
VMEM_LIMIT = int(_VMEM_CAP * 0.75)                 # v7x ~48MiB, v5e/v6e ~96MiB
BIG_TILES = _VMEM_CAP >= 100 * 1024 * 1024         # 128 MiB parts -> 1024-row tiles


def _leaky(x):
    return jnp.where(x >= 0, x, NEG_SLOPE * x)


def _wb(wb):
    """weight -> bf16 (MXU operand), bias -> (1, m) f32 row."""
    w, b = wb
    return w.astype(BF16), b.reshape(1, -1)


def _row_tile(n, lane_out=False):
    # lane_out=True: tile also appears as the *last* (lane) dim of an output
    # block, so it must be a multiple of 128 or equal to n.
    if lane_out:
        cands = (1024, 512, 256, 128) if BIG_TILES else (512, 256, 128)
    else:
        cands = ((1024, 512, 256, 128, 64, 32, 16, 8) if BIG_TILES
                 else (512, 256, 128, 64, 32, 16, 8))
    for t in cands:
        if n % t == 0:
            return t
    return n


def _fma3(v3, w3):
    """(rows, 3) x (3, C) contraction on the VPU (a K=3 matmul wastes the MXU)."""
    return (v3[:, 0:1] * w3[0:1, :]
            + v3[:, 1:2] * w3[1:2, :]
            + v3[:, 2:3] * w3[2:3, :])


# ---------------------------------------------------------------------------
# K_rff: Gaussian random-Fourier-feature encoding of pos (no lane concat)
# ---------------------------------------------------------------------------
def _rff_kernel(pos_ref, w_ref, o_ref, *, half):
    v = _fma3(pos_ref[...], w_ref[...])                      # (tile, half) f32 on VPU
    o_ref[:, :half] = jnp.cos(v)
    o_ref[:, half:] = jnp.sin(v)


def rff_encode(pos, b_mat):
    n = pos.shape[0]
    tile = _row_tile(n)
    w = (2.0 * math.pi) * b_mat.T                            # (3, 64) f32 (phase precision)
    half = w.shape[1]
    m = 2 * half
    return pl.pallas_call(
        functools.partial(_rff_kernel, half=half),
        out_shape=jax.ShapeDtypeStruct((n, m), jnp.float32),
        grid=(n // tile,),
        in_specs=[pl.BlockSpec((tile, 3), lambda i: (i, 0)),
                  pl.BlockSpec(w.shape, lambda i: (0, 0))],
        out_specs=pl.BlockSpec((tile, m), lambda i: (i, 0)),
        compiler_params=pltpu.CompilerParams(
            dimension_semantics=("parallel",), vmem_limit_bytes=VMEM_LIMIT),
    )(pos, w)


# ---------------------------------------------------------------------------
# K_pgnn: fused PointGNNConv (mlp_h + geo-aggregation combine + mlp_g + residual)
#   message geo part: max_e(pos_j - pos_i + delta_i) = delta_i + max_e(pos_j - pos_i)
#   -> `geo_max` precomputed once per graph; `delta` never leaves VMEM.
# ---------------------------------------------------------------------------
def _pgnn_kernel(x_ref, geo_ref, xagg_ref, mask_ref,
                 wh1_ref, bh1_ref, wh2_ref, bh2_ref,
                 wg1g_ref, wg1x_ref, bg1_ref, wg2_ref, bg2_ref, o_ref):
    x = x_ref[0]                                                        # (tile, C) f32
    h = _leaky(jnp.dot(x.astype(BF16), wh1_ref[...],
                       preferred_element_type=jnp.float32) + bh1_ref[...])
    delta = jnp.tanh(jnp.dot(h.astype(BF16), wh2_ref[...],
                             preferred_element_type=jnp.float32) + bh2_ref[...])   # (tile, 3)
    geo = mask_ref[...] * (delta + geo_ref[...])                        # 0 for isolated nodes
    g = (_fma3(geo, wg1g_ref[...])                                      # K=3 on the VPU
         + jnp.dot(xagg_ref[0], wg1x_ref[...],                          # bf16 aggregate
                   preferred_element_type=jnp.float32)
         + bg1_ref[...])
    g = _leaky(g)
    g = jnp.dot(g.astype(BF16), wg2_ref[...],
                preferred_element_type=jnp.float32) + bg2_ref[...]
    o_ref[0] = x + g


def point_gnn_conv(x, geo_max, x_agg_bf16, mask, p):
    s, n, c = x.shape
    tile = _row_tile(n)
    wh1, bh1 = _wb(p["h1"])
    wh2, bh2 = _wb(p["h2"])
    g1w, g1b = p["g1"]
    wg1g = g1w[:3]                                  # (3, C) geo part, stays f32 (VPU)
    wg1x = g1w[3:].astype(BF16)                     # (C, C)
    bg1 = g1b.reshape(1, -1)
    wg2, bg2 = _wb(p["g2"])
    row = lambda si, ti: (si, ti, 0)
    cst = lambda si, ti: (0, 0)
    return pl.pallas_call(
        _pgnn_kernel,
        out_shape=jax.ShapeDtypeStruct((s, n, c), jnp.float32),
        grid=(s, n // tile),
        in_specs=[
            pl.BlockSpec((1, tile, c), row),                       # x
            pl.BlockSpec((tile, 3), lambda si, ti: (ti, 0)),       # geo_max (style-shared)
            pl.BlockSpec((1, tile, c), row),                       # segment-max of x_j (bf16)
            pl.BlockSpec((tile, 1), lambda si, ti: (ti, 0)),       # has-in-edge mask
            pl.BlockSpec(wh1.shape, cst), pl.BlockSpec(bh1.shape, cst),
            pl.BlockSpec(wh2.shape, cst), pl.BlockSpec(bh2.shape, cst),
            pl.BlockSpec(wg1g.shape, cst), pl.BlockSpec(wg1x.shape, cst),
            pl.BlockSpec(bg1.shape, cst),
            pl.BlockSpec(wg2.shape, cst), pl.BlockSpec(bg2.shape, cst),
        ],
        out_specs=pl.BlockSpec((1, tile, c), row),
        compiler_params=pltpu.CompilerParams(
            dimension_semantics=("parallel", "parallel"),
            vmem_limit_bytes=VMEM_LIMIT),
    )(x, geo_max, x_agg_bf16, mask, wh1, bh1, wh2, bh2, wg1g, wg1x, bg1, wg2, bg2)


# ---------------------------------------------------------------------------
# K_style: per-point style feature only.  The style-row matmul (rb) is hoisted
# out (O(S) rows, computed in the wrapper); the AdaIN affines are fused into
# the adanorm kernels so the (S,N,2C) intermediates are never materialized.
# ---------------------------------------------------------------------------
def _style_kernel(pos_ref, rb_ref, w1p_ref, w2_ref, b2_ref, o_ref):
    s = _fma3(pos_ref[...], w1p_ref[...]) + rb_ref[0]        # rb = style@W1_s + b1 (hoisted)
    s = _leaky(s)
    s = jnp.dot(s.astype(BF16), w2_ref[...],
                preferred_element_type=jnp.float32) + b2_ref[...]
    o_ref[0] = _leaky(s).astype(BF16)                        # consumed only as MXU operand


def style_feature(pos, rb, params):
    n = pos.shape[0]
    s, c = rb.shape
    tile = _row_tile(n)
    w1 = params["style1"][0]
    w1p = w1[c:]                                    # pos part (3, C), f32 (VPU)
    w2, b2 = _wb(params["style2"])
    rb3 = rb.reshape(s, 1, c)
    cst = lambda si, ti: (0, 0)
    return pl.pallas_call(
        _style_kernel,
        out_shape=jax.ShapeDtypeStruct((s, n, c), BF16),
        grid=(s, n // tile),
        in_specs=[
            pl.BlockSpec((tile, 3), lambda si, ti: (ti, 0)),       # pos (style-shared)
            pl.BlockSpec((1, 1, c), lambda si, ti: (si, 0, 0)),    # rb row
            pl.BlockSpec(w1p.shape, cst),
            pl.BlockSpec(w2.shape, cst), pl.BlockSpec(b2.shape, cst),
        ],
        out_specs=pl.BlockSpec((1, tile, c), lambda si, ti: (si, ti, 0)),
        compiler_params=pltpu.CompilerParams(
            dimension_semantics=("parallel", "parallel"),
            vmem_limit_bytes=VMEM_LIMIT),
    )(pos, rb3, w1p, w2, b2)


# ---------------------------------------------------------------------------
# K_adanorm: LeakyReLU -> InstanceNorm (one-pass sum/sumsq stats, biased var,
# no affine) -> fused AdaIN affine (s @ Wa) -> gamma*x + beta, optionally
# fused global max pool.
# ---------------------------------------------------------------------------
def _adanorm_kernel(h_ref, s_ref, wa_ref, ba_ref, o_ref, mx_ref=None, *, c):
    h = _leaky(h_ref[0])                                               # (N, C) f32
    inv_n = 1.0 / h.shape[0]
    mean = jnp.sum(h, axis=0, keepdims=True) * inv_n
    ex2 = jnp.sum(h * h, axis=0, keepdims=True) * inv_n                # one pass over h
    var = jnp.maximum(ex2 - mean * mean, 0.0)
    xn = (h - mean) * lax.rsqrt(var + EPS)
    st = jnp.dot(s_ref[0], wa_ref[...],
                 preferred_element_type=jnp.float32) + ba_ref[...]     # (N, 2C) AdaIN affine
    out = st[:, :c] * xn + st[:, c:]
    o_ref[0] = out
    if mx_ref is not None:
        mx_ref[0] = jnp.max(out, axis=0, keepdims=True)                # global_max_pool


def ada_norm(h, s_feat, affine, *, shared_h, with_max):
    # TODO(synk): for very large N (v7x 64 MiB VMEM) tile N on an 'arbitrary'
    # axis and accumulate sum/sumsq/max in a (1,C) scratch instead of full-N blocks.
    s_dim, n, c = s_feat.shape
    wa = affine[0].astype(BF16)                      # (C, 2C)
    ba = affine[1].reshape(1, -1)                    # (1, 2C) f32
    h_map = (lambda si: (0, 0, 0)) if shared_h else (lambda si: (si, 0, 0))
    out_shape = jax.ShapeDtypeStruct((s_dim, n, c), jnp.float32)
    out_spec = pl.BlockSpec((1, n, c), lambda si: (si, 0, 0))
    if with_max:
        out_shape = (out_shape, jax.ShapeDtypeStruct((s_dim, 1, c), jnp.float32))
        out_spec = (out_spec, pl.BlockSpec((1, 1, c), lambda si: (si, 0, 0)))
    cst = lambda si: (0, 0)
    return pl.pallas_call(
        functools.partial(_adanorm_kernel, c=c),
        out_shape=out_shape,
        grid=(s_dim,),
        in_specs=[pl.BlockSpec((1, n, c), h_map),
                  pl.BlockSpec((1, n, c), lambda si: (si, 0, 0)),
                  pl.BlockSpec(wa.shape, cst), pl.BlockSpec(ba.shape, cst)],
        out_specs=out_spec,
        compiler_params=pltpu.CompilerParams(
            dimension_semantics=("parallel",), vmem_limit_bytes=VMEM_LIMIT),
    )(h, s_feat, wa, ba)


# ---------------------------------------------------------------------------
# K_tail: per-point tail MLP.  The global_conv / pooled-row part (hrow) is
# hoisted out of the row-tile loop; last layer emitted directly as (3, tile).
# ---------------------------------------------------------------------------
def _tail_kernel(x_ref, hrow_ref, wt1x_ref, wt2_ref, bt2_ref,
                 wt3t_ref, bt3c_ref, o_ref):
    t = jnp.dot(x_ref[0].astype(BF16), wt1x_ref[...],
                preferred_element_type=jnp.float32) + hrow_ref[0]      # hrow includes bt1
    t = _leaky(t)
    t = jnp.dot(t.astype(BF16), wt2_ref[...],
                preferred_element_type=jnp.float32) + bt2_ref[...]
    t = _leaky(t)
    # (3, tile) directly (contract C/2); avoids an XLU (tile,3)->(3,tile) transpose.
    t3 = lax.dot_general(wt3t_ref[...], t.astype(BF16),
                         dimension_numbers=(((1,), (1,)), ((), ())),
                         preferred_element_type=jnp.float32)
    o_ref[0] = jnp.tanh(t3 + bt3c_ref[...])                            # lane-dense (3, tile)


def tail(x2, hrow, params):
    s, n, c = x2.shape
    tile = _row_tile(n, lane_out=True)
    t1w = params["t1"][0]
    wt1x = t1w[:c].astype(BF16)                      # x part of the [x, h] concat
    wt2, bt2 = _wb(params["t2"])
    wt3t = params["t3"][0].T.astype(BF16)            # (3, C//2) pre-transposed weight
    bt3c = params["t3"][1].reshape(-1, 1)            # (3, 1) bias column
    hrow3 = hrow.reshape(s, 1, c)
    cst = lambda si, ti: (0, 0)
    return pl.pallas_call(
        _tail_kernel,
        out_shape=jax.ShapeDtypeStruct((s, 3, n), jnp.float32),
        grid=(s, n // tile),
        in_specs=[
            pl.BlockSpec((1, tile, c), lambda si, ti: (si, ti, 0)),   # x2
            pl.BlockSpec((1, 1, c), lambda si, ti: (si, 0, 0)),       # hoisted hrow
            pl.BlockSpec(wt1x.shape, cst),
            pl.BlockSpec(wt2.shape, cst), pl.BlockSpec(bt2.shape, cst),
            pl.BlockSpec(wt3t.shape, cst), pl.BlockSpec(bt3c.shape, cst),
        ],
        out_specs=pl.BlockSpec((1, 3, tile), lambda si, ti: (si, 0, ti)),
        compiler_params=pltpu.CompilerParams(
            dimension_semantics=("parallel", "parallel"),
            vmem_limit_bytes=VMEM_LIMIT),
    )(x2, hrow3, wt1x, wt2, bt2, wt3t, bt3c)


# ---------------------------------------------------------------------------
# Deterministic parameter init (shapes from Generator.__init__)
# ---------------------------------------------------------------------------
def _dense(key, din, dout, w_std=None):
    std = (1.0 / math.sqrt(din)) if w_std is None else w_std
    w = jax.random.normal(key, (din, dout), jnp.float32) * std
    b = jnp.zeros((dout,), jnp.float32)
    return w, b


def init_block(key, c=128, style_dim=128):
    ks = jax.random.split(key, 5)
    aff_w = jax.random.normal(ks[4], (style_dim, 2 * c), jnp.float32)  # .normal_()
    aff_b = jnp.concatenate([jnp.ones((c,), jnp.float32),              # bias[:c]=1
                             jnp.zeros((c,), jnp.float32)])            # bias[c:]=0
    return {
        "h1": _dense(ks[0], c, c),          # mlp_h
        "h2": _dense(ks[1], c, 3),
        "g1": _dense(ks[2], c + 3, c),      # mlp_g (rows [0:3]=geo, [3:]=x_j)
        "g2": _dense(ks[3], c, c),
        "affine": (aff_w, aff_b),           # AdaptivePointNorm.affine
        # noise_strength parameter init = 0 -> noise term == 0 exactly
    }


def init_generator(key):
    z, c = 128, 128
    ks = jax.random.split(key, 10)
    return {
        "enc_B": 10.0 * jax.random.normal(ks[0], (c // 2, 3), jnp.float32),  # rff sigma=10
        "style1": _dense(ks[1], z + 3, z),
        "style2": _dense(ks[2], z, z),
        "conv1": init_block(ks[3], c, z),
        "conv2": init_block(ks[4], c, z),
        "gc1": _dense(ks[5], c, c),
        "gc2": _dense(ks[6], c, 512),
        "t1": _dense(ks[7], c + 512, c),
        "t2": _dense(ks[8], c, c // 2),
        "t3": _dense(ks[9], c // 2, 3),
    }


# ---------------------------------------------------------------------------
# Forward pass
# ---------------------------------------------------------------------------
def _segment_max0(vals, idx, n):
    agg = jax.ops.segment_max(vals, idx, num_segments=n)
    return jnp.where(jnp.isneginf(agg), 0.0, agg)      # empty segments -> 0 (matches ref)


def generator_forward(params, pos, edge_index, batch, styles):
    # single-graph assumption (batch all zeros), as required by torch h.repeat(...)
    del batch
    src, dst = edge_index[0], edge_index[1]
    n = pos.shape[0]
    s_dim, z = styles.shape

    # ---- graph-only precomputation (shared by both GNN blocks & all styles) ----
    # TODO(synk): edge gather + segment-max/sum are data-dependent indexing; kept as XLA glue.
    geo_max = _segment_max0(pos[src] - pos[dst], dst, n)                   # (N, 3)
    in_deg = jax.ops.segment_sum(jnp.ones_like(dst, dtype=jnp.float32), dst,
                                 num_segments=n)
    mask = (in_deg > 0).astype(jnp.float32).reshape(n, 1)                  # (N, 1)

    # ---- style-invariant: RFF encoding + conv1's PointGNNConv ----
    x0 = rff_encode(pos, params["enc_B"])                                  # (N, 128)
    agg_x0 = _segment_max0(x0[src], dst, n).astype(BF16)                   # bf16 MXU operand
    x1_pre = point_gnn_conv(x0[None], geo_max, agg_x0[None], mask,
                            params["conv1"])                               # (1, N, 128)
    c = x1_pre.shape[-1]

    # ---- per-style O(S) precompute (hoisted out of all row-tile kernels) ----
    w1, b1 = params["style1"]
    rb = styles @ w1[:z] + b1                                              # (S, 128)

    # ---- per-point style feature, shared by both AdaIN blocks ----
    s_feat = style_feature(pos, rb, params)                                # (S, N, 128) bf16

    # ---- conv1 AdaIN (LeakyReLU + InstanceNorm + fused affine scale/shift) ----
    h1 = ada_norm(x1_pre, s_feat, params["conv1"]["affine"],
                  shared_h=True, with_max=False)                           # (S, N, 128)

    # ---- conv2: per-style aggregation + fused PointGNNConv + AdaIN (+pool) ----
    agg_h1 = jax.vmap(lambda h: _segment_max0(h[src], dst, n))(h1).astype(BF16)
    x2_pre = point_gnn_conv(h1, geo_max, agg_h1, mask, params["conv2"])    # (S, N, 128)
    x2, hmax = ada_norm(x2_pre, s_feat, params["conv2"]["affine"],
                        shared_h=False, with_max=True)                     # (S,N,128),(S,1,128)

    # ---- per-style global_conv + pooled row of tail's first layer (O(S) rows) ----
    wg1, bg1 = params["gc1"]
    wg2, bg2 = params["gc2"]
    t1w, t1b = params["t1"]
    g = _leaky(hmax.reshape(s_dim, c) @ wg1 + bg1)
    g = _leaky(g @ wg2 + bg2)                                              # (S, 512)
    hrow = g @ t1w[c:] + t1b                                               # (S, 128), incl. bt1

    # ---- per-point tail, lane-dense (S, 3, N) output ----
    return tail(x2, hrow, params)


if __name__ == "__main__":
    key = jax.random.PRNGKey(0)
    kp, kpos, kst = jax.random.split(key, 3)
    params = init_generator(kp)

    n = 16
    pos = jax.random.normal(kpos, (n, 3), jnp.float32)
    idx = jnp.arange(n, dtype=jnp.int32)
    nxt = (idx + 1) % n
    src = jnp.concatenate([idx, nxt])
    dst = jnp.concatenate([nxt, idx])
    edge_index = jnp.stack([src, dst], axis=0)            # (2, 32) bidirectional ring
    batch = jnp.zeros((n,), jnp.int32)
    styles = jax.random.normal(kst, (2, 128), jnp.float32)

    out = jax.jit(generator_forward)(params, pos, edge_index, batch, styles)
    jax.block_until_ready(out)
    assert out.shape == (2, 3, n), out.shape
    assert bool(jnp.all(jnp.isfinite(out)))
    print("KERNEL_OK")
</pallas_src>

<mosaic_0001>
module attributes {stable_mosaic.version = 11 : i64} {
  func.func @_rff_kernel(%arg0: i32, %arg1: memref<16x3xf32, #tpu.memory_space<vmem>>, %arg2: memref<3x64xf32, #tpu.memory_space<vmem>>, %arg3: memref<16x128xf32, #tpu.memory_space<vmem>>) attributes {dimension_semantics = [#tpu.dimension_semantics<parallel>], iteration_bounds = array<i64: 1>, scalar_prefetch = 0 : i64, scratch_operands = 0 : i64, tpu.core_type = #tpu.core_type<tc>, window_params = [{transform_indices = @transform_0, window_bounds = array<i64: 16, 3>}, {pipeline_mode = #tpu.pipeline_mode<synchronous>, transform_indices = @transform_1, window_bounds = array<i64: 3, 64>}, {transform_indices = @transform_2, window_bounds = array<i64: 16, 128>}]} {
    %c0 = arith.constant 0 : index
    %c0_0 = arith.constant 0 : index
    %0 = vector.load %arg1[%c0, %c0_0] : memref<16x3xf32, #tpu.memory_space<vmem>>, vector<16x3xf32>
    %c0_1 = arith.constant 0 : index
    %c0_2 = arith.constant 0 : index
    %1 = vector.load %arg2[%c0_1, %c0_2] : memref<3x64xf32, #tpu.memory_space<vmem>>, vector<3x64xf32>
    %2 = vector.extract_strided_slice %0 {offsets = [0, 0], sizes = [16, 1], strides = [1, 1]} : vector<16x3xf32> to vector<16x1xf32>
    %3 = vector.extract_strided_slice %1 {offsets = [0, 0], sizes = [1, 64], strides = [1, 1]} : vector<3x64xf32> to vector<1x64xf32>
    %4 = vector.broadcast %2 : vector<16x1xf32> to vector<16x64xf32>
    %5 = vector.broadcast %3 : vector<1x64xf32> to vector<16x64xf32>
    %6 = arith.mulf %4, %5 : vector<16x64xf32>
    %7 = vector.extract_strided_slice %0 {offsets = [0, 1], sizes = [16, 1], strides = [1, 1]} : vector<16x3xf32> to vector<16x1xf32>
    %8 = vector.extract_strided_slice %1 {offsets = [1, 0], sizes = [1, 64], strides = [1, 1]} : vector<3x64xf32> to vector<1x64xf32>
    %9 = vector.broadcast %7 : vector<16x1xf32> to vector<16x64xf32>
    %10 = vector.broadcast %8 : vector<1x64xf32> to vector<16x64xf32>
    %11 = arith.mulf %9, %10 : vector<16x64xf32>
    %12 = arith.addf %6, %11 : vector<16x64xf32>
    %13 = vector.extract_strided_slice %0 {offsets = [0, 2], sizes = [16, 1], strides = [1, 1]} : vector<16x3xf32> to vector<16x1xf32>
    %14 = vector.extract_strided_slice %1 {offsets = [2, 0], sizes = [1, 64], strides = [1, 1]} : vector<3x64xf32> to vector<1x64xf32>
    %15 = vector.broadcast %13 : vector<16x1xf32> to vector<16x64xf32>
    %16 = vector.broadcast %14 : vector<1x64xf32> to vector<16x64xf32>
    %17 = arith.mulf %15, %16 : vector<16x64xf32>
    %18 = arith.addf %12, %17 : vector<16x64xf32>
    %19 = math.cos %18 : vector<16x64xf32>
    %c0_3 = arith.constant 0 : index
    %c0_4 = arith.constant 0 : index
    %20 = vector.load %arg3[%c0_3, %c0_4] : memref<16x128xf32, #tpu.memory_space<vmem>>, vector<16x64xf32>
    tpu.vector_store %arg3[%c0_3, %c0_4], %19 {strides = array<i32>} : memref<16x128xf32, #tpu.memory_space<vmem>>, vector<16x64xf32>,
    %21 = math.sin %18 : vector<16x64xf32>
    %c0_5 = arith.constant 0 : index
    %c64 = arith.constant 64 : index
    %22 = vector.load %arg3[%c0_5, %c64] : memref<16x128xf32, #tpu.memory_space<vmem>>, vector<16x64xf32>
    tpu.vector_store %arg3[%c0_5, %c64], %21 {strides = array<i32>} : memref<16x128xf32, #tpu.memory_space<vmem>>, vector<16x64xf32>,
    return
  }
  func.func @transform_0(%arg0: i32) -> (i32, i32) {
    %c0_i32 = arith.constant 0 : i32
    %c0_i32_0 = arith.constant 0 : i32
    return %arg0, %c0_i32 : i32, i32
  }
  func.func @transform_1(%arg0: i32) -> (i32, i32) {
    %c0_i32 = arith.constant 0 : i32
    %c0_i32_0 = arith.constant 0 : i32
    %c0_i32_1 = arith.constant 0 : i32
    return %c0_i32, %c0_i32_0 : i32, i32
  }
  func.func @transform_2(%arg0: i32) -> (i32, i32) {
    %c0_i32 = arith.constant 0 : i32
    %c0_i32_0 = arith.constant 0 : i32
    return %arg0, %c0_i32 : i32, i32
  }
}

module attributes {stable_mosaic.version = 11 : i64} {
  func.func @_pgnn_kernel(%arg0: i32, %arg1: i32, %arg2: memref<1x16x128xf32, #tpu.memory_space<vmem>>, %arg3: memref<16x3xf32, #tpu.memory_space<vmem>>, %arg4: memref<1x16x128xbf16, #tpu.memory_space<vmem>>, %arg5: memref<16x1xf32, #tpu.memory_space<vmem>>, %arg6: memref<128x128xbf16, #tpu.memory_space<vmem>>, %arg7: memref<1x128xf32, #tpu.memory_space<vmem>>, %arg8: memref<128x3xbf16, #tpu.memory_space<vmem>>, %arg9: memref<1x3xf32, #tpu.memory_space<vmem>>, %arg10: memref<3x128xf32, #tpu.memory_space<vmem>>, %arg11: memref<128x128xbf16, #tpu.memory_space<vmem>>, %arg12: memref<1x128xf32, #tpu.memory_space<vmem>>, %arg13: memref<128x128xbf16, #tpu.memory_space<vmem>>, %arg14: memref<1x128xf32, #tpu.memory_space<vmem>>, %arg15: memref<1x16x128xf32, #tpu.memory_space<vmem>>) attributes {dimension_semantics = [#tpu.dimension_semantics<parallel>, #tpu.dimension_semantics<parallel>], iteration_bounds = array<i64: 1, 1>, scalar_prefetch = 0 : i64, scratch_operands = 0 : i64, tpu.core_type = #tpu.core_type<tc>, window_params = [{transform_indices = @transform_0, window_bounds = array<i64: 1, 16, 128>}, {transform_indices = @transform_1, window_bounds = array<i64: 16, 3>}, {transform_indices = @transform_2, window_bounds = array<i64: 1, 16, 128>}, {transform_indices = @transform_3, window_bounds = array<i64: 16, 1>}, {pipeline_mode = #tpu.pipeline_mode<synchronous>, transform_indices = @transform_4, window_bounds = array<i64: 128, 128>}, {pipeline_mode = #tpu.pipeline_mode<synchronous>, transform_indices = @transform_5, window_bounds = array<i64: 1, 128>}, {pipeline_mode = #tpu.pipeline_mode<synchronous>, transform_indices = @transform_6, window_bounds = array<i64: 128, 3>}, {pipeline_mode = #tpu.pipeline_mode<synchronous>, transform_indices = @transform_7, window_bounds = array<i64: 1, 3>}, {pipeline_mode = #tpu.pipeline_mode<synchronous>, transform_indices = @transform_8, window_bounds = array<i64: 3, 128>}, {pipeline_mode = #tpu.pipeline_mode<synchronous>, transform_indices = @transform_9, window_bounds = array<i64: 128, 128>}, {pipeline_mode = #tpu.pipeline_mode<synchronous>, transform_indices = @transform_10, window_bounds = array<i64: 1, 128>}, {pipeline_mode = #tpu.pipeline_mode<synchronous>, transform_indices = @transform_11, window_bounds = array<i64: 128, 128>}, {pipeline_mode = #tpu.pipeline_mode<synchronous>, transform_indices = @transform_12, window_bounds = array<i64: 1, 128>}, {transform_indices = @transform_13, window_bounds = array<i64: 1, 16, 128>}]} {
    %c0 = arith.constant 0 : index
    %c0_0 = arith.constant 0 : index
    %c0_1 = arith.constant 0 : index
    %0 = vector.load %arg2[%c0, %c0_0, %c0_1] : memref<1x16x128xf32, #tpu.memory_space<vmem>>, vector<1x16x128xf32>
    %1 = vector.shape_cast %0 : vector<1x16x128xf32> to vector<16x128xf32>
    %2 = arith.truncf %1 : vector<16x128xf32> to vector<16x128xbf16>
    %c0_2 = arith.constant 0 : index
    %c0_3 = arith.constant 0 : index
    %3 = vector.load %arg6[%c0_2, %c0_3] : memref<128x128xbf16, #tpu.memory_space<vmem>>, vector<128x128xbf16>
    %cst = arith.constant dense<0.000000e+00> : vector<16x128xf32>
    %4 = tpu.matmul %2, %3, %cst {dimension_numbers = #tpu.dot_dimension_numbers<[1], [0], [0], [1], [0, 0, 1, 1], [], []>} : vector<16x128xbf16>, vector<128x128xbf16>, vector<16x128xf32> -> vector<16x128xf32>
    %c0_4 = arith.constant 0 : index
    %c0_5 = arith.constant 0 : index
    %5 = vector.load %arg7[%c0_4, %c0_5] : memref<1x128xf32, #tpu.memory_space<vmem>>, vector<1x128xf32>
    %6 = vector.broadcast %5 : vector<1x128xf32> to vector<16x128xf32>
    %7 = arith.addf %4, %6 : vector<16x128xf32>
    %cst_6 = arith.constant 0.000000e+00 : f32
    %8 = vector.broadcast %cst_6 : f32 to vector<16x128xf32>
    %9 = arith.cmpf oge, %7, %8 : vector<16x128xf32>
    %cst_7 = arith.constant 0.00999999977 : f32
    %10 = vector.broadcast %cst_7 : f32 to vector<16x128xf32>
    %11 = arith.mulf %10, %7 : vector<16x128xf32>
    %12 = arith.select %9, %7, %11 : vector<16x128xi1>, vector<16x128xf32>
    %13 = arith.truncf %12 : vector<16x128xf32> to vector<16x128xbf16>
    %c0_8 = arith.constant 0 : index
    %c0_9 = arith.constant 0 : index
    %14 = vector.load %arg8[%c0_8, %c0_9] : memref<128x3xbf16, #tpu.memory_space<vmem>>, vector<128x3xbf16>
    %cst_10 = arith.constant dense<0.000000e+00> : vector<16x3xf32>
    %15 = tpu.matmul %13, %14, %cst_10 {dimension_numbers = #tpu.dot_dimension_numbers<[1], [0], [0], [1], [0, 0, 1, 1], [], []>} : vector<16x128xbf16>, vector<128x3xbf16>, vector<16x3xf32> -> vector<16x3xf32>
    %c0_11 = arith.constant 0 : index
    %c0_12 = arith.constant 0 : index
    %16 = vector.load %arg9[%c0_11, %c0_12] : memref<1x3xf32, #tpu.memory_space<vmem>>, vector<1x3xf32>
    %17 = vector.broadcast %16 : vector<1x3xf32> to vector<16x3xf32>
    %18 = arith.addf %15, %17 : vector<16x3xf32>
    %19 = math.tanh %18 : vector<16x3xf32>
    %c0_13 = arith.constant 0 : index
    %c0_14 = arith.constant 0 : index
    %20 = vector.load %arg5[%c0_13, %c0_14] : memref<16x1xf32, #tpu.memory_space<vmem>>, vector<16x1xf32>
    %c0_15 = arith.constant 0 : index
    %c0_16 = arith.constant 0 : index
    %21 = vector.load %arg3[%c0_15, %c0_16] : memref<16x3xf32, #tpu.memory_space<vmem>>, vector<16x3xf32>
    %22 = arith.addf %19, %21 : vector<16x3xf32>
    %23 = vector.broadcast %20 : vector<16x1xf32> to vector<16x3xf32>
    %24 = arith.mulf %23, %22 : vector<16x3xf32>
    %c0_17 = arith.constant 0 : index
    %c0_18 = arith.constant 0 : index
    %25 = vector.load %arg10[%c0_17, %c0_18] : memref<3x128xf32, #tpu.memory_space<vmem>>, vector<3x128xf32>
    %26 = vector.extract_strided_slice %24 {offsets = [0, 0], sizes = [16, 1], strides = [1, 1]} : vector<16x3xf32> to vector<16x1xf32>
    %27 = vector.extract_strided_slice %25 {offsets = [0, 0], sizes = [1, 128], strides = [1, 1]} : vector<3x128xf32> to vector<1x128xf32>
    %28 = vector.broadcast %26 : vector<16x1xf32> to vector<16x128xf32>
    %29 = vector.broadcast %27 : vector<1x128xf32> to vector<16x128xf32>
    %30 = arith.mulf %28, %29 : vector<16x128xf32>
    %31 = vector.extract_strided_slice %24 {offsets = [0, 1], sizes = [16, 1], strides = [1, 1]} : vector<16x3xf32> to vector<16x1xf32>
    %32 = vector.extract_strided_slice %25 {offsets = [1, 0], sizes = [1, 128], strides = [1, 1]} : vector<3x128xf32> to vector<1x128xf32>
    %33 = vector.broadcast %31 : vector<16x1xf32> to vector<16x128xf32>
    %34 = vector.broadcast %32 : vector<1x128xf32> to vector<16x128xf32>
    %35 = arith.mulf %33, %34 : vector<16x128xf32>
    %36 = arith.addf %30, %35 : vector<16x128xf32>
    %37 = vector.extract_strided_slice %24 {offsets = [0, 2], sizes = [16, 1], strides = [1, 1]} : vector<16x3xf32> to vector<16x1xf32>
    %38 = vector.extract_strided_slice %25 {offsets = [2, 0], sizes = [1, 128], strides = [1, 1]} : vector<3x128xf32> to vector<1x128xf32>
    %39 = vector.broadcast %37 : vector<16x1xf32> to vector<16x128xf32>
    %40 = vector.broadcast %38 : vector<1x128xf32> to vector<16x128xf32>
    %41 = arith.mulf %39, %40 : vector<16x128xf32>
    %42 = arith.addf %36, %41 : vector<16x128xf32>
    %c0_19 = arith.constant 0 : index
    %c0_20 = arith.constant 0 : index
    %c0_21 = arith.constant 0 : index
    %43 = vector.load %arg4[%c0_19, %c0_20, %c0_21] : memref<1x16x128xbf16, #tpu.memory_space<vmem>>, vector<1x16x128xbf16>
    %44 = vector.shape_cast %43 : vector<1x16x128xbf16> to vector<16x128xbf16>
    %c0_22 = arith.constant 0 : index
    %c0_23 = arith.constant 0 : index
    %45 = vector.load %arg11[%c0_22, %c0_23] : memref<128x128xbf16, #tpu.memory_space<vmem>>, vector<128x128xbf16>
    %cst_24 = arith.constant dense<0.000000e+00> : vector<16x128xf32>
    %46 = tpu.matmul %44, %45, %cst_24 {dimension_numbers = #tpu.dot_dimension_numbers<[1], [0], [0], [1], [0, 0, 1, 1], [], []>} : vector<16x128xbf16>, vector<128x128xbf16>, vector<16x128xf32> -> vector<16x128xf32>
    %47 = arith.addf %42, %46 : vector<16x128xf32>
    %c0_25 = arith.constant 0 : index
    %c0_26 = arith.constant 0 : index
    %48 = vector.load %arg12[%c0_25, %c0_26] : memref<1x128xf32, #tpu.memory_space<vmem>>, vector<1x128xf32>
    %49 = vector.broadcast %48 : vector<1x128xf32> to vector<16x128xf32>
    %50 = arith.addf %47, %49 : vector<16x128xf32>
    %cst_27 = arith.constant 0.000000e+00 : f32
    %51 = vector.broadcast %cst_27 : f32 to vector<16x128xf32>
    %52 = arith.cmpf oge, %50, %51 : vector<16x128xf32>
    %cst_28 = arith.constant 0.00999999977 : f32
    %53 = vector.broadcast %cst_28 : f32 to vector<16x128xf32>
    %54 = arith.mulf %53, %50 : vector<16x128xf32>
    %55 = arith.select %52, %50, %54 : vector<16x128xi1>, vector<16x128xf32>
    %56 = arith.truncf %55 : vector<16x128xf32> to vector<16x128xbf16>
    %c0_29 = arith.constant 0 : index
    %c0_30 = arith.constant 0 : index
    %57 = vector.load %arg13[%c0_29, %c0_30] : memref<128x128xbf16, #tpu.memory_space<vmem>>, vector<128x128xbf16>
    %cst_31 = arith.constant dense<0.000000e+00> : vector<16x128xf32>
    %58 = tpu.matmul %56, %57, %cst_31 {dimension_numbers = #tpu.dot_dimension_numbers<[1], [0], [0], [1], [0, 0, 1, 1], [], []>} : vector<16x128xbf16>, vector<128x128xbf16>, vector<16x128xf32> -> vector<16x128xf32>
    %c0_32 = arith.constant 0 : index
    %c0_33 = arith.constant 0 : index
    %59 = vector.load %arg14[%c0_32, %c0_33] : memref<1x128xf32, #tpu.memory_space<vmem>>, vector<1x128xf32>
    %60 = vector.broadcast %59 : vector<1x128xf32> to vector<16x128xf32>
    %61 = arith.addf %58, %60 : vector<16x128xf32>
    %62 = arith.addf %1, %61 : vector<16x128xf32>
    %c0_34 = arith.constant 0 : index
    %c0_35 = arith.constant 0 : index
    %c0_36 = arith.constant 0 : index
    %63 = vector.load %arg15[%c0_34, %c0_35, %c0_36] : memref<1x16x128xf32, #tpu.memory_space<vmem>>, vector<1x16x128xf32>
    %64 = vector.shape_cast %63 : vector<1x16x128xf32> to vector<16x128xf32>
    %65 = vector.shape_cast %62 : vector<16x128xf32> to vector<1x16x128xf32>
    tpu.vector_store %arg15[%c0_34, %c0_35, %c0_36], %65 {strides = array<i32>} : memref<1x16x128xf32, #tpu.memory_space<vmem>>, vector<1x16x128xf32>,
    return
  }
  func.func @transform_0(%arg0: i32, %arg1: i32) -> (i32, i32, i32) {
    %c0_i32 = arith.constant 0 : i32
    %c0_i32_0 = arith.constant 0 : i32
    return %arg0, %arg1, %c0_i32 : i32, i32, i32
  }
  func.func @transform_1(%arg0: i32, %arg1: i32) -> (i32, i32) {
    %c0_i32 = arith.constant 0 : i32
    %c0_i32_0 = arith.constant 0 : i32
    return %arg1, %c0_i32 : i32, i32
  }
  func.func @transform_2(%arg0: i32, %arg1: i32) -> (i32, i32, i32) {
    %c0_i32 = arith.constant 0 : i32
    %c0_i32_0 = arith.constant 0 : i32
    return %arg0, %arg1, %c0_i32 : i32, i32, i32
  }
  func.func @transform_3(%arg0: i32, %arg1: i32) -> (i32, i32) {
    %c0_i32 = arith.constant 0 : i32
    %c0_i32_0 = arith.constant 0 : i32
    return %arg1, %c0_i32 : i32, i32
  }
  func.func @transform_4(%arg0: i32, %arg1: i32) -> (i32, i32) {
    %c0_i32 = arith.constant 0 : i32
    %c0_i32_0 = arith.constant 0 : i32
    %c0_i32_1 = arith.constant 0 : i32
    return %c0_i32, %c0_i32_0 : i32, i32
  }
  func.func @transform_5(%arg0: i32, %arg1: i32) -> (i32, i32) {
    %c0_i32 = arith.constant 0 : i32
    %c0_i32_0 = arith.constant 0 : i32
    %c0_i32_1 = arith.constant 0 : i32
    return %c0_i32, %c0_i32_0 : i32, i32
  }
  func.func @transform_6(%arg0: i32, %arg1: i32) -> (i32, i32) {
    %c0_i32 = arith.constant 0 : i32
    %c0_i32_0 = arith.constant 0 : i32
    %c0_i32_1 = arith.constant 0 : i32
    return %c0_i32, %c0_i32_0 : i32, i32
  }
  func.func @transform_7(%arg0: i32, %arg1: i32) -> (i32, i32) {
    %c0_i32 = arith.constant 0 : i32
    %c0_i32_0 = arith.constant 0 : i32
    %c0_i32_1 = arith.constant 0 : i32
    return %c0_i32, %c0_i32_0 : i32, i32
  }
  func.func @transform_8(%arg0: i32, %arg1: i32) -> (i32, i32) {
    %c0_i32 = arith.constant 0 : i32
    %c0_i32_0 = arith.constant 0 : i32
    %c0_i32_1 = arith.constant 0 : i32
    return %c0_i32, %c0_i32_0 : i32, i32
  }
  func.func @transform_9(%arg0: i32, %arg1: i32) -> (i32, i32) {
    %c0_i32 = arith.constant 0 : i32
    %c0_i32_0 = arith.constant 0 : i32
    %c0_i32_1 = arith.constant 0 : i32
    return %c0_i32, %c0_i32_0 : i32, i32
  }
  func.func @transform_10(%arg0: i32, %arg1: i32) -> (i32, i32) {
    %c0_i32 = arith.constant 0 : i32
    %c0_i32_0 = arith.constant 0 : i32
    %c0_i32_1 = arith.constant 0 : i32
    return %c0_i32, %c0_i32_0 : i32, i32
  }
  func.func @transform_11(%arg0: i32, %arg1: i32) -> (i32, i32) {
    %c0_i32 = arith.constant 0 : i32
    %c0_i32_0 = arith.constant 0 : i32
    %c0_i32_1 = arith.constant 0 : i32
    return %c0_i32, %c0_i32_0 : i32, i32
  }
  func.func @transform_12(%arg0: i32, %arg1: i32) -> (i32, i32) {
    %c0_i32 = arith.constant 0 : i32
    %c0_i32_0 = arith.constant 0 : i32
    %c0_i32_1 = arith.constant 0 : i32
    return %c0_i32, %c0_i32_0 : i32, i32
  }
  func.func @transform_13(%arg0: i32, %arg1: i32) -> (i32, i32, i32) {
    %c0_i32 = arith.constant 0 : i32
    %c0_i32_0 = arith.constant 0 : i32
    return %arg0, %arg1, %c0_i32 : i32, i32, i32
  }
}

module attributes {stable_mosaic.version = 11 : i64} {
  func.func @_style_kernel(%arg0: i32, %arg1: i32, %arg2: memref<16x3xf32, #tpu.memory_space<vmem>>, %arg3: memref<1x1x128xf32, #tpu.memory_space<vmem>>, %arg4: memref<3x128xf32, #tpu.memory_space<vmem>>, %arg5: memref<128x128xbf16, #tpu.memory_space<vmem>>, %arg6: memref<1x128xf32, #tpu.memory_space<vmem>>, %arg7: memref<1x16x128xbf16, #tpu.memory_space<vmem>>) attributes {dimension_semantics = [#tpu.dimension_semantics<parallel>, #tpu.dimension_semantics<parallel>], iteration_bounds = array<i64: 2, 1>, scalar_prefetch = 0 : i64, scratch_operands = 0 : i64, tpu.core_type = #tpu.core_type<tc>, window_params = [{transform_indices = @transform_0, window_bounds = array<i64: 16, 3>}, {transform_indices = @transform_1, window_bounds = array<i64: 1, 1, 128>}, {pipeline_mode = #tpu.pipeline_mode<synchronous>, transform_indices = @transform_2, window_bounds = array<i64: 3, 128>}, {pipeline_mode = #tpu.pipeline_mode<synchronous>, transform_indices = @transform_3, window_bounds = array<i64: 128, 128>}, {pipeline_mode = #tpu.pipeline_mode<synchronous>, transform_indices = @transform_4, window_bounds = array<i64: 1, 128>}, {transform_indices = @transform_5, window_bounds = array<i64: 1, 16, 128>}]} {
    %c0 = arith.constant 0 : index
    %c0_0 = arith.constant 0 : index
    %0 = vector.load %arg2[%c0, %c0_0] : memref<16x3xf32, #tpu.memory_space<vmem>>, vector<16x3xf32>
    %c0_1 = arith.constant 0 : index
    %c0_2 = arith.constant 0 : index
    %1 = vector.load %arg4[%c0_1, %c0_2] : memref<3x128xf32, #tpu.memory_space<vmem>>, vector<3x128xf32>
    %2 = vector.extract_strided_slice %0 {offsets = [0, 0], sizes = [16, 1], strides = [1, 1]} : vector<16x3xf32> to vector<16x1xf32>
    %3 = vector.extract_strided_slice %1 {offsets = [0, 0], sizes = [1, 128], strides = [1, 1]} : vector<3x128xf32> to vector<1x128xf32>
    %4 = vector.broadcast %2 : vector<16x1xf32> to vector<16x128xf32>
    %5 = vector.broadcast %3 : vector<1x128xf32> to vector<16x128xf32>
    %6 = arith.mulf %4, %5 : vector<16x128xf32>
    %7 = vector.extract_strided_slice %0 {offsets = [0, 1], sizes = [16, 1], strides = [1, 1]} : vector<16x3xf32> to vector<16x1xf32>
    %8 = vector.extract_strided_slice %1 {offsets = [1, 0], sizes = [1, 128], strides = [1, 1]} : vector<3x128xf32> to vector<1x128xf32>
    %9 = vector.broadcast %7 : vector<16x1xf32> to vector<16x128xf32>
    %10 = vector.broadcast %8 : vector<1x128xf32> to vector<16x128xf32>
    %11 = arith.mulf %9, %10 : vector<16x128xf32>
    %12 = arith.addf %6, %11 : vector<16x128xf32>
    %13 = vector.extract_strided_slice %0 {offsets = [0, 2], sizes = [16, 1], strides = [1, 1]} : vector<16x3xf32> to vector<16x1xf32>
    %14 = vector.extract_strided_slice %1 {offsets = [2, 0], sizes = [1, 128], strides = [1, 1]} : vector<3x128xf32> to vector<1x128xf32>
    %15 = vector.broadcast %13 : vector<16x1xf32> to vector<16x128xf32>
    %16 = vector.broadcast %14 : vector<1x128xf32> to vector<16x128xf32>
    %17 = arith.mulf %15, %16 : vector<16x128xf32>
    %18 = arith.addf %12, %17 : vector<16x128xf32>
    %c0_3 = arith.constant 0 : index
    %c0_4 = arith.constant 0 : index
    %c0_5 = arith.constant 0 : index
    %19 = vector.load %arg3[%c0_3, %c0_4, %c0_5] : memref<1x1x128xf32, #tpu.memory_space<vmem>>, vector<1x1x128xf32>
    %20 = vector.shape_cast %19 : vector<1x1x128xf32> to vector<1x128xf32>
    %21 = vector.broadcast %20 : vector<1x128xf32> to vector<16x128xf32>
    %22 = arith.addf %18, %21 : vector<16x128xf32>
    %cst = arith.constant 0.000000e+00 : f32
    %23 = vector.broadcast %cst : f32 to vector<16x128xf32>
    %24 = arith.cmpf oge, %22, %23 : vector<16x128xf32>
    %cst_6 = arith.constant 0.00999999977 : f32
    %25 = vector.broadcast %cst_6 : f32 to vector<16x128xf32>
    %26 = arith.mulf %25, %22 : vector<16x128xf32>
    %27 = arith.select %24, %22, %26 : vector<16x128xi1>, vector<16x128xf32>
    %28 = arith.truncf %27 : vector<16x128xf32> to vector<16x128xbf16>
    %c0_7 = arith.constant 0 : index
    %c0_8 = arith.constant 0 : index
    %29 = vector.load %arg5[%c0_7, %c0_8] : memref<128x128xbf16, #tpu.memory_space<vmem>>, vector<128x128xbf16>
    %cst_9 = arith.constant dense<0.000000e+00> : vector<16x128xf32>
    %30 = tpu.matmul %28, %29, %cst_9 {dimension_numbers = #tpu.dot_dimension_numbers<[1], [0], [0], [1], [0, 0, 1, 1], [], []>} : vector<16x128xbf16>, vector<128x128xbf16>, vector<16x128xf32> -> vector<16x128xf32>
    %c0_10 = arith.constant 0 : index
    %c0_11 = arith.constant 0 : index
    %31 = vector.load %arg6[%c0_10, %c0_11] : memref<1x128xf32, #tpu.memory_space<vmem>>, vector<1x128xf32>
    %32 = vector.broadcast %31 : vector<1x128xf32> to vector<16x128xf32>
    %33 = arith.addf %30, %32 : vector<16x128xf32>
    %cst_12 = arith.constant 0.000000e+00 : f32
    %34 = vector.broadcast %cst_12 : f32 to vector<16x128xf32>
    %35 = arith.cmpf oge, %33, %34 : vector<16x128xf32>
    %cst_13 = arith.constant 0.00999999977 : f32
    %36 = vector.broadcast %cst_13 : f32 to vector<16x128xf32>
    %37 = arith.mulf %36, %33 : vector<16x128xf32>
    %38 = arith.select %35, %33, %37 : vector<16x128xi1>, vector<16x128xf32>
    %39 = arith.truncf %38 : vector<16x128xf32> to vector<16x128xbf16>
    %c0_14 = arith.constant 0 : index
    %c0_15 = arith.constant 0 : index
    %c0_16 = arith.constant 0 : index
    %40 = vector.load %arg7[%c0_14, %c0_15, %c0_16] : memref<1x16x128xbf16, #tpu.memory_space<vmem>>, vector<1x16x128xbf16>
    %41 = vector.shape_cast %40 : vector<1x16x128xbf16> to vector<16x128xbf16>
    %42 = vector.shape_cast %39 : vector<16x128xbf16> to vector<1x16x128xbf16>
    tpu.vector_store %arg7[%c0_14, %c0_15, %c0_16], %42 {strides = array<i32>} : memref<1x16x128xbf16, #tpu.memory_space<vmem>>, vector<1x16x128xbf16>,
    return
  }
  func.func @transform_0(%arg0: i32, %arg1: i32) -> (i32, i32) {
    %c0_i32 = arith.constant 0 : i32
    %c0_i32_0 = arith.constant 0 : i32
    return %arg1, %c0_i32 : i32, i32
  }
  func.func @transform_1(%arg0: i32, %arg1: i32) -> (i32, i32, i32) {
    %c0_i32 = arith.constant 0 : i32
    %c0_i32_0 = arith.constant 0 : i32
    %c0_i32_1 = arith.constant 0 : i32
    return %arg0, %c0_i32, %c0_i32_0 : i32, i32, i32
  }
  func.func @transform_2(%arg0: i32, %arg1: i32) -> (i32, i32) {
    %c0_i32 = arith.constant 0 : i32
    %c0_i32_0 = arith.constant 0 : i32
    %c0_i32_1 = arith.constant 0 : i32
    return %c0_i32, %c0_i32_0 : i32, i32
  }
  func.func @transform_3(%arg0: i32, %arg1: i32) -> (i32, i32) {
    %c0_i32 = arith.constant 0 : i32
    %c0_i32_0 = arith.constant 0 : i32
    %c0_i32_1 = arith.constant 0 : i32
    return %c0_i32, %c0_i32_0 : i32, i32
  }
  func.func @transform_4(%arg0: i32, %arg1: i32) -> (i32, i32) {
    %c0_i32 = arith.constant 0 : i32
    %c0_i32_0 = arith.constant 0 : i32
    %c0_i32_1 = arith.constant 0 : i32
    return %c0_i32, %c0_i32_0 : i32, i32
  }
  func.func @transform_5(%arg0: i32, %arg1: i32) -> (i32, i32, i32) {
    %c0_i32 = arith.constant 0 : i32
    %c0_i32_0 = arith.constant 0 : i32
    return %arg0, %arg1, %c0_i32 : i32, i32, i32
  }
}

module attributes {stable_mosaic.version = 11 : i64} {
  func.func @_adanorm_kernel(%arg0: i32, %arg1: memref<1x16x128xf32, #tpu.memory_space<vmem>>, %arg2: memref<1x16x128xbf16, #tpu.memory_space<vmem>>, %arg3: memref<128x256xbf16, #tpu.memory_space<vmem>>, %arg4: memref<1x256xf32, #tpu.memory_space<vmem>>, %arg5: memref<1x16x128xf32, #tpu.memory_space<vmem>>) attributes {dimension_semantics = [#tpu.dimension_semantics<parallel>], iteration_bounds = array<i64: 2>, scalar_prefetch = 0 : i64, scratch_operands = 0 : i64, tpu.core_type = #tpu.core_type<tc>, window_params = [{pipeline_mode = #tpu.pipeline_mode<synchronous>, transform_indices = @transform_0, window_bounds = array<i64: 1, 16, 128>}, {transform_indices = @transform_1, window_bounds = array<i64: 1, 16, 128>}, {pipeline_mode = #tpu.pipeline_mode<synchronous>, transform_indices = @transform_2, window_bounds = array<i64: 128, 256>}, {pipeline_mode = #tpu.pipeline_mode<synchronous>, transform_indices = @transform_3, window_bounds = array<i64: 1, 256>}, {transform_indices = @transform_4, window_bounds = array<i64: 1, 16, 128>}]} {
    %c0 = arith.constant 0 : index
    %c0_0 = arith.constant 0 : index
    %c0_1 = arith.constant 0 : index
    %0 = vector.load %arg1[%c0, %c0_0, %c0_1] : memref<1x16x128xf32, #tpu.memory_space<vmem>>, vector<1x16x128xf32>
    %1 = vector.shape_cast %0 : vector<1x16x128xf32> to vector<16x128xf32>
    %cst = arith.constant 0.000000e+00 : f32
    %2 = vector.broadcast %cst : f32 to vector<16x128xf32>
    %3 = arith.cmpf oge, %1, %2 : vector<16x128xf32>
    %cst_2 = arith.constant 0.00999999977 : f32
    %4 = vector.broadcast %cst_2 : f32 to vector<16x128xf32>
    %5 = arith.mulf %4, %1 : vector<16x128xf32>
    %6 = arith.select %3, %1, %5 : vector<16x128xi1>, vector<16x128xf32>
    %cst_3 = arith.constant dense<0.000000e+00> : vector<128xf32>
    %7 = vector.multi_reduction <add>, %6, %cst_3 [0] : vector<16x128xf32> to vector<128xf32>
    %8 = vector.shape_cast %7 : vector<128xf32> to vector<1x128xf32>
    %cst_4 = arith.constant 6.250000e-02 : f32
    %9 = vector.broadcast %cst_4 : f32 to vector<1x128xf32>
    %10 = arith.mulf %8, %9 : vector<1x128xf32>
    %11 = arith.mulf %6, %6 : vector<16x128xf32>
    %cst_5 = arith.constant dense<0.000000e+00> : vector<128xf32>
    %12 = vector.multi_reduction <add>, %11, %cst_5 [0] : vector<16x128xf32> to vector<128xf32>
    %13 = vector.shape_cast %12 : vector<128xf32> to vector<1x128xf32>
    %cst_6 = arith.constant 6.250000e-02 : f32
    %14 = vector.broadcast %cst_6 : f32 to vector<1x128xf32>
    %15 = arith.mulf %13, %14 : vector<1x128xf32>
    %16 = arith.mulf %10, %10 : vector<1x128xf32>
    %17 = arith.subf %15, %16 : vector<1x128xf32>
    %cst_7 = arith.constant 0.000000e+00 : f32
    %18 = vector.broadcast %cst_7 : f32 to vector<1x128xf32>
    %19 = arith.maximumf %17, %18 : vector<1x128xf32>
    %20 = vector.broadcast %10 : vector<1x128xf32> to vector<16x128xf32>
    %21 = arith.subf %6, %20 : vector<16x128xf32>
    %cst_8 = arith.constant 9.99999974E-6 : f32
    %22 = vector.broadcast %cst_8 : f32 to vector<1x128xf32>
    %23 = arith.addf %19, %22 : vector<1x128xf32>
    %24 = math.rsqrt %23 : vector<1x128xf32>
    %25 = vector.broadcast %24 : vector<1x128xf32> to vector<16x128xf32>
    %26 = arith.mulf %21, %25 : vector<16x128xf32>
    %c0_9 = arith.constant 0 : index
    %c0_10 = arith.constant 0 : index
    %c0_11 = arith.constant 0 : index
    %27 = vector.load %arg2[%c0_9, %c0_10, %c0_11] : memref<1x16x128xbf16, #tpu.memory_space<vmem>>, vector<1x16x128xbf16>
    %28 = vector.shape_cast %27 : vector<1x16x128xbf16> to vector<16x128xbf16>
    %c0_12 = arith.constant 0 : index
    %c0_13 = arith.constant 0 : index
    %29 = vector.load %arg3[%c0_12, %c0_13] : memref<128x256xbf16, #tpu.memory_space<vmem>>, vector<128x256xbf16>
    %cst_14 = arith.constant dense<0.000000e+00> : vector<16x256xf32>
    %30 = tpu.matmul %28, %29, %cst_14 {dimension_numbers = #tpu.dot_dimension_numbers<[1], [0], [0], [1], [0, 0, 1, 1], [], []>} : vector<16x128xbf16>, vector<128x256xbf16>, vector<16x256xf32> -> vector<16x256xf32>
    %c0_15 = arith.constant 0 : index
    %c0_16 = arith.constant 0 : index
    %31 = vector.load %arg4[%c0_15, %c0_16] : memref<1x256xf32, #tpu.memory_space<vmem>>, vector<1x256xf32>
    %32 = vector.broadcast %31 : vector<1x256xf32> to vector<16x256xf32>
    %33 = arith.addf %30, %32 : vector<16x256xf32>
    %34 = vector.extract_strided_slice %33 {offsets = [0, 0], sizes = [16, 128], strides = [1, 1]} : vector<16x256xf32> to vector<16x128xf32>
    %35 = arith.mulf %34, %26 : vector<16x128xf32>
    %36 = vector.extract_strided_slice %33 {offsets = [0, 128], sizes = [16, 128], strides = [1, 1]} : vector<16x256xf32> to vector<16x128xf32>
    %37 = arith.addf %35, %36 : vector<16x128xf32>
    %c0_17 = arith.constant 0 : index
    %c0_18 = arith.constant 0 : index
    %c0_19 = arith.constant 0 : index
    %38 = vector.load %arg5[%c0_17, %c0_18, %c0_19] : memref<1x16x128xf32, #tpu.memory_space<vmem>>, vector<1x16x128xf32>
    %39 = vector.shape_cast %38 : vector<1x16x128xf32> to vector<16x128xf32>
    %40 = vector.shape_cast %37 : vector<16x128xf32> to vector<1x16x128xf32>
    tpu.vector_store %arg5[%c0_17, %c0_18, %c0_19], %40 {strides = array<i32>} : memref<1x16x128xf32, #tpu.memory_space<vmem>>, vector<1x16x128xf32>,
    return
  }
  func.func @transform_0(%arg0: i32) -> (i32, i32, i32) {
    %c0_i32 = arith.constant 0 : i32
    %c0_i32_0 = arith.constant 0 : i32
    %c0_i32_1 = arith.constant 0 : i32
    %c0_i32_2 = arith.constant 0 : i32
    return %c0_i32, %c0_i32_0, %c0_i32_1 : i32, i32, i32
  }
  func.func @transform_1(%arg0: i32) -> (i32, i32, i32) {
    %c0_i32 = arith.constant 0 : i32
    %c0_i32_0 = arith.constant 0 : i32
    %c0_i32_1 = arith.constant 0 : i32
    return %arg0, %c0_i32, %c0_i32_0 : i32, i32, i32
  }
  func.func @transform_2(%arg0: i32) -> (i32, i32) {
    %c0_i32 = arith.constant 0 : i32
    %c0_i32_0 = arith.constant 0 : i32
    %c0_i32_1 = arith.constant 0 : i32
    return %c0_i32, %c0_i32_0 : i32, i32
  }
  func.func @transform_3(%arg0: i32) -> (i32, i32) {
    %c0_i32 = arith.constant 0 : i32
    %c0_i32_0 = arith.constant 0 : i32
    %c0_i32_1 = arith.constant 0 : i32
    return %c0_i32, %c0_i32_0 : i32, i32
  }
  func.func @transform_4(%arg0: i32) -> (i32, i32, i32) {
    %c0_i32 = arith.constant 0 : i32
    %c0_i32_0 = arith.constant 0 : i32
    %c0_i32_1 = arith.constant 0 : i32
    return %arg0, %c0_i32, %c0_i32_0 : i32, i32, i32
  }
}

module attributes {stable_mosaic.version = 11 : i64} {
  func.func @_adanorm_kernel(%arg0: i32, %arg1: memref<1x16x128xf32, #tpu.memory_space<vmem>>, %arg2: memref<1x16x128xbf16, #tpu.memory_space<vmem>>, %arg3: memref<128x256xbf16, #tpu.memory_space<vmem>>, %arg4: memref<1x256xf32, #tpu.memory_space<vmem>>, %arg5: memref<1x16x128xf32, #tpu.memory_space<vmem>>, %arg6: memref<1x1x128xf32, #tpu.memory_space<vmem>>) attributes {dimension_semantics = [#tpu.dimension_semantics<parallel>], iteration_bounds = array<i64: 2>, scalar_prefetch = 0 : i64, scratch_operands = 0 : i64, tpu.core_type = #tpu.core_type<tc>, window_params = [{transform_indices = @transform_0, window_bounds = array<i64: 1, 16, 128>}, {transform_indices = @transform_1, window_bounds = array<i64: 1, 16, 128>}, {pipeline_mode = #tpu.pipeline_mode<synchronous>, transform_indices = @transform_2, window_bounds = array<i64: 128, 256>}, {pipeline_mode = #tpu.pipeline_mode<synchronous>, transform_indices = @transform_3, window_bounds = array<i64: 1, 256>}, {transform_indices = @transform_4, window_bounds = array<i64: 1, 16, 128>}, {transform_indices = @transform_5, window_bounds = array<i64: 1, 1, 128>}]} {
    %c0 = arith.constant 0 : index
    %c0_0 = arith.constant 0 : index
    %c0_1 = arith.constant 0 : index
    %0 = vector.load %arg1[%c0, %c0_0, %c0_1] : memref<1x16x128xf32, #tpu.memory_space<vmem>>, vector<1x16x128xf32>
    %1 = vector.shape_cast %0 : vector<1x16x128xf32> to vector<16x128xf32>
    %cst = arith.constant 0.000000e+00 : f32
    %2 = vector.broadcast %cst : f32 to vector<16x128xf32>
    %3 = arith.cmpf oge, %1, %2 : vector<16x128xf32>
    %cst_2 = arith.constant 0.00999999977 : f32
    %4 = vector.broadcast %cst_2 : f32 to vector<16x128xf32>
    %5 = arith.mulf %4, %1 : vector<16x128xf32>
    %6 = arith.select %3, %1, %5 : vector<16x128xi1>, vector<16x128xf32>
    %cst_3 = arith.constant dense<0.000000e+00> : vector<128xf32>
    %7 = vector.multi_reduction <add>, %6, %cst_3 [0] : vector<16x128xf32> to vector<128xf32>
    %8 = vector.shape_cast %7 : vector<128xf32> to vector<1x128xf32>
    %cst_4 = arith.constant 6.250000e-02 : f32
    %9 = vector.broadcast %cst_4 : f32 to vector<1x128xf32>
    %10 = arith.mulf %8, %9 : vector<1x128xf32>
    %11 = arith.mulf %6, %6 : vector<16x128xf32>
    %cst_5 = arith.constant dense<0.000000e+00> : vector<128xf32>
    %12 = vector.multi_reduction <add>, %11, %cst_5 [0] : vector<16x128xf32> to vector<128xf32>
    %13 = vector.shape_cast %12 : vector<128xf32> to vector<1x128xf32>
    %cst_6 = arith.constant 6.250000e-02 : f32
    %14 = vector.broadcast %cst_6 : f32 to vector<1x128xf32>
    %15 = arith.mulf %13, %14 : vector<1x128xf32>
    %16 = arith.mulf %10, %10 : vector<1x128xf32>
    %17 = arith.subf %15, %16 : vector<1x128xf32>
    %cst_7 = arith.constant 0.000000e+00 : f32
    %18 = vector.broadcast %cst_7 : f32 to vector<1x128xf32>
    %19 = arith.maximumf %17, %18 : vector<1x128xf32>
    %20 = vector.broadcast %10 : vector<1x128xf32> to vector<16x128xf32>
    %21 = arith.subf %6, %20 : vector<16x128xf32>
    %cst_8 = arith.constant 9.99999974E-6 : f32
    %22 = vector.broadcast %cst_8 : f32 to vector<1x128xf32>
    %23 = arith.addf %19, %22 : vector<1x128xf32>
    %24 = math.rsqrt %23 : vector<1x128xf32>
    %25 = vector.broadcast %24 : vector<1x128xf32> to vector<16x128xf32>
    %26 = arith.mulf %21, %25 : vector<16x128xf32>
    %c0_9 = arith.constant 0 : index
    %c0_10 = arith.constant 0 : index
    %c0_11 = arith.constant 0 : index
    %27 = vector.load %arg2[%c0_9, %c0_10, %c0_11] : memref<1x16x128xbf16, #tpu.memory_space<vmem>>, vector<1x16x128xbf16>
    %28 = vector.shape_cast %27 : vector<1x16x128xbf16> to vector<16x128xbf16>
    %c0_12 = arith.constant 0 : index
    %c0_13 = arith.constant 0 : index
    %29 = vector.load %arg3[%c0_12, %c0_13] : memref<128x256xbf16, #tpu.memory_space<vmem>>, vector<128x256xbf16>
    %cst_14 = arith.constant dense<0.000000e+00> : vector<16x256xf32>
    %30 = tpu.matmul %28, %29, %cst_14 {dimension_numbers = #tpu.dot_dimension_numbers<[1], [0], [0], [1], [0, 0, 1, 1], [], []>} : vector<16x128xbf16>, vector<128x256xbf16>, vector<16x256xf32> -> vector<16x256xf32>
    %c0_15 = arith.constant 0 : index
    %c0_16 = arith.constant 0 : index
    %31 = vector.load %arg4[%c0_15, %c0_16] : memref<1x256xf32, #tpu.memory_space<vmem>>, vector<1x256xf32>
    %32 = vector.broadcast %31 : vector<1x256xf32> to vector<16x256xf32>
    %33 = arith.addf %30, %32 : vector<16x256xf32>
    %34 = vector.extract_strided_slice %33 {offsets = [0, 0], sizes = [16, 128], strides = [1, 1]} : vector<16x256xf32> to vector<16x128xf32>
    %35 = arith.mulf %34, %26 : vector<16x128xf32>
    %36 = vector.extract_strided_slice %33 {offsets = [0, 128], sizes = [16, 128], strides = [1, 1]} : vector<16x256xf32> to vector<16x128xf32>
    %37 = arith.addf %35, %36 : vector<16x128xf32>
    %c0_17 = arith.constant 0 : index
    %c0_18 = arith.constant 0 : index
    %c0_19 = arith.constant 0 : index
    %38 = vector.load %arg5[%c0_17, %c0_18, %c0_19] : memref<1x16x128xf32, #tpu.memory_space<vmem>>, vector<1x16x128xf32>
    %39 = vector.shape_cast %38 : vector<1x16x128xf32> to vector<16x128xf32>
    %40 = vector.shape_cast %37 : vector<16x128xf32> to vector<1x16x128xf32>
    tpu.vector_store %arg5[%c0_17, %c0_18, %c0_19], %40 {strides = array<i32>} : memref<1x16x128xf32, #tpu.memory_space<vmem>>, vector<1x16x128xf32>,
    %cst_20 = arith.constant dense<0xFF800000> : vector<128xf32>
    %41 = vector.multi_reduction <maximumf>, %37, %cst_20 [0] : vector<16x128xf32> to vector<128xf32>
    %42 = vector.shape_cast %41 : vector<128xf32> to vector<1x128xf32>
    %c0_21 = arith.constant 0 : index
    %c0_22 = arith.constant 0 : index
    %c0_23 = arith.constant 0 : index
    %43 = vector.load %arg6[%c0_21, %c0_22, %c0_23] : memref<1x1x128xf32, #tpu.memory_space<vmem>>, vector<1x1x128xf32>
    %44 = vector.shape_cast %43 : vector<1x1x128xf32> to vector<1x128xf32>
    %45 = vector.shape_cast %42 : vector<1x128xf32> to vector<1x1x128xf32>
    tpu.vector_store %arg6[%c0_21, %c0_22, %c0_23], %45 {strides = array<i32>} : memref<1x1x128xf32, #tpu.memory_space<vmem>>, vector<1x1x128xf32>,
    return
  }
  func.func @transform_0(%arg0: i32) -> (i32, i32, i32) {
    %c0_i32 = arith.constant 0 : i32
    %c0_i32_0 = arith.constant 0 : i32
    %c0_i32_1 = arith.constant 0 : i32
    return %arg0, %c0_i32, %c0_i32_0 : i32, i32, i32
  }
  func.func @transform_1(%arg0: i32) -> (i32, i32, i32) {
    %c0_i32 = arith.constant 0 : i32
    %c0_i32_0 = arith.constant 0 : i32
    %c0_i32_1 = arith.constant 0 : i32
    return %arg0, %c0_i32, %c0_i32_0 : i32, i32, i32
  }
  func.func @transform_2(%arg0: i32) -> (i32, i32) {
    %c0_i32 = arith.constant 0 : i32
    %c0_i32_0 = arith.constant 0 : i32
    %c0_i32_1 = arith.constant 0 : i32
    return %c0_i32, %c0_i32_0 : i32, i32
  }
  func.func @transform_3(%arg0: i32) -> (i32, i32) {
    %c0_i32 = arith.constant 0 : i32
    %c0_i32_0 = arith.constant 0 : i32
    %c0_i32_1 = arith.constant 0 : i32
    return %c0_i32, %c0_i32_0 : i32, i32
  }
  func.func @transform_4(%arg0: i32) -> (i32, i32, i32) {
    %c0_i32 = arith.constant 0 : i32
    %c0_i32_0 = arith.constant 0 : i32
    %c0_i32_1 = arith.constant 0 : i32
    return %arg0, %c0_i32, %c0_i32_0 : i32, i32, i32
  }
  func.func @transform_5(%arg0: i32) -> (i32, i32, i32) {
    %c0_i32 = arith.constant 0 : i32
    %c0_i32_0 = arith.constant 0 : i32
    %c0_i32_1 = arith.constant 0 : i32
    return %arg0, %c0_i32, %c0_i32_0 : i32, i32, i32
  }
}

module attributes {stable_mosaic.version = 11 : i64} {
  func.func @_pgnn_kernel(%arg0: i32, %arg1: i32, %arg2: memref<1x16x128xf32, #tpu.memory_space<vmem>>, %arg3: memref<16x3xf32, #tpu.memory_space<vmem>>, %arg4: memref<1x16x128xbf16, #tpu.memory_space<vmem>>, %arg5: memref<16x1xf32, #tpu.memory_space<vmem>>, %arg6: memref<128x128xbf16, #tpu.memory_space<vmem>>, %arg7: memref<1x128xf32, #tpu.memory_space<vmem>>, %arg8: memref<128x3xbf16, #tpu.memory_space<vmem>>, %arg9: memref<1x3xf32, #tpu.memory_space<vmem>>, %arg10: memref<3x128xf32, #tpu.memory_space<vmem>>, %arg11: memref<128x128xbf16, #tpu.memory_space<vmem>>, %arg12: memref<1x128xf32, #tpu.memory_space<vmem>>, %arg13: memref<128x128xbf16, #tpu.memory_space<vmem>>, %arg14: memref<1x128xf32, #tpu.memory_space<vmem>>, %arg15: memref<1x16x128xf32, #tpu.memory_space<vmem>>) attributes {dimension_semantics = [#tpu.dimension_semantics<parallel>, #tpu.dimension_semantics<parallel>], iteration_bounds = array<i64: 2, 1>, scalar_prefetch = 0 : i64, scratch_operands = 0 : i64, tpu.core_type = #tpu.core_type<tc>, window_params = [{transform_indices = @transform_0, window_bounds = array<i64: 1, 16, 128>}, {transform_indices = @transform_1, window_bounds = array<i64: 16, 3>}, {transform_indices = @transform_2, window_bounds = array<i64: 1, 16, 128>}, {transform_indices = @transform_3, window_bounds = array<i64: 16, 1>}, {pipeline_mode = #tpu.pipeline_mode<synchronous>, transform_indices = @transform_4, window_bounds = array<i64: 128, 128>}, {pipeline_mode = #tpu.pipeline_mode<synchronous>, transform_indices = @transform_5, window_bounds = array<i64: 1, 128>}, {pipeline_mode = #tpu.pipeline_mode<synchronous>, transform_indices = @transform_6, window_bounds = array<i64: 128, 3>}, {pipeline_mode = #tpu.pipeline_mode<synchronous>, transform_indices = @transform_7, window_bounds = array<i64: 1, 3>}, {pipeline_mode = #tpu.pipeline_mode<synchronous>, transform_indices = @transform_8, window_bounds = array<i64: 3, 128>}, {pipeline_mode = #tpu.pipeline_mode<synchronous>, transform_indices = @transform_9, window_bounds = array<i64: 128, 128>}, {pipeline_mode = #tpu.pipeline_mode<synchronous>, transform_indices = @transform_10, window_bounds = array<i64: 1, 128>}, {pipeline_mode = #tpu.pipeline_mode<synchronous>, transform_indices = @transform_11, window_bounds = array<i64: 128, 128>}, {pipeline_mode = #tpu.pipeline_mode<synchronous>, transform_indices = @transform_12, window_bounds = array<i64: 1, 128>}, {transform_indices = @transform_13, window_bounds = array<i64: 1, 16, 128>}]} {
    %c0 = arith.constant 0 : index
    %c0_0 = arith.constant 0 : index
    %c0_1 = arith.constant 0 : index
    %0 = vector.load %arg2[%c0, %c0_0, %c0_1] : memref<1x16x128xf32, #tpu.memory_space<vmem>>, vector<1x16x128xf32>
    %1 = vector.shape_cast %0 : vector<1x16x128xf32> to vector<16x128xf32>
    %2 = arith.truncf %1 : vector<16x128xf32> to vector<16x128xbf16>
    %c0_2 = arith.constant 0 : index
    %c0_3 = arith.constant 0 : index
    %3 = vector.load %arg6[%c0_2, %c0_3] : memref<128x128xbf16, #tpu.memory_space<vmem>>, vector<128x128xbf16>
    %cst = arith.constant dense<0.000000e+00> : vector<16x128xf32>
    %4 = tpu.matmul %2, %3, %cst {dimension_numbers = #tpu.dot_dimension_numbers<[1], [0], [0], [1], [0, 0, 1, 1], [], []>} : vector<16x128xbf16>, vector<128x128xbf16>, vector<16x128xf32> -> vector<16x128xf32>
    %c0_4 = arith.constant 0 : index
    %c0_5 = arith.constant 0 : index
    %5 = vector.load %arg7[%c0_4, %c0_5] : memref<1x128xf32, #tpu.memory_space<vmem>>, vector<1x128xf32>
    %6 = vector.broadcast %5 : vector<1x128xf32> to vector<16x128xf32>
    %7 = arith.addf %4, %6 : vector<16x128xf32>
    %cst_6 = arith.constant 0.000000e+00 : f32
    %8 = vector.broadcast %cst_6 : f32 to vector<16x128xf32>
    %9 = arith.cmpf oge, %7, %8 : vector<16x128xf32>
    %cst_7 = arith.constant 0.00999999977 : f32
    %10 = vector.broadcast %cst_7 : f32 to vector<16x128xf32>
    %11 = arith.mulf %10, %7 : vector<16x128xf32>
    %12 = arith.select %9, %7, %11 : vector<16x128xi1>, vector<16x128xf32>
    %13 = arith.truncf %12 : vector<16x128xf32> to vector<16x128xbf16>
    %c0_8 = arith.constant 0 : index
    %c0_9 = arith.constant 0 : index
    %14 = vector.load %arg8[%c0_8, %c0_9] : memref<128x3xbf16, #tpu.memory_space<vmem>>, vector<128x3xbf16>
    %cst_10 = arith.constant dense<0.000000e+00> : vector<16x3xf32>
    %15 = tpu.matmul %13, %14, %cst_10 {dimension_numbers = #tpu.dot_dimension_numbers<[1], [0], [0], [1], [0, 0, 1, 1], [], []>} : vector<16x128xbf16>, vector<128x3xbf16>, vector<16x3xf32> -> vector<16x3xf32>
    %c0_11 = arith.constant 0 : index
    %c0_12 = arith.constant 0 : index
    %16 = vector.load %arg9[%c0_11, %c0_12] : memref<1x3xf32, #tpu.memory_space<vmem>>, vector<1x3xf32>
    %17 = vector.broadcast %16 : vector<1x3xf32> to vector<16x3xf32>
    %18 = arith.addf %15, %17 : vector<16x3xf32>
    %19 = math.tanh %18 : vector<16x3xf32>
    %c0_13 = arith.constant 0 : index
    %c0_14 = arith.constant 0 : index
    %20 = vector.load %arg5[%c0_13, %c0_14] : memref<16x1xf32, #tpu.memory_space<vmem>>, vector<16x1xf32>
    %c0_15 = arith.constant 0 : index
    %c0_16 = arith.constant 0 : index
    %21 = vector.load %arg3[%c0_15, %c0_16] : memref<16x3xf32, #tpu.memory_space<vmem>>, vector<16x3xf32>
    %22 = arith.addf %19, %21 : vector<16x3xf32>
    %23 = vector.broadcast %20 : vector<16x1xf32> to vector<16x3xf32>
    %24 = arith.mulf %23, %22 : vector<16x3xf32>
    %c0_17 = arith.constant 0 : index
    %c0_18 = arith.constant 0 : index
    %25 = vector.load %arg10[%c0_17, %c0_18] : memref<3x128xf32, #tpu.memory_space<vmem>>, vector<3x128xf32>
    %26 = vector.extract_strided_slice %24 {offsets = [0, 0], sizes = [16, 1], strides = [1, 1]} : vector<16x3xf32> to vector<16x1xf32>
    %27 = vector.extract_strided_slice %25 {offsets = [0, 0], sizes = [1, 128], strides = [1, 1]} : vector<3x128xf32> to vector<1x128xf32>
    %28 = vector.broadcast %26 : vector<16x1xf32> to vector<16x128xf32>
    %29 = vector.broadcast %27 : vector<1x128xf32> to vector<16x128xf32>
    %30 = arith.mulf %28, %29 : vector<16x128xf32>
    %31 = vector.extract_strided_slice %24 {offsets = [0, 1], sizes = [16, 1], strides = [1, 1]} : vector<16x3xf32> to vector<16x1xf32>
    %32 = vector.extract_strided_slice %25 {offsets = [1, 0], sizes = [1, 128], strides = [1, 1]} : vector<3x128xf32> to vector<1x128xf32>
    %33 = vector.broadcast %31 : vector<16x1xf32> to vector<16x128xf32>
    %34 = vector.broadcast %32 : vector<1x128xf32> to vector<16x128xf32>
    %35 = arith.mulf %33, %34 : vector<16x128xf32>
    %36 = arith.addf %30, %35 : vector<16x128xf32>
    %37 = vector.extract_strided_slice %24 {offsets = [0, 2], sizes = [16, 1], strides = [1, 1]} : vector<16x3xf32> to vector<16x1xf32>
    %38 = vector.extract_strided_slice %25 {offsets = [2, 0], sizes = [1, 128], strides = [1, 1]} : vector<3x128xf32> to vector<1x128xf32>
    %39 = vector.broadcast %37 : vector<16x1xf32> to vector<16x128xf32>
    %40 = vector.broadcast %38 : vector<1x128xf32> to vector<16x128xf32>
    %41 = arith.mulf %39, %40 : vector<16x128xf32>
    %42 = arith.addf %36, %41 : vector<16x128xf32>
    %c0_19 = arith.constant 0 : index
    %c0_20 = arith.constant 0 : index
    %c0_21 = arith.constant 0 : index
    %43 = vector.load %arg4[%c0_19, %c0_20, %c0_21] : memref<1x16x128xbf16, #tpu.memory_space<vmem>>, vector<1x16x128xbf16>
    %44 = vector.shape_cast %43 : vector<1x16x128xbf16> to vector<16x128xbf16>
    %c0_22 = arith.constant 0 : index
    %c0_23 = arith.constant 0 : index
    %45 = vector.load %arg11[%c0_22, %c0_23] : memref<128x128xbf16, #tpu.memory_space<vmem>>, vector<128x128xbf16>
    %cst_24 = arith.constant dense<0.000000e+00> : vector<16x128xf32>
    %46 = tpu.matmul %44, %45, %cst_24 {dimension_numbers = #tpu.dot_dimension_numbers<[1], [0], [0], [1], [0, 0, 1, 1], [], []>} : vector<16x128xbf16>, vector<128x128xbf16>, vector<16x128xf32> -> vector<16x128xf32>
    %47 = arith.addf %42, %46 : vector<16x128xf32>
    %c0_25 = arith.constant 0 : index
    %c0_26 = arith.constant 0 : index
    %48 = vector.load %arg12[%c0_25, %c0_26] : memref<1x128xf32, #tpu.memory_space<vmem>>, vector<1x128xf32>
    %49 = vector.broadcast %48 : vector<1x128xf32> to vector<16x128xf32>
    %50 = arith.addf %47, %49 : vector<16x128xf32>
    %cst_27 = arith.constant 0.000000e+00 : f32
    %51 = vector.broadcast %cst_27 : f32 to vector<16x128xf32>
    %52 = arith.cmpf oge, %50, %51 : vector<16x128xf32>
    %cst_28 = arith.constant 0.00999999977 : f32
    %53 = vector.broadcast %cst_28 : f32 to vector<16x128xf32>
    %54 = arith.mulf %53, %50 : vector<16x128xf32>
    %55 = arith.select %52, %50, %54 : vector<16x128xi1>, vector<16x128xf32>
    %56 = arith.truncf %55 : vector<16x128xf32> to vector<16x128xbf16>
    %c0_29 = arith.constant 0 : index
    %c0_30 = arith.constant 0 : index
    %57 = vector.load %arg13[%c0_29, %c0_30] : memref<128x128xbf16, #tpu.memory_space<vmem>>, vector<128x128xbf16>
    %cst_31 = arith.constant dense<0.000000e+00> : vector<16x128xf32>
    %58 = tpu.matmul %56, %57, %cst_31 {dimension_numbers = #tpu.dot_dimension_numbers<[1], [0], [0], [1], [0, 0, 1, 1], [], []>} : vector<16x128xbf16>, vector<128x128xbf16>, vector<16x128xf32> -> vector<16x128xf32>
    %c0_32 = arith.constant 0 : index
    %c0_33 = arith.constant 0 : index
    %59 = vector.load %arg14[%c0_32, %c0_33] : memref<1x128xf32, #tpu.memory_space<vmem>>, vector<1x128xf32>
    %60 = vector.broadcast %59 : vector<1x128xf32> to vector<16x128xf32>
    %61 = arith.addf %58, %60 : vector<16x128xf32>
    %62 = arith.addf %1, %61 : vector<16x128xf32>
    %c0_34 = arith.constant 0 : index
    %c0_35 = arith.constant 0 : index
    %c0_36 = arith.constant 0 : index
    %63 = vector.load %arg15[%c0_34, %c0_35, %c0_36] : memref<1x16x128xf32, #tpu.memory_space<vmem>>, vector<1x16x128xf32>
    %64 = vector.shape_cast %63 : vector<1x16x128xf32> to vector<16x128xf32>
    %65 = vector.shape_cast %62 : vector<16x128xf32> to vector<1x16x128xf32>
    tpu.vector_store %arg15[%c0_34, %c0_35, %c0_36], %65 {strides = array<i32>} : memref<1x16x128xf32, #tpu.memory_space<vmem>>, vector<1x16x128xf32>,
    return
  }
  func.func @transform_0(%arg0: i32, %arg1: i32) -> (i32, i32, i32) {
    %c0_i32 = arith.constant 0 : i32
    %c0_i32_0 = arith.constant 0 : i32
    return %arg0, %arg1, %c0_i32 : i32, i32, i32
  }
  func.func @transform_1(%arg0: i32, %arg1: i32) -> (i32, i32) {
    %c0_i32 = arith.constant 0 : i32
    %c0_i32_0 = arith.constant 0 : i32
    return %arg1, %c0_i32 : i32, i32
  }
  func.func @transform_2(%arg0: i32, %arg1: i32) -> (i32, i32, i32) {
    %c0_i32 = arith.constant 0 : i32
    %c0_i32_0 = arith.constant 0 : i32
    return %arg0, %arg1, %c0_i32 : i32, i32, i32
  }
  func.func @transform_3(%arg0: i32, %arg1: i32) -> (i32, i32) {
    %c0_i32 = arith.constant 0 : i32
    %c0_i32_0 = arith.constant 0 : i32
    return %arg1, %c0_i32 : i32, i32
  }
  func.func @transform_4(%arg0: i32, %arg1: i32) -> (i32, i32) {
    %c0_i32 = arith.constant 0 : i32
    %c0_i32_0 = arith.constant 0 : i32
    %c0_i32_1 = arith.constant 0 : i32
    return %c0_i32, %c0_i32_0 : i32, i32
  }
  func.func @transform_5(%arg0: i32, %arg1: i32) -> (i32, i32) {
    %c0_i32 = arith.constant 0 : i32
    %c0_i32_0 = arith.constant 0 : i32
    %c0_i32_1 = arith.constant 0 : i32
    return %c0_i32, %c0_i32_0 : i32, i32
  }
  func.func @transform_6(%arg0: i32, %arg1: i32) -> (i32, i32) {
    %c0_i32 = arith.constant 0 : i32
    %c0_i32_0 = arith.constant 0 : i32
    %c0_i32_1 = arith.constant 0 : i32
    return %c0_i32, %c0_i32_0 : i32, i32
  }
  func.func @transform_7(%arg0: i32, %arg1: i32) -> (i32, i32) {
    %c0_i32 = arith.constant 0 : i32
    %c0_i32_0 = arith.constant 0 : i32
    %c0_i32_1 = arith.constant 0 : i32
    return %c0_i32, %c0_i32_0 : i32, i32
  }
  func.func @transform_8(%arg0: i32, %arg1: i32) -> (i32, i32) {
    %c0_i32 = arith.constant 0 : i32
    %c0_i32_0 = arith.constant 0 : i32
    %c0_i32_1 = arith.constant 0 : i32
    return %c0_i32, %c0_i32_0 : i32, i32
  }
  func.func @transform_9(%arg0: i32, %arg1: i32) -> (i32, i32) {
    %c0_i32 = arith.constant 0 : i32
    %c0_i32_0 = arith.constant 0 : i32
    %c0_i32_1 = arith.constant 0 : i32
    return %c0_i32, %c0_i32_0 : i32, i32
  }
  func.func @transform_10(%arg0: i32, %arg1: i32) -> (i32, i32) {
    %c0_i32 = arith.constant 0 : i32
    %c0_i32_0 = arith.constant 0 : i32
    %c0_i32_1 = arith.constant 0 : i32
    return %c0_i32, %c0_i32_0 : i32, i32
  }
  func.func @transform_11(%arg0: i32, %arg1: i32) -> (i32, i32) {
    %c0_i32 = arith.constant 0 : i32
    %c0_i32_0 = arith.constant 0 : i32
    %c0_i32_1 = arith.constant 0 : i32
    return %c0_i32, %c0_i32_0 : i32, i32
  }
  func.func @transform_12(%arg0: i32, %arg1: i32) -> (i32, i32) {
    %c0_i32 = arith.constant 0 : i32
    %c0_i32_0 = arith.constant 0 : i32
    %c0_i32_1 = arith.constant 0 : i32
    return %c0_i32, %c0_i32_0 : i32, i32
  }
  func.func @transform_13(%arg0: i32, %arg1: i32) -> (i32, i32, i32) {
    %c0_i32 = arith.constant 0 : i32
    %c0_i32_0 = arith.constant 0 : i32
    return %arg0, %arg1, %c0_i32 : i32, i32, i32
  }
}

module attributes {stable_mosaic.version = 11 : i64} {
  func.func @_tail_kernel(%arg0: i32, %arg1: i32, %arg2: memref<1x16x128xf32, #tpu.memory_space<vmem>>, %arg3: memref<1x1x128xf32, #tpu.memory_space<vmem>>, %arg4: memref<128x128xbf16, #tpu.memory_space<vmem>>, %arg5: memref<128x64xbf16, #tpu.memory_space<vmem>>, %arg6: memref<1x64xf32, #tpu.memory_space<vmem>>, %arg7: memref<3x64xbf16, #tpu.memory_space<vmem>>, %arg8: memref<3x1xf32, #tpu.memory_space<vmem>>, %arg9: memref<1x3x16xf32, #tpu.memory_space<vmem>>) attributes {dimension_semantics = [#tpu.dimension_semantics<parallel>, #tpu.dimension_semantics<parallel>], iteration_bounds = array<i64: 2, 1>, scalar_prefetch = 0 : i64, scratch_operands = 0 : i64, tpu.core_type = #tpu.core_type<tc>, window_params = [{transform_indices = @transform_0, window_bounds = array<i64: 1, 16, 128>}, {transform_indices = @transform_1, window_bounds = array<i64: 1, 1, 128>}, {pipeline_mode = #tpu.pipeline_mode<synchronous>, transform_indices = @transform_2, window_bounds = array<i64: 128, 128>}, {pipeline_mode = #tpu.pipeline_mode<synchronous>, transform_indices = @transform_3, window_bounds = array<i64: 128, 64>}, {pipeline_mode = #tpu.pipeline_mode<synchronous>, transform_indices = @transform_4, window_bounds = array<i64: 1, 64>}, {pipeline_mode = #tpu.pipeline_mode<synchronous>, transform_indices = @transform_5, window_bounds = array<i64: 3, 64>}, {pipeline_mode = #tpu.pipeline_mode<synchronous>, transform_indices = @transform_6, window_bounds = array<i64: 3, 1>}, {transform_indices = @transform_7, window_bounds = array<i64: 1, 3, 16>}]} {
    %c0 = arith.constant 0 : index
    %c0_0 = arith.constant 0 : index
    %c0_1 = arith.constant 0 : index
    %0 = vector.load %arg2[%c0, %c0_0, %c0_1] : memref<1x16x128xf32, #tpu.memory_space<vmem>>, vector<1x16x128xf32>
    %1 = vector.shape_cast %0 : vector<1x16x128xf32> to vector<16x128xf32>
    %2 = arith.truncf %1 : vector<16x128xf32> to vector<16x128xbf16>
    %c0_2 = arith.constant 0 : index
    %c0_3 = arith.constant 0 : index
    %3 = vector.load %arg4[%c0_2, %c0_3] : memref<128x128xbf16, #tpu.memory_space<vmem>>, vector<128x128xbf16>
    %cst = arith.constant dense<0.000000e+00> : vector<16x128xf32>
    %4 = tpu.matmul %2, %3, %cst {dimension_numbers = #tpu.dot_dimension_numbers<[1], [0], [0], [1], [0, 0, 1, 1], [], []>} : vector<16x128xbf16>, vector<128x128xbf16>, vector<16x128xf32> -> vector<16x128xf32>
    %c0_4 = arith.constant 0 : index
    %c0_5 = arith.constant 0 : index
    %c0_6 = arith.constant 0 : index
    %5 = vector.load %arg3[%c0_4, %c0_5, %c0_6] : memref<1x1x128xf32, #tpu.memory_space<vmem>>, vector<1x1x128xf32>
    %6 = vector.shape_cast %5 : vector<1x1x128xf32> to vector<1x128xf32>
    %7 = vector.broadcast %6 : vector<1x128xf32> to vector<16x128xf32>
    %8 = arith.addf %4, %7 : vector<16x128xf32>
    %cst_7 = arith.constant 0.000000e+00 : f32
    %9 = vector.broadcast %cst_7 : f32 to vector<16x128xf32>
    %10 = arith.cmpf oge, %8, %9 : vector<16x128xf32>
    %cst_8 = arith.constant 0.00999999977 : f32
    %11 = vector.broadcast %cst_8 : f32 to vector<16x128xf32>
    %12 = arith.mulf %11, %8 : vector<16x128xf32>
    %13 = arith.select %10, %8, %12 : vector<16x128xi1>, vector<16x128xf32>
    %14 = arith.truncf %13 : vector<16x128xf32> to vector<16x128xbf16>
    %c0_9 = arith.constant 0 : index
    %c0_10 = arith.constant 0 : index
    %15 = vector.load %arg5[%c0_9, %c0_10] : memref<128x64xbf16, #tpu.memory_space<vmem>>, vector<128x64xbf16>
    %cst_11 = arith.constant dense<0.000000e+00> : vector<16x64xf32>
    %16 = tpu.matmul %14, %15, %cst_11 {dimension_numbers = #tpu.dot_dimension_numbers<[1], [0], [0], [1], [0, 0, 1, 1], [], []>} : vector<16x128xbf16>, vector<128x64xbf16>, vector<16x64xf32> -> vector<16x64xf32>
    %c0_12 = arith.constant 0 : index
    %c0_13 = arith.constant 0 : index
    %17 = vector.load %arg6[%c0_12, %c0_13] : memref<1x64xf32, #tpu.memory_space<vmem>>, vector<1x64xf32>
    %18 = vector.broadcast %17 : vector<1x64xf32> to vector<16x64xf32>
    %19 = arith.addf %16, %18 : vector<16x64xf32>
    %cst_14 = arith.constant 0.000000e+00 : f32
    %20 = vector.broadcast %cst_14 : f32 to vector<16x64xf32>
    %21 = arith.cmpf oge, %19, %20 : vector<16x64xf32>
    %cst_15 = arith.constant 0.00999999977 : f32
    %22 = vector.broadcast %cst_15 : f32 to vector<16x64xf32>
    %23 = arith.mulf %22, %19 : vector<16x64xf32>
    %24 = arith.select %21, %19, %23 : vector<16x64xi1>, vector<16x64xf32>
    %c0_16 = arith.constant 0 : index
    %c0_17 = arith.constant 0 : index
    %25 = vector.load %arg7[%c0_16, %c0_17] : memref<3x64xbf16, #tpu.memory_space<vmem>>, vector<3x64xbf16>
    %26 = arith.truncf %24 : vector<16x64xf32> to vector<16x64xbf16>
    %cst_18 = arith.constant dense<0.000000e+00> : vector<3x16xf32>
    %27 = tpu.matmul %25, %26, %cst_18 {dimension_numbers = #tpu.dot_dimension_numbers<[1], [1], [0], [0], [0, 0, 1, 0], [], []>} : vector<3x64xbf16>, vector<16x64xbf16>, vector<3x16xf32> -> vector<3x16xf32>
    %c0_19 = arith.constant 0 : index
    %c0_20 = arith.constant 0 : index
    %28 = vector.load %arg8[%c0_19, %c0_20] : memref<3x1xf32, #tpu.memory_space<vmem>>, vector<3x1xf32>
    %29 = vector.broadcast %28 : vector<3x1xf32> to vector<3x16xf32>
    %30 = arith.addf %27, %29 : vector<3x16xf32>
    %31 = math.tanh %30 : vector<3x16xf32>
    %c0_21 = arith.constant 0 : index
    %c0_22 = arith.constant 0 : index
    %c0_23 = arith.constant 0 : index
    %32 = vector.load %arg9[%c0_21, %c0_22, %c0_23] : memref<1x3x16xf32, #tpu.memory_space<vmem>>, vector<1x3x16xf32>
    %33 = vector.shape_cast %32 : vector<1x3x16xf32> to vector<3x16xf32>
    %34 = vector.shape_cast %31 : vector<3x16xf32> to vector<1x3x16xf32>
    tpu.vector_store %arg9[%c0_21, %c0_22, %c0_23], %34 {strides = array<i32>} : memref<1x3x16xf32, #tpu.memory_space<vmem>>, vector<1x3x16xf32>,
    return
  }
  func.func @transform_0(%arg0: i32, %arg1: i32) -> (i32, i32, i32) {
    %c0_i32 = arith.constant 0 : i32
    %c0_i32_0 = arith.constant 0 : i32
    return %arg0, %arg1, %c0_i32 : i32, i32, i32
  }
  func.func @transform_1(%arg0: i32, %arg1: i32) -> (i32, i32, i32) {
    %c0_i32 = arith.constant 0 : i32
    %c0_i32_0 = arith.constant 0 : i32
    %c0_i32_1 = arith.constant 0 : i32
    return %arg0, %c0_i32, %c0_i32_0 : i32, i32, i32
  }
  func.func @transform_2(%arg0: i32, %arg1: i32) -> (i32, i32) {
    %c0_i32 = arith.constant 0 : i32
    %c0_i32_0 = arith.constant 0 : i32
    %c0_i32_1 = arith.constant 0 : i32
    return %c0_i32, %c0_i32_0 : i32, i32
  }
  func.func @transform_3(%arg0: i32, %arg1: i32) -> (i32, i32) {
    %c0_i32 = arith.constant 0 : i32
    %c0_i32_0 = arith.constant 0 : i32
    %c0_i32_1 = arith.constant 0 : i32
    return %c0_i32, %c0_i32_0 : i32, i32
  }
  func.func @transform_4(%arg0: i32, %arg1: i32) -> (i32, i32) {
    %c0_i32 = arith.constant 0 : i32
    %c0_i32_0 = arith.constant 0 : i32
    %c0_i32_1 = arith.constant 0 : i32
    return %c0_i32, %c0_i32_0 : i32, i32
  }
  func.func @transform_5(%arg0: i32, %arg1: i32) -> (i32, i32) {
    %c0_i32 = arith.constant 0 : i32
    %c0_i32_0 = arith.constant 0 : i32
    %c0_i32_1 = arith.constant 0 : i32
    return %c0_i32, %c0_i32_0 : i32, i32
  }
  func.func @transform_6(%arg0: i32, %arg1: i32) -> (i32, i32) {
    %c0_i32 = arith.constant 0 : i32
    %c0_i32_0 = arith.constant 0 : i32
    %c0_i32_1 = arith.constant 0 : i32
    return %c0_i32, %c0_i32_0 : i32, i32
  }
  func.func @transform_7(%arg0: i32, %arg1: i32) -> (i32, i32, i32) {
    %c0_i32 = arith.constant 0 : i32
    %c0_i32_0 = arith.constant 0 : i32
    return %arg0, %c0_i32, %arg1 : i32, i32, i32
  }
}

</mosaic_0001>

<llo_original>
// kernel: generator_forward.7
$region0: #{generator_forward.7}
  #allocation0 [shape = 'u32[]', space=smem, size = 0x4, offset = 0x4, fixed_abs, tag = 'smem constant byte address 0x4 - core index']
  #allocation1 [shape = 'u32[72,128]{1,0:T(1,128)}', space=vmem, size = 0x9000, scoped, tag = 'internal scratch']
  %s0 = inlined_call_operand.vmem [shape: f32[16,3], index: 0, kind: input, shape index: {}]
  %s1 = inlined_call_operand.vmem [shape: f32[3,64], index: 1, kind: input, shape index: {}]
  %s2 = inlined_call_operand.vmem [shape: f32[16,128], index: 2, kind: output, shape index: {}]
  %s3 = sld [smem:[#allocation0]]
  $region18: #{generator_forward.7} parent=0
    _
  %s5 = ssub.s32 1, %s3
  %s6 = scalar_select 0, %s5, %s3
  // Predicated region
  $region2: #{generator_forward.7} parent=0 // pred_check
    _
  $region3: #{generator_forward.7} parent=0 // pred_check_branch
    %8 = sbr.rel (0) target = $region5
  $region4: #{generator_forward.7} parent=0 // pred_region
    _
  $region5: #{generator_forward.7} parent=0 // pred_fallthru
    _
  // Predicated region
  $region6: #{generator_forward.7} parent=0 // pred_check
    _
  $region7: #{generator_forward.7} parent=0 // pred_check_branch
    %10 = sbr.rel (0) target = $region9
  $region8: #{generator_forward.7} parent=0 // pred_region
    _
  $region9: #{generator_forward.7} parent=0 // pred_fallthru
    _
  %v11 = vld [vmem:[%s0] sm:$0xff]
  %v12 = vld [vmem:[%s0 + $0x8] sm:$0xff]
  %v13 = vld [vmem:[%s1] sm:$0x7]
  %15 = vset.pattern.permute.xlu0 0
  %16 = vperm.xlu0 %15, %v11
  %v17 = vpop.permute.xlu0 %16
  %20 = vset.pattern.permute.xlu0 0
  %21 = vperm.xlu0 %20, %v12
  %v22 = vpop.permute.xlu0 %21
  %v24 = vperm.slane %v13, 0
  %v25 = vmul.f32 %v17, %v24
  %v26 = vmul.f32 %v22, %v24
  %27 = vset.pattern.permute.xlu0 1
  %28 = vperm.xlu0 %27, %v11
  %v29 = vpop.permute.xlu0 %28
  %31 = vset.pattern.permute.xlu0 1
  %32 = vperm.xlu0 %31, %v12
  %v33 = vpop.permute.xlu0 %32
  %v35 = vperm.slane %v13, 1
  %v36 = vmul.f32 %v29, %v35
  %v37 = vmul.f32 %v33, %v35
  %v38 = vadd.f32 %v25, %v36
  %v39 = vadd.f32 %v26, %v37
  %40 = vset.pattern.permute.xlu0 2
  %41 = vperm.xlu0 %40, %v11
  %v42 = vpop.permute.xlu0 %41
  %44 = vset.pattern.permute.xlu0 2
  %45 = vperm.xlu0 %44, %v12
  %v46 = vpop.permute.xlu0 %45
  %v48 = vperm.slane %v13, 2
  %v49 = vmul.f32 %v42, %v48
  %v50 = vmul.f32 %v46, %v48
  %v51 = vadd.f32 %v38, %v49
  %v52 = vadd.f32 %v39, %v50
  %v53 = vand.u32 2147483647, %v51
  %vm54 = vcmp.le.f32.partialorder %v53, 0.7853982
  %vm55 = vcmp.lt.s32.totalorder %v51, 0
  %v56 = vand.u32 %v51, 2139095040
  %v57 = vshrl.u32 %v56, 23
  %v58 = vsub.s32 %v57, 127
  %v59 = vand.u32 2147483647, %v51
  %v60 = vand.u32 %v59, 8388607
  %v61 = vor.u32 %v60, 8388608
  %v62 = vsub.s32 0, %v61
  %v63 = vadd.s32 %v58, 1
  %vm64 = vcmp.gt.s32.totalorder %v63, 0
  %v65 = vsel %vm64, %v63, 0
  %v66 = vshrl.u32 %v65, 5
  %v67 = vand.u32 %v65, 31
  %v68 = vsub.s32 32, %v67
  %v69 = vshrl.u32 683565275, %v68
  %v70 = vshll.u32 683565275, %v67
  %v71 = vshrl.u32 2475754826, %v68
  %v72 = vor.u32 %v70, %v71
  %v73 = vshll.u32 2475754826, %v67
  %v74 = vshrl.u32 2131351028, %v68
  %v75 = vor.u32 %v73, %v74
  %v76 = vshll.u32 2131351028, %v67
  %v77 = vshrl.u32 2102212464, %v68
  %v78 = vor.u32 %v76, %v77
  %v79 = vshll.u32 2102212464, %v67
  %v80 = vshrl.u32 920167782, %v68
  %v81 = vor.u32 %v79, %v80
  %v82 = vshll.u32 920167782, %v67
  %v83 = vshrl.u32 1326507024, %v68
  %v84 = vor.u32 %v82, %v83
  %vm85 = vcmp.lt.s32.totalorder %v66, 1
  %vm86 = vcmp.lt.s32.totalorder %v66, 2
  %vm87 = vcmp.lt.s32.totalorder %v66, 3
  %vm88 = vcmp.lt.s32.totalorder %v66, 4
  %v89 = vsel %vm85, %v69, %v72
  %v90 = vsel %vm88, %v78, 2102212464
  %v91 = vsel %vm87, %v75, %v90
  %v92 = vsel %vm86, %v89, %v91
  %v93 = vsel %vm85, %v72, %v75
  %v94 = vsel %vm88, %v81, 920167782
  %v95 = vsel %vm87, %v78, %v94
  %v96 = vsel %vm86, %v93, %v95
  %v97 = vsel %vm85, %v75, %v78
  %v98 = vsel %vm88, %v84, 1326507024
  %v99 = vsel %vm87, %v81, %v98
  %v100 = vsel %vm86, %v97, %v99
  %v101 = vshll.u32 %v61, 8
  %v102 = vand.u32 %v101, 65535
  %v103 = vshrl.u32 %v101, 16
  %v104 = vand.u32 %v100, 65535
  %v105 = vshrl.u32 %v100, 16
  %v106 = vmul.u32 %v102, %v104
  %v107 = vmul.u32 %v102, %v105
  %v108 = vmul.u32 %v103, %v104
  %v109 = vmul.u32 %v103, %v105
  %v110 = vshll.u32 %v107, 16
  %v111 = vshrl.u32 %v107, 16
  %v112 = vshll.u32 %v108, 16
  %v113 = vshrl.u32 %v108, 16
  %vm114 = vc.u32 %v106, %v110
  %v115 = vsel %vm114, 1, 0
  %v116 = vadd.s32 %v106, %v110
  %v117 = vadd.s32 %v109, %v115
  %vm118 = vc.u32 %v116, %v112
  %v119 = vsel %vm118, 1, 0
  %v120 = vadd.s32 %v116, %v112
  %v121 = vadd.s32 %v117, %v119
  %v122 = vadd.s32 %v121, %v111
  %v123 = vadd.s32 %v122, %v113
  %v124 = vand.u32 %v101, 65535
  %v125 = vshrl.u32 %v101, 16
  %v126 = vand.u32 %v96, 65535
  %v127 = vshrl.u32 %v96, 16
  %v128 = vmul.u32 %v124, %v126
  %v129 = vmul.u32 %v124, %v127
  %v130 = vmul.u32 %v125, %v126
  %v131 = vmul.u32 %v125, %v127
  %v132 = vshll.u32 %v129, 16
  %v133 = vshrl.u32 %v129, 16
  %v134 = vshll.u32 %v130, 16
  %v135 = vshrl.u32 %v130, 16
  %vm136 = vc.u32 %v128, %v132
  %v137 = vsel %vm136, 1, 0
  %v138 = vadd.s32 %v128, %v132
  %v139 = vadd.s32 %v131, %v137
  %vm140 = vc.u32 %v138, %v134
  %v141 = vsel %vm140, 1, 0
  %v142 = vadd.s32 %v138, %v134
  %v143 = vadd.s32 %v139, %v141
  %v144 = vadd.s32 %v143, %v133
  %v145 = vadd.s32 %v144, %v135
  %v146 = vmul.u32 %v101, %v92
  %v147 = vadd.s32 %v123, %v142
  %vm148 = vc.u32 %v123, %v142
  %v149 = vadd.s32 %v145, 1
  %v150 = vsel %vm148, %v149, %v145
  %v151 = vadd.s32 %v146, %v150
  %v152 = vadd.s32 %v151, 536870912
  %v153 = vshrl.u32 %v152, 30
  %v154 = vshll.u32 %v153, 30
  %v155 = vsub.s32 %v151, %v154
  %vm156 = vcmp.lt.s32.totalorder %v155, 0
  %v157 = vsub.s32 0, %v155
  %v158 = vsel %vm156, %v157, %v155
  %v159 = vclz %v158
  %v160 = vsub.s32 %v159, 2
  %vm161 = vcmp.gt.s32.totalorder 0, %v160
  %v162 = vsel %vm161, 0, %v160
  %v163 = vsub.s32 32, %v162
  %v164 = vshll.u32 %v155, %v162
  %v165 = vshrl.u32 %v147, %v163
  %v166 = vor.u32 %v164, %v165
  %v167 = vsub.s32 4294967266, %v162
  %v168 = vadd.s32 %v167, 127
  %v169 = vshll.u32 %v168, 23
  %v170 = vor.u32 4788187, %v169
  %v171 = vand.u32 2147483647, %v170
  %v173 = vcvt.s32.f32 %v166
  %v174 = vmul.f32 %v173, %v171
  %v175 = vxor.u32 %v174, 2147483648
  %v176 = vsel %vm55, %v175, %v174
  %v177 = vsub.s32 4, %v153
  %v178 = vsel %vm55, %v177, %v153
  %v179 = vsel %vm54, %v51, %v176
  %v180 = vsel %vm54, 0, %v178
  %v181 = vmul.f32 %v179, %v179
  %v182 = vmul.f32 %v181, -0.001358992
  %v183 = vadd.f32 %v182, 0.041655596
  %v184 = vmul.f32 %v181, %v183
  %v185 = vadd.f32 %v184, -0.4999988
  %v186 = vmul.f32 %v181, %v185
  %v187 = vadd.f32 1.0, %v186
  %v188 = vmul.f32 %v179, %v179
  %v189 = vmul.f32 %v188, -0.00019511016
  %v190 = vadd.f32 %v189, 0.008332121
  %v191 = vmul.f32 %v188, %v190
  %v192 = vadd.f32 %v191, -0.16666654
  %v193 = vmul.f32 %v188, %v192
  %v194 = vadd.f32 %v193, 1.0
  %v195 = vmul.f32 %v194, %v179
  %vm196 = vweird.f32 %v51
  %v197 = vand.u32 %v180, 3
  %vm198 = vcmp.lt.s32.totalorder %v197, 2
  %vm199 = vcmp.eq.s32.totalorder %v197, 0
  %v200 = vxor.u32 %v195, 2147483648
  %v201 = vsel %vm199, %v187, %v200
  %vm202 = vcmp.eq.s32.totalorder %v197, 2
  %v203 = vxor.u32 %v187, 2147483648
  %v204 = vsel %vm202, %v203, %v195
  %v205 = vsel %vm198, %v201, %v204
  %v206 = vsel %vm196, nan, %v205
  %v207 = vand.u32 2147483647, %v52
  %vm208 = vcmp.le.f32.partialorder %v207, 0.7853982
  %vm209 = vcmp.lt.s32.totalorder %v52, 0
  %v210 = vand.u32 %v52, 2139095040
  %v211 = vshrl.u32 %v210, 23
  %v212 = vsub.s32 %v211, 127
  %v213 = vand.u32 2147483647, %v52
  %v214 = vand.u32 %v213, 8388607
  %v215 = vor.u32 %v214, 8388608
  %v216 = vsub.s32 0, %v215
  %v217 = vadd.s32 %v212, 1
  %vm218 = vcmp.gt.s32.totalorder %v217, 0
  %v219 = vsel %vm218, %v217, 0
  %v220 = vshrl.u32 %v219, 5
  %v221 = vand.u32 %v219, 31
  %v222 = vsub.s32 32, %v221
  %v223 = vshrl.u32 683565275, %v222
  %v224 = vshll.u32 683565275, %v221
  %v225 = vshrl.u32 2475754826, %v222
  %v226 = vor.u32 %v224, %v225
  %v227 = vshll.u32 2475754826, %v221
  %v228 = vshrl.u32 2131351028, %v222
  %v229 = vor.u32 %v227, %v228
  %v230 = vshll.u32 2131351028, %v221
  %v231 = vshrl.u32 2102212464, %v222
  %v232 = vor.u32 %v230, %v231
  %v233 = vshll.u32 2102212464, %v221
  %v234 = vshrl.u32 920167782, %v222
  %v235 = vor.u32 %v233, %v234
  %v236 = vshll.u32 920167782, %v221
  %v237 = vshrl.u32 1326507024, %v222
  %v238 = vor.u32 %v236, %v237
  %vm239 = vcmp.lt.s32.totalorder %v220, 1
  %vm240 = vcmp.lt.s32.totalorder %v220, 2
  %vm241 = vcmp.lt.s32.totalorder %v220, 3
  %vm242 = vcmp.lt.s32.totalorder %v220, 4
  %v243 = vsel %vm239, %v223, %v226
  %v244 = vsel %vm242, %v232, 2102212464
  %v245 = vsel %vm241, %v229, %v244
  %v246 = vsel %vm240, %v243, %v245
  %v247 = vsel %vm239, %v226, %v229
  %v248 = vsel %vm242, %v235, 920167782
  %v249 = vsel %vm241, %v232, %v248
  %v250 = vsel %vm240, %v247, %v249
  %v251 = vsel %vm239, %v229, %v232
  %v252 = vsel %vm242, %v238, 1326507024
  %v253 = vsel %vm241, %v235, %v252
  %v254 = vsel %vm240, %v251, %v253
  %v255 = vshll.u32 %v215, 8
  %v256 = vand.u32 %v255, 65535
  %v257 = vshrl.u32 %v255, 16
  %v258 = vand.u32 %v254, 65535
  %v259 = vshrl.u32 %v254, 16
  %v260 = vmul.u32 %v256, %v258
  %v261 = vmul.u32 %v256, %v259
  %v262 = vmul.u32 %v257, %v258
  %v263 = vmul.u32 %v257, %v259
  %v264 = vshll.u32 %v261, 16
  %v265 = vshrl.u32 %v261, 16
  %v266 = vshll.u32 %v262, 16
  %v267 = vshrl.u32 %v262, 16
  %vm268 = vc.u32 %v260, %v264
  %v269 = vsel %vm268, 1, 0
  %v270 = vadd.s32 %v260, %v264
  %v271 = vadd.s32 %v263, %v269
  %vm272 = vc.u32 %v270, %v266
  %v273 = vsel %vm272, 1, 0
  %v274 = vadd.s32 %v270, %v266
  %v275 = vadd.s32 %v271, %v273
  %v276 = vadd.s32 %v275, %v265
  %v277 = vadd.s32 %v276, %v267
  %v278 = vand.u32 %v255, 65535
  %v279 = vshrl.u32 %v255, 16
  %v280 = vand.u32 %v250, 65535
  %v281 = vshrl.u32 %v250, 16
  %v282 = vmul.u32 %v278, %v280
  %v283 = vmul.u32 %v278, %v281
  %v284 = vmul.u32 %v279, %v280
  %v285 = vmul.u32 %v279, %v281
  %v286 = vshll.u32 %v283, 16
  %v287 = vshrl.u32 %v283, 16
  %v288 = vshll.u32 %v284, 16
  %v289 = vshrl.u32 %v284, 16
  %vm290 = vc.u32 %v282, %v286
  %v291 = vsel %vm290, 1, 0
  %v292 = vadd.s32 %v282, %v286
  %v293 = vadd.s32 %v285, %v291
  %vm294 = vc.u32 %v292, %v288
  %v295 = vsel %vm294, 1, 0
  %v296 = vadd.s32 %v292, %v288
  %v297 = vadd.s32 %v293, %v295
  %v298 = vadd.s32 %v297, %v287
  %v299 = vadd.s32 %v298, %v289
  %v300 = vmul.u32 %v255, %v246
  %v301 = vadd.s32 %v277, %v296
  %vm302 = vc.u32 %v277, %v296
  %v303 = vadd.s32 %v299, 1
  %v304 = vsel %vm302, %v303, %v299
  %v305 = vadd.s32 %v300, %v304
  %v306 = vadd.s32 %v305, 536870912
  %v307 = vshrl.u32 %v306, 30
  %v308 = vshll.u32 %v307, 30
  %v309 = vsub.s32 %v305, %v308
  %vm310 = vcmp.lt.s32.totalorder %v309, 0
  %v311 = vsub.s32 0, %v309
  %v312 = vsel %vm310, %v311, %v309
  %v313 = vclz %v312
  %v314 = vsub.s32 %v313, 2
  %vm315 = vcmp.gt.s32.totalorder 0, %v314
  %v316 = vsel %vm315, 0, %v314
  %v317 = vsub.s32 32, %v316
  %v318 = vshll.u32 %v309, %v316
  %v319 = vshrl.u32 %v301, %v317
  %v320 = vor.u32 %v318, %v319
  %v321 = vsub.s32 4294967266, %v316
  %v322 = vadd.s32 %v321, 127
  %v323 = vshll.u32 %v322, 23
  %v324 = vor.u32 4788187, %v323
  %v325 = vand.u32 2147483647, %v324
  %v327 = vcvt.s32.f32 %v320
  %v328 = vmul.f32 %v327, %v325
  %v329 = vxor.u32 %v328, 2147483648
  %v330 = vsel %vm209, %v329, %v328
  %v331 = vsub.s32 4, %v307
  %v332 = vsel %vm209, %v331, %v307
  %v333 = vsel %vm208, %v52, %v330
  %v334 = vsel %vm208, 0, %v332
  %v335 = vmul.f32 %v333, %v333
  %v336 = vmul.f32 %v335, -0.001358992
  %v337 = vadd.f32 %v336, 0.041655596
  %v338 = vmul.f32 %v335, %v337
  %v339 = vadd.f32 %v338, -0.4999988
  %v340 = vmul.f32 %v335, %v339
  %v341 = vadd.f32 1.0, %v340
  %v342 = vmul.f32 %v333, %v333
  %v343 = vmul.f32 %v342, -0.00019511016
  %v344 = vadd.f32 %v343, 0.008332121
  %v345 = vmul.f32 %v342, %v344
  %v346 = vadd.f32 %v345, -0.16666654
  %v347 = vmul.f32 %v342, %v346
  %v348 = vadd.f32 %v347, 1.0
  %v349 = vmul.f32 %v348, %v333
  %vm350 = vweird.f32 %v52
  %v351 = vand.u32 %v334, 3
  %vm352 = vcmp.lt.s32.totalorder %v351, 2
  %vm353 = vcmp.eq.s32.totalorder %v351, 0
  %v354 = vxor.u32 %v349, 2147483648
  %v355 = vsel %vm353, %v341, %v354
  %vm356 = vcmp.eq.s32.totalorder %v351, 2
  %v357 = vxor.u32 %v341, 2147483648
  %v358 = vsel %vm356, %v357, %v349
  %v359 = vsel %vm352, %v355, %v358
  %v360 = vsel %vm350, nan, %v359
  %vm361 = vcmask 523264
  %362 = vst.msk [vmem:[%s2] sm:$0xff] %vm361, %v206
  %363 = vst.msk [vmem:[%s2 + $0x8] sm:$0xff] %vm361, %v360
  %v364 = vand.u32 2147483647, %v51
  %vm365 = vcmp.le.f32.partialorder %v364, 0.7853982
  %vm366 = vcmp.lt.s32.totalorder %v51, 0
  %v367 = vand.u32 %v51, 2139095040
  %v368 = vshrl.u32 %v367, 23
  %v369 = vsub.s32 %v368, 127
  %v370 = vand.u32 2147483647, %v51
  %v371 = vand.u32 %v370, 8388607
  %v372 = vor.u32 %v371, 8388608
  %v373 = vsub.s32 0, %v372
  %v374 = vadd.s32 %v369, 1
  %vm375 = vcmp.gt.s32.totalorder %v374, 0
  %v376 = vsel %vm375, %v374, 0
  %v377 = vshrl.u32 %v376, 5
  %v378 = vand.u32 %v376, 31
  %v379 = vsub.s32 32, %v378
  %v380 = vshrl.u32 683565275, %v379
  %v381 = vshll.u32 683565275, %v378
  %v382 = vshrl.u32 2475754826, %v379
  %v383 = vor.u32 %v381, %v382
  %v384 = vshll.u32 2475754826, %v378
  %v385 = vshrl.u32 2131351028, %v379
  %v386 = vor.u32 %v384, %v385
  %v387 = vshll.u32 2131351028, %v378
  %v388 = vshrl.u32 2102212464, %v379
  %v389 = vor.u32 %v387, %v388
  %v390 = vshll.u32 2102212464, %v378
  %v391 = vshrl.u32 920167782, %v379
  %v392 = vor.u32 %v390, %v391
  %v393 = vshll.u32 920167782, %v378
  %v394 = vshrl.u32 1326507024, %v379
  %v395 = vor.u32 %v393, %v394
  %vm396 = vcmp.lt.s32.totalorder %v377, 1
  %vm397 = vcmp.lt.s32.totalorder %v377, 2
  %vm398 = vcmp.lt.s32.totalorder %v377, 3
  %vm399 = vcmp.lt.s32.totalorder %v377, 4
  %v400 = vsel %vm396, %v380, %v383
  %v401 = vsel %vm399, %v389, 2102212464
  %v402 = vsel %vm398, %v386, %v401
  %v403 = vsel %vm397, %v400, %v402
  %v404 = vsel %vm396, %v383, %v386
  %v405 = vsel %vm399, %v392, 920167782
  %v406 = vsel %vm398, %v389, %v405
  %v407 = vsel %vm397, %v404, %v406
  %v408 = vsel %vm396, %v386, %v389
  %v409 = vsel %vm399, %v395, 1326507024
  %v410 = vsel %vm398, %v392, %v409
  %v411 = vsel %vm397, %v408, %v410
  %v412 = vshll.u32 %v372, 8
  %v413 = vand.u32 %v412, 65535
  %v414 = vshrl.u32 %v412, 16
  %v415 = vand.u32 %v411, 65535
  %v416 = vshrl.u32 %v411, 16
  %v417 = vmul.u32 %v413, %v415
  %v418 = vmul.u32 %v413, %v416
  %v419 = vmul.u32 %v414, %v415
  %v420 = vmul.u32 %v414, %v416
  %v421 = vshll.u32 %v418, 16
  %v422 = vshrl.u32 %v418, 16
  %v423 = vshll.u32 %v419, 16
  %v424 = vshrl.u32 %v419, 16
  %vm425 = vc.u32 %v417, %v421
  %v426 = vsel %vm425, 1, 0
  %v427 = vadd.s32 %v417, %v421
  %v428 = vadd.s32 %v420, %v426
  %vm429 = vc.u32 %v427, %v423
  %v430 = vsel %vm429, 1, 0
  %v431 = vadd.s32 %v427, %v423
  %v432 = vadd.s32 %v428, %v430
  %v433 = vadd.s32 %v432, %v422
  %v434 = vadd.s32 %v433, %v424
  %v435 = vand.u32 %v412, 65535
  %v436 = vshrl.u32 %v412, 16
  %v437 = vand.u32 %v407, 65535
  %v438 = vshrl.u32 %v407, 16
  %v439 = vmul.u32 %v435, %v437
  %v440 = vmul.u32 %v435, %v438
  %v441 = vmul.u32 %v436, %v437
  %v442 = vmul.u32 %v436, %v438
  %v443 = vshll.u32 %v440, 16
  %v444 = vshrl.u32 %v440, 16
  %v445 = vshll.u32 %v441, 16
  %v446 = vshrl.u32 %v441, 16
  %vm447 = vc.u32 %v439, %v443
  %v448 = vsel %vm447, 1, 0
  %v449 = vadd.s32 %v439, %v443
  %v450 = vadd.s32 %v442, %v448
  %vm451 = vc.u32 %v449, %v445
  %v452 = vsel %vm451, 1, 0
  %v453 = vadd.s32 %v449, %v445
  %v454 = vadd.s32 %v450, %v452
  %v455 = vadd.s32 %v454, %v444
  %v456 = vadd.s32 %v455, %v446
  %v457 = vmul.u32 %v412, %v403
  %v458 = vadd.s32 %v434, %v453
  %vm459 = vc.u32 %v434, %v453
  %v460 = vadd.s32 %v456, 1
  %v461 = vsel %vm459, %v460, %v456
  %v462 = vadd.s32 %v457, %v461
  %v463 = vadd.s32 %v462, 536870912
  %v464 = vshrl.u32 %v463, 30
  %v465 = vshll.u32 %v464, 30
  %v466 = vsub.s32 %v462, %v465
  %vm467 = vcmp.lt.s32.totalorder %v466, 0
  %v468 = vsub.s32 0, %v466
  %v469 = vsel %vm467, %v468, %v466
  %v470 = vclz %v469
  %v471 = vsub.s32 %v470, 2
  %vm472 = vcmp.gt.s32.totalorder 0, %v471
  %v473 = vsel %vm472, 0, %v471
  %v474 = vsub.s32 32, %v473
  %v475 = vshll.u32 %v466, %v473
  %v476 = vshrl.u32 %v458, %v474
  %v477 = vor.u32 %v475, %v476
  %v478 = vsub.s32 4294967266, %v473
  %v479 = vadd.s32 %v478, 127
  %v480 = vshll.u32 %v479, 23
  %v481 = vor.u32 4788187, %v480
  %v482 = vand.u32 2147483647, %v481
  %v484 = vcvt.s32.f32 %v477
  %v485 = vmul.f32 %v484, %v482
  %v486 = vxor.u32 %v485, 2147483648
  %v487 = vsel %vm366, %v486, %v485
  %v488 = vsub.s32 4, %v464
  %v489 = vsel %vm366, %v488, %v464
  %v490 = vsel %vm365, %v51, %v487
  %v491 = vsel %vm365, 0, %v489
  %v492 = vmul.f32 %v490, %v490
  %v493 = vmul.f32 %v492, -0.001358992
  %v494 = vadd.f32 %v493, 0.041655596
  %v495 = vmul.f32 %v492, %v494
  %v496 = vadd.f32 %v495, -0.4999988
  %v497 = vmul.f32 %v492, %v496
  %v498 = vadd.f32 1.0, %v497
  %v499 = vmul.f32 %v490, %v490
  %v500 = vmul.f32 %v499, -0.00019511016
  %v501 = vadd.f32 %v500, 0.008332121
  %v502 = vmul.f32 %v499, %v501
  %v503 = vadd.f32 %v502, -0.16666654
  %v504 = vmul.f32 %v499, %v503
  %v505 = vadd.f32 %v504, 1.0
  %v506 = vmul.f32 %v505, %v490
  %vm507 = vweird.f32 %v51
  %v508 = vadd.s32 %v491, 3
  %v509 = vand.u32 %v508, 3
  %vm510 = vcmp.lt.s32.totalorder %v509, 2
  %vm511 = vcmp.eq.s32.totalorder %v509, 0
  %v512 = vxor.u32 %v506, 2147483648
  %v513 = vsel %vm511, %v498, %v512
  %vm514 = vcmp.eq.s32.totalorder %v509, 2
  %v515 = vxor.u32 %v498, 2147483648
  %v516 = vsel %vm514, %v515, %v506
  %v517 = vsel %vm510, %v513, %v516
  %v518 = vsel %vm507, nan, %v517
  %v519 = vand.u32 2147483647, %v52
  %vm520 = vcmp.le.f32.partialorder %v519, 0.7853982
  %vm521 = vcmp.lt.s32.totalorder %v52, 0
  %v522 = vand.u32 %v52, 2139095040
  %v523 = vshrl.u32 %v522, 23
  %v524 = vsub.s32 %v523, 127
  %v525 = vand.u32 2147483647, %v52
  %v526 = vand.u32 %v525, 8388607
  %v527 = vor.u32 %v526, 8388608
  %v528 = vsub.s32 0, %v527
  %v529 = vadd.s32 %v524, 1
  %vm530 = vcmp.gt.s32.totalorder %v529, 0
  %v531 = vsel %vm530, %v529, 0
  %v532 = vshrl.u32 %v531, 5
  %v533 = vand.u32 %v531, 31
  %v534 = vsub.s32 32, %v533
  %v535 = vshrl.u32 683565275, %v534
  %v536 = vshll.u32 683565275, %v533
  %v537 = vshrl.u32 2475754826, %v534
  %v538 = vor.u32 %v536, %v537
  %v539 = vshll.u32 2475754826, %v533
  %v540 = vshrl.u32 2131351028, %v534
  %v541 = vor.u32 %v539, %v540
  %v542 = vshll.u32 2131351028, %v533
  %v543 = vshrl.u32 2102212464, %v534
  %v544 = vor.u32 %v542, %v543
  %v545 = vshll.u32 2102212464, %v533
  %v546 = vshrl.u32 920167782, %v534
  %v547 = vor.u32 %v545, %v546
  %v548 = vshll.u32 920167782, %v533
  %v549 = vshrl.u32 1326507024, %v534
  %v550 = vor.u32 %v548, %v549
  %vm551 = vcmp.lt.s32.totalorder %v532, 1
  %vm552 = vcmp.lt.s32.totalorder %v532, 2
  %vm553 = vcmp.lt.s32.totalorder %v532, 3
  %vm554 = vcmp.lt.s32.totalorder %v532, 4
  %v555 = vsel %vm551, %v535, %v538
  %v556 = vsel %vm554, %v544, 2102212464
  %v557 = vsel %vm553, %v541, %v556
  %v558 = vsel %vm552, %v555, %v557
  %v559 = vsel %vm551, %v538, %v541
  %v560 = vsel %vm554, %v547, 920167782
  %v561 = vsel %vm553, %v544, %v560
  %v562 = vsel %vm552, %v559, %v561
  %v563 = vsel %vm551, %v541, %v544
  %v564 = vsel %vm554, %v550, 1326507024
  %v565 = vsel %vm553, %v547, %v564
  %v566 = vsel %vm552, %v563, %v565
  %v567 = vshll.u32 %v527, 8
  %v568 = vand.u32 %v567, 65535
  %v569 = vshrl.u32 %v567, 16
  %v570 = vand.u32 %v566, 65535
  %v571 = vshrl.u32 %v566, 16
  %v572 = vmul.u32 %v568, %v570
  %v573 = vmul.u32 %v568, %v571
  %v574 = vmul.u32 %v569, %v570
  %v575 = vmul.u32 %v569, %v571
  %v576 = vshll.u32 %v573, 16
  %v577 = vshrl.u32 %v573, 16
  %v578 = vshll.u32 %v574, 16
  %v579 = vshrl.u32 %v574, 16
  %vm580 = vc.u32 %v572, %v576
  %v581 = vsel %vm580, 1, 0
  %v582 = vadd.s32 %v572, %v576
  %v583 = vadd.s32 %v575, %v581
  %vm584 = vc.u32 %v582, %v578
  %v585 = vsel %vm584, 1, 0
  %v586 = vadd.s32 %v582, %v578
  %v587 = vadd.s32 %v583, %v585
  %v588 = vadd.s32 %v587, %v577
  %v589 = vadd.s32 %v588, %v579
  %v590 = vand.u32 %v567, 65535
  %v591 = vshrl.u32 %v567, 16
  %v592 = vand.u32 %v562, 65535
  %v593 = vshrl.u32 %v562, 16
  %v594 = vmul.u32 %v590, %v592
  %v595 = vmul.u32 %v590, %v593
  %v596 = vmul.u32 %v591, %v592
  %v597 = vmul.u32 %v591, %v593
  %v598 = vshll.u32 %v595, 16
  %v599 = vshrl.u32 %v595, 16
  %v600 = vshll.u32 %v596, 16
  %v601 = vshrl.u32 %v596, 16
  %vm602 = vc.u32 %v594, %v598
  %v603 = vsel %vm602, 1, 0
  %v604 = vadd.s32 %v594, %v598
  %v605 = vadd.s32 %v597, %v603
  %vm606 = vc.u32 %v604, %v600
  %v607 = vsel %vm606, 1, 0
  %v608 = vadd.s32 %v604, %v600
  %v609 = vadd.s32 %v605, %v607
  %v610 = vadd.s32 %v609, %v599
  %v611 = vadd.s32 %v610, %v601
  %v612 = vmul.u32 %v567, %v558
  %v613 = vadd.s32 %v589, %v608
  %vm614 = vc.u32 %v589, %v608
  %v615 = vadd.s32 %v611, 1
  %v616 = vsel %vm614, %v615, %v611
  %v617 = vadd.s32 %v612, %v616
  %v618 = vadd.s32 %v617, 536870912
  %v619 = vshrl.u32 %v618, 30
  %v620 = vshll.u32 %v619, 30
  %v621 = vsub.s32 %v617, %v620
  %vm622 = vcmp.lt.s32.totalorder %v621, 0
  %v623 = vsub.s32 0, %v621
  %v624 = vsel %vm622, %v623, %v621
  %v625 = vclz %v624
  %v626 = vsub.s32 %v625, 2
  %vm627 = vcmp.gt.s32.totalorder 0, %v626
  %v628 = vsel %vm627, 0, %v626
  %v629 = vsub.s32 32, %v628
  %v630 = vshll.u32 %v621, %v628
  %v631 = vshrl.u32 %v613, %v629
  %v632 = vor.u32 %v630, %v631
  %v633 = vsub.s32 4294967266, %v628
  %v634 = vadd.s32 %v633, 127
  %v635 = vshll.u32 %v634, 23
  %v636 = vor.u32 4788187, %v635
  %v637 = vand.u32 2147483647, %v636
  %v639 = vcvt.s32.f32 %v632
  %v640 = vmul.f32 %v639, %v637
  %v641 = vxor.u32 %v640, 2147483648
  %v642 = vsel %vm521, %v641, %v640
  %v643 = vsub.s32 4, %v619
  %v644 = vsel %vm521, %v643, %v619
  %v645 = vsel %vm520, %v52, %v642
  %v646 = vsel %vm520, 0, %v644
  %v647 = vmul.f32 %v645, %v645
  %v648 = vmul.f32 %v647, -0.001358992
  %v649 = vadd.f32 %v648, 0.041655596
  %v650 = vmul.f32 %v647, %v649
  %v651 = vadd.f32 %v650, -0.4999988
  %v652 = vmul.f32 %v647, %v651
  %v653 = vadd.f32 1.0, %v652
  %v654 = vmul.f32 %v645, %v645
  %v655 = vmul.f32 %v654, -0.00019511016
  %v656 = vadd.f32 %v655, 0.008332121
  %v657 = vmul.f32 %v654, %v656
  %v658 = vadd.f32 %v657, -0.16666654
  %v659 = vmul.f32 %v654, %v658
  %v660 = vadd.f32 %v659, 1.0
  %v661 = vmul.f32 %v660, %v645
  %vm662 = vweird.f32 %v52
  %v663 = vadd.s32 %v646, 3
  %v664 = vand.u32 %v663, 3
  %vm665 = vcmp.lt.s32.totalorder %v664, 2
  %vm666 = vcmp.eq.s32.totalorder %v664, 0
  %v667 = vxor.u32 %v661, 2147483648
  %v668 = vsel %vm666, %v653, %v667
  %vm669 = vcmp.eq.s32.totalorder %v664, 2
  %v670 = vxor.u32 %v653, 2147483648
  %v671 = vsel %vm669, %v670, %v661
  %v672 = vsel %vm665, %v668, %v671
  %v673 = vsel %vm662, nan, %v672
  %676 = vrot.lane.b32.xlu0 %v518, 64
  %v677 = vpop.permute.xlu0 %676
  %678 = vrot.lane.b32.xlu0 %v673, 64
  %v679 = vpop.permute.xlu0 %678
  %vm682 = vcmask 1048064
  %683 = vst.msk [vmem:[%s2] sm:$0xff] %vm682, %v677
  %684 = vst.msk [vmem:[%s2 + $0x8] sm:$0xff] %vm682, %v679
  // Predicated region
  $region10: #{generator_forward.7} parent=0 // pred_check
    _
  $region11: #{generator_forward.7} parent=0 // pred_check_branch
    %686 = sbr.rel (0) target = $region13
  $region12: #{generator_forward.7} parent=0 // pred_region
    _
  $region13: #{generator_forward.7} parent=0 // pred_fallthru
    _
  // Predicated region
  $region14: #{generator_forward.7} parent=0 // pred_check
    _
  $region15: #{generator_forward.7} parent=0 // pred_check_branch
    %688 = sbr.rel (0) target = $region17
  $region16: #{generator_forward.7} parent=0 // pred_region
    _
  $region17: #{generator_forward.7} parent=0 // pred_fallthru
    _

// kernel: generator_forward.9
$region0: #{generator_forward.9}
  #allocation0 [shape = 'u32[]', space=smem, size = 0x4, offset = 0x4, fixed_abs, tag = 'smem constant byte address 0x4 - core index']
  #allocation1 [shape = 'u32[72,128]{1,0:T(1,128)}', space=vmem, size = 0x9000, scoped, tag = 'internal scratch']
  %s0 = inlined_call_operand.vmem [shape: f32[16,3], index: 0, kind: input, shape index: {}]
  %s1 = inlined_call_operand.vmem [shape: f32[2,1,128], index: 1, kind: input, shape index: {}]
  %s2 = inlined_call_operand.vmem [shape: f32[3,128], index: 2, kind: input, shape index: {}]
  %s3 = inlined_call_operand.vmem [shape: bf16[128,128], index: 3, kind: input, shape index: {}]
  %s4 = inlined_call_operand.vmem [shape: f32[1,128], index: 4, kind: input, shape index: {}]
  %s5 = inlined_call_operand.vmem [shape: bf16[2,16,128], index: 5, kind: output, shape index: {}]
  %s6 = sld [smem:[#allocation0]]
  $region53: #{generator_forward.9} parent=0
    _
  %s8 = ssub.s32 1, %s6
  %s9 = scalar_select 0, %s8, %s6
  loop: start=0, step=1, limit=4
  $region2: #{generator_forward.9} parent=0 // loop_pre_header
    _
  $region3: #{generator_forward.9} parent=0 // loop_header
    %s11 = sphi 0, %s15
    %p12 = scmp.ge.s32.totalorder %s11, 4
    %s18 = sphi 0, %s30
    %s19 = sphi 0, %s26
    %s20 = sphi 0, %s18
    %s21 = sphi 0, %s19
    %s22 = sphi 0, %s20
    %s23 = sphi 0, %s21
    %s33 = sphi 0, %s35
    %s36 = sphi 0, %s33
    %s37 = sphi 0, %s36
    %s53 = sphi 0, %s37
    %s59 = sphi 0, %s61
    %s62 = sphi 0, %s59
    %s63 = sphi 0, %s62
    %s79 = sphi 0, %s63
    %s83 = sphi 0, %s83
    %s85 = sphi 0, %s83
    %s86 = sphi 0, %s85
    %s100 = sphi 0, %s86
    %s104 = sphi 0, %s104
    %s106 = sphi 0, %s104
    %s107 = sphi 0, %s106
    %s121 = sphi 0, %s107
    %s125 = sphi 0, %s125
    %s127 = sphi 0, %s125
    %s128 = sphi 0, %s127
    %s142 = sphi 0, %s128
    %s150 = sphi 0, %s152
    %s153 = sphi 0, %s150
    %s154 = sphi 0, %s153
    %s170 = sphi 0, %s154
  $region4: #{generator_forward.9} parent=0 // loop_header_branch
    %14 = sbr.rel (%p12) target = $region8
  $region5: #{generator_forward.9} parent=0 // loop_body
    %s16 = ssub.s32 %s11, 1
    %s17 = ssub.s32 %s11, 2
    %s24 = sadd.s32 1, %s19
    %p25 = scmp.ge.s32.totalorder %s24, 1
    %s26 = scalar_select %p25, 0, %s24
    %s27 = sadd.s32 1, %s18
    %s28 = scalar_select %p25, %s27, %s18
    %p29 = scmp.ge.s32.totalorder %s28, 2
    %s30 = scalar_select %p29, 0, %s28
    %s31 = ssub.s32 %s19, %s26
    %p32 = scmp.eq.s32.totalorder %s31, 0
    %s34 = sadd.s32 %s33, 1
    %s35 = scalar_select %p32, %s33, %s34
    %p38 = pneg %p32
    %p39 = scmp.eq.s32.totalorder %s11, 1
    %p40 = por %p38, %p39
    %p41 = scmp.ne.s32.totalorder %s33, %s36
    %p42 = scmp.eq.s32.totalorder %s11, 0
    %p43 = por %p41, %p42
    %p44 = scmp.ne.s32.totalorder %s33, %s36
    %p45 = scmp.eq.s32.totalorder %s16, 1
    %p46 = por %p44, %p45
    %p47 = scmp.ne.s32.totalorder %s36, %s37
    %p48 = scmp.eq.s32.totalorder %s16, 0
    %p49 = por %p47, %p48
    %p50 = scmp.ne.s32.totalorder %s36, %s37
    %p51 = scmp.eq.s32.totalorder %s17, 1
    %p52 = por %p50, %p51
    %p54 = scmp.ne.s32.totalorder %s37, %s53
    %p55 = scmp.eq.s32.totalorder %s17, 0
    %p56 = por %p54, %p55
    %s57 = ssub.s32 %s18, %s30
    %p58 = scmp.eq.s32.totalorder %s57, 0
    %s60 = sadd.s32 %s59, 1
    %s61 = scalar_select %p58, %s59, %s60
    %p64 = pneg %p58
    %p65 = scmp.eq.s32.totalorder %s11, 1
    %p66 = por %p64, %p65
    %p67 = scmp.ne.s32.totalorder %s59, %s62
    %p68 = scmp.eq.s32.totalorder %s11, 0
    %p69 = por %p67, %p68
    %p70 = scmp.ne.s32.totalorder %s59, %s62
    %p71 = scmp.eq.s32.totalorder %s16, 1
    %p72 = por %p70, %p71
    %p73 = scmp.ne.s32.totalorder %s62, %s63
    %p74 = scmp.eq.s32.totalorder %s16, 0
    %p75 = por %p73, %p74
    %p76 = scmp.ne.s32.totalorder %s62, %s63
    %p77 = scmp.eq.s32.totalorder %s17, 1
    %p78 = por %p76, %p77
    %p80 = scmp.ne.s32.totalorder %s63, %s79
    %p81 = scmp.eq.s32.totalorder %s17, 0
    %p82 = por %p80, %p81
    %s84 = sadd.s32 %s83, 1
    %p87 = scmp.eq.s32.totalorder %s11, 1
    %p88 = scmp.ne.s32.totalorder %s83, %s85
    %p89 = scmp.eq.s32.totalorder %s11, 0
    %p90 = por %p88, %p89
    %p91 = scmp.ne.s32.totalorder %s83, %s85
    %p92 = scmp.eq.s32.totalorder %s16, 1
    %p93 = por %p91, %p92
    %p94 = scmp.ne.s32.totalorder %s85, %s86
    %p95 = scmp.eq.s32.totalorder %s16, 0
    %p96 = por %p94, %p95
    %p97 = scmp.ne.s32.totalorder %s85, %s86
    %p98 = scmp.eq.s32.totalorder %s17, 1
    %p99 = por %p97, %p98
    %p101 = scmp.ne.s32.totalorder %s86, %s100
    %p102 = scmp.eq.s32.totalorder %s17, 0
    %p103 = por %p101, %p102
    %s105 = sadd.s32 %s104, 1
    %p108 = scmp.eq.s32.totalorder %s11, 1
    %p109 = scmp.ne.s32.totalorder %s104, %s106
    %p110 = scmp.eq.s32.totalorder %s11, 0
    %p111 = por %p109, %p110
    %p112 = scmp.ne.s32.totalorder %s104, %s106
    %p113 = scmp.eq.s32.totalorder %s16, 1
    %p114 = por %p112, %p113
    %p115 = scmp.ne.s32.totalorder %s106, %s107
    %p116 = scmp.eq.s32.totalorder %s16, 0
    %p117 = por %p115, %p116
    %p118 = scmp.ne.s32.totalorder %s106, %s107
    %p119 = scmp.eq.s32.totalorder %s17, 1
    %p120 = por %p118, %p119
    %p122 = scmp.ne.s32.totalorder %s107, %s121
    %p123 = scmp.eq.s32.totalorder %s17, 0
    %p124 = por %p122, %p123
    %s126 = sadd.s32 %s125, 1
    %p129 = scmp.eq.s32.totalorder %s11, 1
    %p130 = scmp.ne.s32.totalorder %s125, %s127
    %p131 = scmp.eq.s32.totalorder %s11, 0
    %p132 = por %p130, %p131
    %p133 = scmp.ne.s32.totalorder %s125, %s127
    %p134 = scmp.eq.s32.totalorder %s16, 1
    %p135 = por %p133, %p134
    %p136 = scmp.ne.s32.totalorder %s127, %s128
    %p137 = scmp.eq.s32.totalorder %s16, 0
    %p138 = por %p136, %p137
    %p139 = scmp.ne.s32.totalorder %s127, %s128
    %p140 = scmp.eq.s32.totalorder %s17, 1
    %p141 = por %p139, %p140
    %p143 = scmp.ne.s32.totalorder %s128, %s142
    %p144 = scmp.eq.s32.totalorder %s17, 0
    %p145 = por %p143, %p144
    %s146 = ssub.s32 %s18, %s30
    %s147 = ssub.s32 %s19, %s26
    %s148 = sor.u32 %s146, %s147
    %p149 = scmp.eq.s32.totalorder %s148, 0
    %s151 = sadd.s32 %s150, 1
    %s152 = scalar_select %p149, %s150, %s151
    %p155 = pneg %p149
    %p156 = scmp.eq.s32.totalorder %s11, 1
    %p157 = por %p155, %p156
    %p158 = scmp.ne.s32.totalorder %s150, %s153
    %p159 = scmp.eq.s32.totalorder %s11, 0
    %p160 = por %p158, %p159
    %p161 = scmp.ne.s32.totalorder %s150, %s153
    %p162 = scmp.eq.s32.totalorder %s16, 1
    %p163 = por %p161, %p162
    %p164 = scmp.ne.s32.totalorder %s153, %s154
    %p165 = scmp.eq.s32.totalorder %s16, 0
    %p166 = por %p164, %p165
    %p167 = scmp.ne.s32.totalorder %s153, %s154
    %p168 = scmp.eq.s32.totalorder %s17, 1
    %p169 = por %p167, %p168
    %p171 = scmp.ne.s32.totalorder %s154, %s170
    %p172 = scmp.eq.s32.totalorder %s17, 0
    %p173 = por %p171, %p172
    %p174 = scmp.le.s32.totalorder 1, %s11
    %p175 = scmp.lt.s32.totalorder %s11, 3
    %p176 = pnand %p174, %p175
    %p177 = pneg %p176
    // Predicated region
    $region9: #{generator_forward.9} parent=5 // pred_check
      _
    $region10: #{generator_forward.9} parent=5 // pred_check_branch
      %179 = sbr.rel (%p176) target = $region12
    $region11: #{generator_forward.9} parent=5 // pred_region
      %s180 = ssub.s32 %s11, 1
      // Predicated region
      $region13: #{generator_forward.9} parent=11 // pred_check
        %p181 = pneg %p49
      $region14: #{generator_forward.9} parent=11 // pred_check_branch
        %183 = sbr.rel (%p181) target = $region16
      $region15: #{generator_forward.9} parent=11 // pred_region
        %s184 = smul.u32 2, %s21
        %p185 = scmp.lt.s32.totalorder %s184, 1
        %s186 = scalar_select %p185, %s184, 1
        %s187 = smul.addr %s186, 8
        %s188 = scalar_lea.vmem %s0, %s187
        %s189 = smul.u32 2, %s21
      $region16: #{generator_forward.9} parent=11 // pred_fallthru
        _
      // Predicated region
      $region17: #{generator_forward.9} parent=11 // pred_check
        %p190 = pneg %p96
      $region18: #{generator_forward.9} parent=11 // pred_check_branch
        %192 = sbr.rel (%p190) target = $region20
      $region19: #{generator_forward.9} parent=11 // pred_region
        _
      $region20: #{generator_forward.9} parent=11 // pred_fallthru
        _
      // Predicated region
      $region21: #{generator_forward.9} parent=11 // pred_check
        %p193 = pneg %p117
      $region22: #{generator_forward.9} parent=11 // pred_check_branch
        %195 = sbr.rel (%p193) target = $region24
      $region23: #{generator_forward.9} parent=11 // pred_region
        _
      $region24: #{generator_forward.9} parent=11 // pred_fallthru
        _
      // Predicated region
      $region25: #{generator_forward.9} parent=11 // pred_check
        %p196 = pneg %p138
      $region26: #{generator_forward.9} parent=11 // pred_check_branch
        %198 = sbr.rel (%p196) target = $region28
      $region27: #{generator_forward.9} parent=11 // pred_region
        _
      $region28: #{generator_forward.9} parent=11 // pred_fallthru
        _
    $region12: #{generator_forward.9} parent=5 // pred_fallthru
      _
    %p199 = scmp.lt.s32.totalorder %s11, 2
    // Predicated region
    $region29: #{generator_forward.9} parent=5 // pred_check
      %p200 = pneg %p199
    $region30: #{generator_forward.9} parent=5 // pred_check_branch
      %202 = sbr.rel (%p200) target = $region32
    $region31: #{generator_forward.9} parent=5 // pred_region
      // Predicated region
      $region33: #{generator_forward.9} parent=31 // pred_check
        %p203 = pneg %p69
      $region34: #{generator_forward.9} parent=31 // pred_check_branch
        %205 = sbr.rel (%p203) target = $region36
      $region35: #{generator_forward.9} parent=31 // pred_region
        %p206 = scmp.lt.s32.totalorder %s18, 1
        %s207 = scalar_select %p206, %s18, 1
        %s208 = scalar_lea.vmem %s1, %s207
      $region36: #{generator_forward.9} parent=31 // pred_fallthru
        _
    $region32: #{generator_forward.9} parent=5 // pred_fallthru
      _
    %p209 = scmp.le.s32.totalorder 1, %s11
    %p210 = scmp.lt.s32.totalorder %s11, 3
    %p211 = pnand %p209, %p210
    %p212 = pneg %p211
    // Predicated region
    $region37: #{generator_forward.9} parent=5 // pred_check
      _
    $region38: #{generator_forward.9} parent=5 // pred_check_branch
      %214 = sbr.rel (%p211) target = $region40
    $region39: #{generator_forward.9} parent=5 // pred_region
      %s215 = ssub.s32 %s11, 1
      %s216 = smul.u32 2, %s21
      %p217 = scmp.lt.s32.totalorder %s216, 1
      %s218 = scalar_select %p217, %s216, 1
      %s219 = smul.addr %s218, 8
      %s220 = scalar_lea.vmem %s0, %s219
      %p221 = pneg %p49
      %p222 = pneg %p46
      %p223 = scmp.lt.s32.totalorder %s20, 1
      %s224 = scalar_select %p223, %s20, 1
      %s225 = scalar_lea.vmem %s1, %s224
      %p226 = pneg %p75
      %p227 = pneg %p72
      %p228 = pneg %p96
      %p229 = pneg %p93
      %p230 = pneg %p117
      %p231 = pneg %p114
      %p232 = pneg %p138
      %p233 = pneg %p135
      %p234 = pneg %p166
      %p235 = pneg %p163
      %s236 = smul.u32 2, %s21
      %p237 = scmp.lt.s32.totalorder %s20, 1
      %s238 = scalar_select %p237, %s20, 1
      %p239 = scmp.lt.s32.totalorder %s236, 1
      %s240 = scalar_select %p239, %s236, 1
      %s241 = smul.addr %s238, 2
      %s242 = sadd.s32 %s240, %s241
      %s243 = smul.addr %s242, 4
      %s244 = scalar_lea.vmem %s5, %s243
      %s245 = smul.u32 2, %s21
      %p246 = scmp.lt.s32.totalorder %s245, 1
      %s247 = scalar_select %p246, %s245, 1
      %s248 = smul.addr %s247, 8
      %s249 = scalar_lea.vmem %s0, %s248
      %s250 = smul.u32 2, %s21
      %p251 = scmp.lt.s32.totalorder %s20, 1
      %s252 = scalar_select %p251, %s20, 1
      %s253 = scalar_lea.vmem %s1, %s252
      %s254 = smul.u32 2, %s21
      %p255 = scmp.lt.s32.totalorder %s20, 1
      %s256 = scalar_select %p255, %s20, 1
      %p257 = scmp.lt.s32.totalorder %s254, 1
      %s258 = scalar_select %p257, %s254, 1
      %s259 = smul.addr %s256, 2
      %s260 = sadd.s32 %s258, %s259
      %s261 = smul.addr %s260, 4
      %s262 = scalar_lea.vmem %s5, %s261
      %s263 = smul.u32 2, %s21
      %v264 = vld [vmem:[%s249] sm:$0xff]
      %v265 = vld [vmem:[%s249 + $0x8] sm:$0xff]
      %v266 = vld [vmem:[%s2] sm:$0x7]
      %268 = vset.pattern.permute.xlu0 0
      %269 = vperm.xlu0 %268, %v264
      %v270 = vpop.permute.xlu0 %269
      %273 = vset.pattern.permute.xlu0 0
      %274 = vperm.xlu0 %273, %v265
      %v275 = vpop.permute.xlu0 %274
      %v277 = vperm.slane %v266, 0
      %v278 = vmul.f32 %v270, %v277
      %v279 = vmul.f32 %v275, %v277
      %280 = vset.pattern.permute.xlu0 1
      %281 = vperm.xlu0 %280, %v264
      %v282 = vpop.permute.xlu0 %281
      %284 = vset.pattern.permute.xlu0 1
      %285 = vperm.xlu0 %284, %v265
      %v286 = vpop.permute.xlu0 %285
      %v288 = vperm.slane %v266, 1
      %v289 = vmul.f32 %v282, %v288
      %v290 = vmul.f32 %v286, %v288
      %v291 = vadd.f32 %v278, %v289
      %v292 = vadd.f32 %v279, %v290
      %293 = vset.pattern.permute.xlu0 2
      %294 = vperm.xlu0 %293, %v264
      %v295 = vpop.permute.xlu0 %294
      %297 = vset.pattern.permute.xlu0 2
      %298 = vperm.xlu0 %297, %v265
      %v299 = vpop.permute.xlu0 %298
      %v301 = vperm.slane %v266, 2
      %v302 = vmul.f32 %v295, %v301
      %v303 = vmul.f32 %v299, %v301
      %v304 = vadd.f32 %v291, %v302
      %v305 = vadd.f32 %v292, %v303
      %v306 = vld [vmem:[%s253] sm:$0x1]
      %v308 = vperm.slane %v306, 0
      %v310 = vadd.f32 %v304, %v308
      %v311 = vadd.f32 %v305, %v308
      %vm312 = vcmp.ge.f32.partialorder %v310, 0.0
      %vm313 = vcmp.ge.f32.partialorder %v311, 0.0
      %v314 = vmul.f32 %v310, 0.01
      %v315 = vmul.f32 %v311, 0.01
      %v316 = vsel %vm312, %v310, %v314
      %v317 = vsel %vm313, %v311, %v315
      %v318 = vpack.c.bf16 %v317, %v316
      %v319 = vld [vmem:[%s3] sm:$0xf]
      %v320 = vld [vmem:[%s3 + $0x4] sm:$0xf]
      %v321 = vld [vmem:[%s3 + $0x8] sm:$0xf]
      %v322 = vld [vmem:[%s3 + $0xc] sm:$0xf]
      %v323 = vld [vmem:[%s3 + $0x10] sm:$0xf]
      %v324 = vld [vmem:[%s3 + $0x14] sm:$0xf]
      %v325 = vld [vmem:[%s3 + $0x18] sm:$0xf]
      %v326 = vld [vmem:[%s3 + $0x1c] sm:$0xf]
      %v327 = vld [vmem:[%s3 + $0x20] sm:$0xf]
      %v328 = vld [vmem:[%s3 + $0x24] sm:$0xf]
      %v329 = vld [vmem:[%s3 + $0x28] sm:$0xf]
      %v330 = vld [vmem:[%s3 + $0x2c] sm:$0xf]
      %v331 = vld [vmem:[%s3 + $0x30] sm:$0xf]
      %v332 = vld [vmem:[%s3 + $0x34] sm:$0xf]
      %v333 = vld [vmem:[%s3 + $0x38] sm:$0xf]
      %v334 = vld [vmem:[%s3 + $0x3c] sm:$0xf]
      %v335 = vld [vmem:[%s4] sm:$0x1]
      %v337 = vperm.slane %v335, 0
      %v355 = vunpack.c.l.b16 %v319
      %v356 = vunpack.c.l.b16 %v320
      %v357 = vunpack.c.l.b16 %v321
      %v358 = vunpack.c.l.b16 %v322
      %v359 = vunpack.c.l.b16 %v323
      %v360 = vunpack.c.l.b16 %v324
      %v361 = vunpack.c.l.b16 %v325
      %v362 = vunpack.c.l.b16 %v326
      %v363 = vunpack.c.l.b16 %v327
      %v364 = vunpack.c.l.b16 %v328
      %v365 = vunpack.c.l.b16 %v329
      %v366 = vunpack.c.l.b16 %v330
      %v367 = vunpack.c.l.b16 %v331
      %v368 = vunpack.c.l.b16 %v332
      %v369 = vunpack.c.l.b16 %v333
      %v370 = vunpack.c.l.b16 %v334
      %v371 = vpack.c.b16 %v356, %v355
      %v372 = vpack.c.b16 %v358, %v357
      %v373 = vpack.c.b16 %v360, %v359
      %v374 = vpack.c.b16 %v362, %v361
      %v375 = vpack.c.b16 %v364, %v363
      %v376 = vpack.c.b16 %v366, %v365
      %v377 = vpack.c.b16 %v368, %v367
      %v378 = vpack.c.b16 %v370, %v369
      %387 = vmatpush.bf16.msra.mxu0 %v378
      %388 = vmatpush.bf16.msra.mxu0 %v377
      %389 = vmatpush.bf16.msra.mxu0 %v376
      %390 = vmatpush.bf16.msra.mxu0 %v375
      %391 = vmatpush.bf16.msra.mxu0 %v374
      %392 = vmatpush.bf16.msra.mxu0 %v373
      %393 = vmatpush.bf16.msra.mxu0 %v372
      %394 = vmatpush.bf16.msra.mxu0 %v371
      %395 = vmatmul.bf16.gmra.mxu0 %v318
      %v396 = vpop.f32.mrf.mxu0
      %v397 = vadd.f32 %v337, %v396
      %v398 = vpop.f32.mrf.mxu0
      %v399 = vadd.f32 %v337, %v398
      %400 = vdwg.mxu0
      %vm401 = vcmp.ge.f32.partialorder %v397, 0.0
      %vm402 = vcmp.ge.f32.partialorder %v399, 0.0
      %v403 = vmul.f32 %v397, 0.01
      %v404 = vmul.f32 %v399, 0.01
      %v405 = vsel %vm401, %v397, %v403
      %v406 = vsel %vm402, %v399, %v404
      %v407 = vpack.c.bf16 %v405, %v405
      %v408 = vpack.c.bf16 %v406, %v406
      %409 = vst [vmem:[%s262] sm:$0xf] %v407
      %410 = vst [vmem:[%s262 + $0x4] sm:$0xf] %v408
      %s411 = smul.u32 2, %s21
      %p412 = scmp.lt.s32.totalorder %s20, 1
      %s413 = scalar_select %p412, %s20, 1
      %p414 = scmp.lt.s32.totalorder %s411, 1
      %s415 = scalar_select %p414, %s411, 1
      %s416 = smul.addr %s413, 2
      %s417 = sadd.s32 %s415, %s416
      %s418 = smul.addr %s417, 4
      %s419 = scalar_lea.vmem %s5, %s418
      // Predicated region
      $region41: #{generator_forward.9} parent=39 // pred_check
        %p420 = pneg %p163
      $region42: #{generator_forward.9} parent=39 // pred_check_branch
        %422 = sbr.rel (%p420) target = $region44
      $region43: #{generator_forward.9} parent=39 // pred_region
        %s423 = smul.u32 2, %s21
      $region44: #{generator_forward.9} parent=39 // pred_fallthru
        _
    $region40: #{generator_forward.9} parent=5 // pred_fallthru
      _
    %p424 = scmp.le.s32.totalorder 2, %s11
    // Predicated region
    $region45: #{generator_forward.9} parent=5 // pred_check
      %p425 = pneg %p424
    $region46: #{generator_forward.9} parent=5 // pred_check_branch
      %427 = sbr.rel (%p425) target = $region48
    $region47: #{generator_forward.9} parent=5 // pred_region
      %s428 = ssub.s32 %s11, 2
      // Predicated region
      $region49: #{generator_forward.9} parent=47 // pred_check
        %p429 = pneg %p169
      $region50: #{generator_forward.9} parent=47 // pred_check_branch
        %431 = sbr.rel (%p429) target = $region52
      $region51: #{generator_forward.9} parent=47 // pred_region
        %s432 = smul.u32 2, %s23
        %p433 = scmp.lt.s32.totalorder %s22, 1
        %s434 = scalar_select %p433, %s22, 1
        %p435 = scmp.lt.s32.totalorder %s432, 1
        %s436 = scalar_select %p435, %s432, 1
        %s437 = smul.addr %s434, 2
        %s438 = sadd.s32 %s436, %s437
        %s439 = smul.addr %s438, 4
        %s440 = scalar_lea.vmem %s5, %s439
      $region52: #{generator_forward.9} parent=47 // pred_fallthru
        _
    $region48: #{generator_forward.9} parent=5 // pred_fallthru
      _
  $region6: #{generator_forward.9} parent=0 // loop_footer
    %s15 = sadd.s32 1, %s11
  $region7: #{generator_forward.9} parent=0 // loop_footer_branch
    %10 = sbr.rel target = $region3
  $region8: #{generator_forward.9} parent=0 // loop_exit
    _

// kernel: generator_forward.8
$region0: #{generator_forward.8}
  #allocation0 [shape = 'u32[]', space=smem, size = 0x4, offset = 0x4, fixed_abs, tag = 'smem constant byte address 0x4 - core index']
  #allocation1 [shape = 'u32[72,128]{1,0:T(1,128)}', space=vmem, size = 0x9000, scoped, tag = 'internal scratch']
  %s0 = inlined_call_operand.vmem [shape: f32[1,16,128], index: 0, kind: input, shape index: {}]
  %s1 = inlined_call_operand.vmem [shape: f32[16,3], index: 1, kind: input, shape index: {}]
  %s2 = inlined_call_operand.vmem [shape: bf16[1,16,128], index: 2, kind: input, shape index: {}]
  %s3 = inlined_call_operand.vmem [shape: f32[16,1], index: 3, kind: input, shape index: {}]
  %s4 = inlined_call_operand.vmem [shape: bf16[128,128], index: 4, kind: input, shape index: {}]
  %s5 = inlined_call_operand.vmem [shape: f32[1,128], index: 5, kind: input, shape index: {}]
  %s6 = inlined_call_operand.vmem [shape: bf16[128,3], index: 6, kind: input, shape index: {}]
  %s7 = inlined_call_operand.vmem [shape: f32[1,3], index: 7, kind: input, shape index: {}]
  %s8 = inlined_call_operand.vmem [shape: f32[3,128], index: 8, kind: input, shape index: {}]
  %s9 = inlined_call_operand.vmem [shape: bf16[128,128], index: 9, kind: input, shape index: {}]
  %s10 = inlined_call_operand.vmem [shape: f32[1,128], index: 10, kind: input, shape index: {}]
  %s11 = inlined_call_operand.vmem [shape: bf16[128,128], index: 11, kind: input, shape index: {}]
  %s12 = inlined_call_operand.vmem [shape: f32[1,128], index: 12, kind: input, shape index: {}]
  %s13 = inlined_call_operand.vmem [shape: f32[1,16,128], index: 13, kind: output, shape index: {}]
  %s14 = sld [smem:[#allocation0]]
  $region62: #{generator_forward.8} parent=0
    _
  %s16 = ssub.s32 1, %s14
  %s17 = scalar_select 0, %s16, %s14
  // Predicated region
  $region2: #{generator_forward.8} parent=0 // pred_check
    _
  $region3: #{generator_forward.8} parent=0 // pred_check_branch
    %19 = sbr.rel (0) target = $region5
  $region4: #{generator_forward.8} parent=0 // pred_region
    _
  $region5: #{generator_forward.8} parent=0 // pred_fallthru
    _
  // Predicated region
  $region6: #{generator_forward.8} parent=0 // pred_check
    _
  $region7: #{generator_forward.8} parent=0 // pred_check_branch
    %21 = sbr.rel (0) target = $region9
  $region8: #{generator_forward.8} parent=0 // pred_region
    _
  $region9: #{generator_forward.8} parent=0 // pred_fallthru
    _
  // Predicated region
  $region10: #{generator_forward.8} parent=0 // pred_check
    _
  $region11: #{generator_forward.8} parent=0 // pred_check_branch
    %23 = sbr.rel (0) target = $region13
  $region12: #{generator_forward.8} parent=0 // pred_region
    _
  $region13: #{generator_forward.8} parent=0 // pred_fallthru
    _
  // Predicated region
  $region14: #{generator_forward.8} parent=0 // pred_check
    _
  $region15: #{generator_forward.8} parent=0 // pred_check_branch
    %25 = sbr.rel (0) target = $region17
  $region16: #{generator_forward.8} parent=0 // pred_region
    _
  $region17: #{generator_forward.8} parent=0 // pred_fallthru
    _
  // Predicated region
  $region18: #{generator_forward.8} parent=0 // pred_check
    _
  $region19: #{generator_forward.8} parent=0 // pred_check_branch
    %27 = sbr.rel (0) target = $region21
  $region20: #{generator_forward.8} parent=0 // pred_region
    _
  $region21: #{generator_forward.8} parent=0 // pred_fallthru
    _
  // Predicated region
  $region22: #{generator_forward.8} parent=0 // pred_check
    _
  $region23: #{generator_forward.8} parent=0 // pred_check_branch
    %29 = sbr.rel (0) target = $region25
  $region24: #{generator_forward.8} parent=0 // pred_region
    _
  $region25: #{generator_forward.8} parent=0 // pred_fallthru
    _
  // Predicated region
  $region26: #{generator_forward.8} parent=0 // pred_check
    _
  $region27: #{generator_forward.8} parent=0 // pred_check_branch
    %31 = sbr.rel (0) target = $region29
  $region28: #{generator_forward.8} parent=0 // pred_region
    _
  $region29: #{generator_forward.8} parent=0 // pred_fallthru
    _
  // Predicated region
  $region30: #{generator_forward.8} parent=0 // pred_check
    _
  $region31: #{generator_forward.8} parent=0 // pred_check_branch
    %33 = sbr.rel (0) target = $region33
  $region32: #{generator_forward.8} parent=0 // pred_region
    _
  $region33: #{generator_forward.8} parent=0 // pred_fallthru
    _
  // Predicated region
  $region34: #{generator_forward.8} parent=0 // pred_check
    _
  $region35: #{generator_forward.8} parent=0 // pred_check_branch
    %35 = sbr.rel (0) target = $region37
  $region36: #{generator_forward.8} parent=0 // pred_region
    _
  $region37: #{generator_forward.8} parent=0 // pred_fallthru
    _
  // Predicated region
  $region38: #{generator_forward.8} parent=0 // pred_check
    _
  $region39: #{generator_forward.8} parent=0 // pred_check_branch
    %37 = sbr.rel (0) target = $region41
  $region40: #{generator_forward.8} parent=0 // pred_region
    _
  $region41: #{generator_forward.8} parent=0 // pred_fallthru
    _
  // Predicated region
  $region42: #{generator_forward.8} parent=0 // pred_check
    _
  $region43: #{generator_forward.8} parent=0 // pred_check_branch
    %39 = sbr.rel (0) target = $region45
  $region44: #{generator_forward.8} parent=0 // pred_region
    _
  $region45: #{generator_forward.8} parent=0 // pred_fallthru
    _
  // Predicated region
  $region46: #{generator_forward.8} parent=0 // pred_check
    _
  $region47: #{generator_forward.8} parent=0 // pred_check_branch
    %41 = sbr.rel (0) target = $region49
  $region48: #{generator_forward.8} parent=0 // pred_region
    _
  $region49: #{generator_forward.8} parent=0 // pred_fallthru
    _
  // Predicated region
  $region50: #{generator_forward.8} parent=0 // pred_check
    _
  $region51: #{generator_forward.8} parent=0 // pred_check_branch
    %43 = sbr.rel (0) target = $region53
  $region52: #{generator_forward.8} parent=0 // pred_region
    _
  $region53: #{generator_forward.8} parent=0 // pred_fallthru
    _
  %v44 = vld [vmem:[%s0] sm:$0xff]
  %v45 = vld [vmem:[%s0 + $0x8] sm:$0xff]
  %v46 = vpack.c.bf16 %v45, %v44
  %v47 = vld [vmem:[%s4] sm:$0xf]
  %v48 = vld [vmem:[%s4 + $0x4] sm:$0xf]
  %v49 = vld [vmem:[%s4 + $0x8] sm:$0xf]
  %v50 = vld [vmem:[%s4 + $0xc] sm:$0xf]
  %v51 = vld [vmem:[%s4 + $0x10] sm:$0xf]
  %v52 = vld [vmem:[%s4 + $0x14] sm:$0xf]
  %v53 = vld [vmem:[%s4 + $0x18] sm:$0xf]
  %v54 = vld [vmem:[%s4 + $0x1c] sm:$0xf]
  %v55 = vld [vmem:[%s4 + $0x20] sm:$0xf]
  %v56 = vld [vmem:[%s4 + $0x24] sm:$0xf]
  %v57 = vld [vmem:[%s4 + $0x28] sm:$0xf]
  %v58 = vld [vmem:[%s4 + $0x2c] sm:$0xf]
  %v59 = vld [vmem:[%s4 + $0x30] sm:$0xf]
  %v60 = vld [vmem:[%s4 + $0x34] sm:$0xf]
  %v61 = vld [vmem:[%s4 + $0x38] sm:$0xf]
  %v62 = vld [vmem:[%s4 + $0x3c] sm:$0xf]
  %v63 = vld [vmem:[%s5] sm:$0x1]
  %v65 = vperm.slane %v63, 0
  %v83 = vunpack.c.l.b16 %v47
  %v84 = vunpack.c.l.b16 %v48
  %v85 = vunpack.c.l.b16 %v49
  %v86 = vunpack.c.l.b16 %v50
  %v87 = vunpack.c.l.b16 %v51
  %v88 = vunpack.c.l.b16 %v52
  %v89 = vunpack.c.l.b16 %v53
  %v90 = vunpack.c.l.b16 %v54
  %v91 = vunpack.c.l.b16 %v55
  %v92 = vunpack.c.l.b16 %v56
  %v93 = vunpack.c.l.b16 %v57
  %v94 = vunpack.c.l.b16 %v58
  %v95 = vunpack.c.l.b16 %v59
  %v96 = vunpack.c.l.b16 %v60
  %v97 = vunpack.c.l.b16 %v61
  %v98 = vunpack.c.l.b16 %v62
  %v99 = vpack.c.b16 %v84, %v83
  %v100 = vpack.c.b16 %v86, %v85
  %v101 = vpack.c.b16 %v88, %v87
  %v102 = vpack.c.b16 %v90, %v89
  %v103 = vpack.c.b16 %v92, %v91
  %v104 = vpack.c.b16 %v94, %v93
  %v105 = vpack.c.b16 %v96, %v95
  %v106 = vpack.c.b16 %v98, %v97
  %115 = vmatpush.bf16.msra.mxu0 %v106
  %116 = vmatpush.bf16.msra.mxu0 %v105
  %117 = vmatpush.bf16.msra.mxu0 %v104
  %118 = vmatpush.bf16.msra.mxu0 %v103
  %119 = vmatpush.bf16.msra.mxu0 %v102
  %120 = vmatpush.bf16.msra.mxu0 %v101
  %121 = vmatpush.bf16.msra.mxu0 %v100
  %122 = vmatpush.bf16.msra.mxu0 %v99
  %123 = vmatmul.bf16.gmra.mxu0 %v46
  %v124 = vpop.f32.mrf.mxu0
  %v125 = vadd.f32 %v65, %v124
  %v126 = vpop.f32.mrf.mxu0
  %v127 = vadd.f32 %v65, %v126
  %128 = vdwg.mxu0
  %vm129 = vcmp.ge.f32.partialorder %v125, 0.0
  %vm130 = vcmp.ge.f32.partialorder %v127, 0.0
  %v131 = vmul.f32 %v125, 0.01
  %v132 = vmul.f32 %v127, 0.01
  %v133 = vsel %vm129, %v125, %v131
  %v134 = vsel %vm130, %v127, %v132
  %v135 = vpack.c.bf16 %v134, %v133
  %v136 = vld [vmem:[%s6] sm:$0xf]
  %v137 = vld [vmem:[%s6 + $0x4] sm:$0xf]
  %v138 = vld [vmem:[%s6 + $0x8] sm:$0xf]
  %v139 = vld [vmem:[%s6 + $0xc] sm:$0xf]
  %v140 = vld [vmem:[%s6 + $0x10] sm:$0xf]
  %v141 = vld [vmem:[%s6 + $0x14] sm:$0xf]
  %v142 = vld [vmem:[%s6 + $0x18] sm:$0xf]
  %v143 = vld [vmem:[%s6 + $0x1c] sm:$0xf]
  %v144 = vld [vmem:[%s6 + $0x20] sm:$0xf]
  %v145 = vld [vmem:[%s6 + $0x24] sm:$0xf]
  %v146 = vld [vmem:[%s6 + $0x28] sm:$0xf]
  %v147 = vld [vmem:[%s6 + $0x2c] sm:$0xf]
  %v148 = vld [vmem:[%s6 + $0x30] sm:$0xf]
  %v149 = vld [vmem:[%s6 + $0x34] sm:$0xf]
  %v150 = vld [vmem:[%s6 + $0x38] sm:$0xf]
  %v151 = vld [vmem:[%s6 + $0x3c] sm:$0xf]
  %v152 = vld [vmem:[%s7] sm:$0x1]
  %v154 = vperm.slane %v152, 0
  %v172 = vunpack.c.l.b16 %v136
  %v173 = vunpack.c.l.b16 %v137
  %v174 = vunpack.c.l.b16 %v138
  %v175 = vunpack.c.l.b16 %v139
  %v176 = vunpack.c.l.b16 %v140
  %v177 = vunpack.c.l.b16 %v141
  %v178 = vunpack.c.l.b16 %v142
  %v179 = vunpack.c.l.b16 %v143
  %v180 = vunpack.c.l.b16 %v144
  %v181 = vunpack.c.l.b16 %v145
  %v182 = vunpack.c.l.b16 %v146
  %v183 = vunpack.c.l.b16 %v147
  %v184 = vunpack.c.l.b16 %v148
  %v185 = vunpack.c.l.b16 %v149
  %v186 = vunpack.c.l.b16 %v150
  %v187 = vunpack.c.l.b16 %v151
  %v188 = vpack.c.b16 %v173, %v172
  %v189 = vpack.c.b16 %v175, %v174
  %v190 = vpack.c.b16 %v177, %v176
  %v191 = vpack.c.b16 %v179, %v178
  %v192 = vpack.c.b16 %v181, %v180
  %v193 = vpack.c.b16 %v183, %v182
  %v194 = vpack.c.b16 %v185, %v184
  %v195 = vpack.c.b16 %v187, %v186
  %204 = vmatpush.bf16.msra.mxu0 %v195
  %205 = vmatpush.bf16.msra.mxu0 %v194
  %206 = vmatpush.bf16.msra.mxu0 %v193
  %207 = vmatpush.bf16.msra.mxu0 %v192
  %208 = vmatpush.bf16.msra.mxu0 %v191
  %209 = vmatpush.bf16.msra.mxu0 %v190
  %210 = vmatpush.bf16.msra.mxu0 %v189
  %211 = vmatpush.bf16.msra.mxu0 %v188
  %212 = vmatmul.bf16.gmra.mxu0 %v135
  %v213 = vpop.f32.mrf.mxu0
  %v214 = vadd.f32 %v154, %v213
  %v215 = vpop.f32.mrf.mxu0
  %v216 = vadd.f32 %v154, %v215
  %217 = vdwg.mxu0
  %v218 = vtanh.pop %v214
  %v219 = vtanh.pop %v216
  %v220 = vld [vmem:[%s3] sm:$0xff]
  %v221 = vld [vmem:[%s3 + $0x8] sm:$0xff]
  %v222 = vld [vmem:[%s1] sm:$0xff]
  %v223 = vld [vmem:[%s1 + $0x8] sm:$0xff]
  %v224 = vadd.f32 %v218, %v222
  %v225 = vadd.f32 %v219, %v223
  %227 = vset.pattern.permute.xlu0 0
  %228 = vperm.xlu0 %227, %v220
  %v229 = vpop.permute.xlu0 %228
  %232 = vset.pattern.permute.xlu0 0
  %233 = vperm.xlu0 %232, %v221
  %v234 = vpop.permute.xlu0 %233
  %v236 = vmul.f32 %v229, %v224
  %v237 = vmul.f32 %v234, %v225
  %v238 = vld [vmem:[%s8] sm:$0x7]
  %240 = vset.pattern.permute.xlu0 0
  %241 = vperm.xlu0 %240, %v236
  %v242 = vpop.permute.xlu0 %241
  %245 = vset.pattern.permute.xlu0 0
  %246 = vperm.xlu0 %245, %v237
  %v247 = vpop.permute.xlu0 %246
  %v249 = vperm.slane %v238, 0
  %v250 = vmul.f32 %v242, %v249
  %v251 = vmul.f32 %v247, %v249
  %252 = vset.pattern.permute.xlu0 1
  %253 = vperm.xlu0 %252, %v236
  %v254 = vpop.permute.xlu0 %253
  %256 = vset.pattern.permute.xlu0 1
  %257 = vperm.xlu0 %256, %v237
  %v258 = vpop.permute.xlu0 %257
  %v260 = vperm.slane %v238, 1
  %v261 = vmul.f32 %v254, %v260
  %v262 = vmul.f32 %v258, %v260
  %v263 = vadd.f32 %v250, %v261
  %v264 = vadd.f32 %v251, %v262
  %265 = vset.pattern.permute.xlu0 2
  %266 = vperm.xlu0 %265, %v236
  %v267 = vpop.permute.xlu0 %266
  %269 = vset.pattern.permute.xlu0 2
  %270 = vperm.xlu0 %269, %v237
  %v271 = vpop.permute.xlu0 %270
  %v273 = vperm.slane %v238, 2
  %v274 = vmul.f32 %v267, %v273
  %v275 = vmul.f32 %v271, %v273
  %v276 = vadd.f32 %v263, %v274
  %v277 = vadd.f32 %v264, %v275
  %v278 = vld [vmem:[%s2] sm:$0xf]
  %v279 = vld [vmem:[%s2 + $0x4] sm:$0xf]
  %v280 = vld [vmem:[%s9] sm:$0xf]
  %v281 = vld [vmem:[%s9 + $0x4] sm:$0xf]
  %v282 = vld [vmem:[%s9 + $0x8] sm:$0xf]
  %v283 = vld [vmem:[%s9 + $0xc] sm:$0xf]
  %v284 = vld [vmem:[%s9 + $0x10] sm:$0xf]
  %v285 = vld [vmem:[%s9 + $0x14] sm:$0xf]
  %v286 = vld [vmem:[%s9 + $0x18] sm:$0xf]
  %v287 = vld [vmem:[%s9 + $0x1c] sm:$0xf]
  %v288 = vld [vmem:[%s9 + $0x20] sm:$0xf]
  %v289 = vld [vmem:[%s9 + $0x24] sm:$0xf]
  %v290 = vld [vmem:[%s9 + $0x28] sm:$0xf]
  %v291 = vld [vmem:[%s9 + $0x2c] sm:$0xf]
  %v292 = vld [vmem:[%s9 + $0x30] sm:$0xf]
  %v293 = vld [vmem:[%s9 + $0x34] sm:$0xf]
  %v294 = vld [vmem:[%s9 + $0x38] sm:$0xf]
  %v295 = vld [vmem:[%s9 + $0x3c] sm:$0xf]
  %v298 = vunpack.c.l.b16 %v278
  %v299 = vunpack.c.l.b16 %v279
  %v300 = vpack.c.b16 %v299, %v298
  %v318 = vunpack.c.l.b16 %v280
  %v319 = vunpack.c.l.b16 %v281
  %v320 = vunpack.c.l.b16 %v282
  %v321 = vunpack.c.l.b16 %v283
  %v322 = vunpack.c.l.b16 %v284
  %v323 = vunpack.c.l.b16 %v285
  %v324 = vunpack.c.l.b16 %v286
  %v325 = vunpack.c.l.b16 %v287
  %v326 = vunpack.c.l.b16 %v288
  %v327 = vunpack.c.l.b16 %v289
  %v328 = vunpack.c.l.b16 %v290
  %v329 = vunpack.c.l.b16 %v291
  %v330 = vunpack.c.l.b16 %v292
  %v331 = vunpack.c.l.b16 %v293
  %v332 = vunpack.c.l.b16 %v294
  %v333 = vunpack.c.l.b16 %v295
  %v334 = vpack.c.b16 %v319, %v318
  %v335 = vpack.c.b16 %v321, %v320
  %v336 = vpack.c.b16 %v323, %v322
  %v337 = vpack.c.b16 %v325, %v324
  %v338 = vpack.c.b16 %v327, %v326
  %v339 = vpack.c.b16 %v329, %v328
  %v340 = vpack.c.b16 %v331, %v330
  %v341 = vpack.c.b16 %v333, %v332
  %350 = vmatpush.bf16.msra.mxu0 %v341
  %351 = vmatpush.bf16.msra.mxu0 %v340
  %352 = vmatpush.bf16.msra.mxu0 %v339
  %353 = vmatpush.bf16.msra.mxu0 %v338
  %354 = vmatpush.bf16.msra.mxu0 %v337
  %355 = vmatpush.bf16.msra.mxu0 %v336
  %356 = vmatpush.bf16.msra.mxu0 %v335
  %357 = vmatpush.bf16.msra.mxu0 %v334
  %358 = vmatmul.bf16.gmra.mxu0 %v300
  %v359 = vpop.f32.mrf.mxu0
  %v360 = vadd.f32 0.0, %v359
  %v361 = vpop.f32.mrf.mxu0
  %v362 = vadd.f32 0.0, %v361
  %363 = vdwg.mxu0
  %v364 = vadd.f32 %v276, %v360
  %v365 = vadd.f32 %v277, %v362
  %v366 = vld [vmem:[%s10] sm:$0x1]
  %v368 = vperm.slane %v366, 0
  %v370 = vadd.f32 %v364, %v368
  %v371 = vadd.f32 %v365, %v368
  %vm372 = vcmp.ge.f32.partialorder %v370, 0.0
  %vm373 = vcmp.ge.f32.partialorder %v371, 0.0
  %v374 = vmul.f32 %v370, 0.01
  %v375 = vmul.f32 %v371, 0.01
  %v376 = vsel %vm372, %v370, %v374
  %v377 = vsel %vm373, %v371, %v375
  %v378 = vpack.c.bf16 %v377, %v376
  %v379 = vld [vmem:[%s11] sm:$0xf]
  %v380 = vld [vmem:[%s11 + $0x4] sm:$0xf]
  %v381 = vld [vmem:[%s11 + $0x8] sm:$0xf]
  %v382 = vld [vmem:[%s11 + $0xc] sm:$0xf]
  %v383 = vld [vmem:[%s11 + $0x10] sm:$0xf]
  %v384 = vld [vmem:[%s11 + $0x14] sm:$0xf]
  %v385 = vld [vmem:[%s11 + $0x18] sm:$0xf]
  %v386 = vld [vmem:[%s11 + $0x1c] sm:$0xf]
  %v387 = vld [vmem:[%s11 + $0x20] sm:$0xf]
  %v388 = vld [vmem:[%s11 + $0x24] sm:$0xf]
  %v389 = vld [vmem:[%s11 + $0x28] sm:$0xf]
  %v390 = vld [vmem:[%s11 + $0x2c] sm:$0xf]
  %v391 = vld [vmem:[%s11 + $0x30] sm:$0xf]
  %v392 = vld [vmem:[%s11 + $0x34] sm:$0xf]
  %v393 = vld [vmem:[%s11 + $0x38] sm:$0xf]
  %v394 = vld [vmem:[%s11 + $0x3c] sm:$0xf]
  %v395 = vld [vmem:[%s12] sm:$0x1]
  %v397 = vperm.slane %v395, 0
  %v415 = vunpack.c.l.b16 %v379
  %v416 = vunpack.c.l.b16 %v380
  %v417 = vunpack.c.l.b16 %v381
  %v418 = vunpack.c.l.b16 %v382
  %v419 = vunpack.c.l.b16 %v383
  %v420 = vunpack.c.l.b16 %v384
  %v421 = vunpack.c.l.b16 %v385
  %v422 = vunpack.c.l.b16 %v386
  %v423 = vunpack.c.l.b16 %v387
  %v424 = vunpack.c.l.b16 %v388
  %v425 = vunpack.c.l.b16 %v389
  %v426 = vunpack.c.l.b16 %v390
  %v427 = vunpack.c.l.b16 %v391
  %v428 = vunpack.c.l.b16 %v392
  %v429 = vunpack.c.l.b16 %v393
  %v430 = vunpack.c.l.b16 %v394
  %v431 = vpack.c.b16 %v416, %v415
  %v432 = vpack.c.b16 %v418, %v417
  %v433 = vpack.c.b16 %v420, %v419
  %v434 = vpack.c.b16 %v422, %v421
  %v435 = vpack.c.b16 %v424, %v423
  %v436 = vpack.c.b16 %v426, %v425
  %v437 = vpack.c.b16 %v428, %v427
  %v438 = vpack.c.b16 %v430, %v429
  %447 = vmatpush.bf16.msra.mxu0 %v438
  %448 = vmatpush.bf16.msra.mxu0 %v437
  %449 = vmatpush.bf16.msra.mxu0 %v436
  %450 = vmatpush.bf16.msra.mxu0 %v435
  %451 = vmatpush.bf16.msra.mxu0 %v434
  %452 = vmatpush.bf16.msra.mxu0 %v433
  %453 = vmatpush.bf16.msra.mxu0 %v432
  %454 = vmatpush.bf16.msra.mxu0 %v431
  %455 = vmatmul.bf16.gmra.mxu0 %v378
  %v456 = vpop.f32.mrf.mxu0
  %v457 = vadd.f32 %v397, %v456
  %v458 = vpop.f32.mrf.mxu0
  %v459 = vadd.f32 %v397, %v458
  %460 = vdwg.mxu0
  %v461 = vadd.f32 %v44, %v457
  %v462 = vadd.f32 %v45, %v459
  %463 = vst [vmem:[%s13] sm:$0xff] %v461
  %464 = vst [vmem:[%s13 + $0x8] sm:$0xff] %v462
  // Predicated region
  $region54: #{generator_forward.8} parent=0 // pred_check
    _
  $region55: #{generator_forward.8} parent=0 // pred_check_branch
    %466 = sbr.rel (0) target = $region57
  $region56: #{generator_forward.8} parent=0 // pred_region
    _
  $region57: #{generator_forward.8} parent=0 // pred_fallthru
    _
  // Predicated region
  $region58: #{generator_forward.8} parent=0 // pred_check
    _
  $region59: #{generator_forward.8} parent=0 // pred_check_branch
    %468 = sbr.rel (0) target = $region61
  $region60: #{generator_forward.8} parent=0 // pred_region
    _
  $region61: #{generator_forward.8} parent=0 // pred_fallthru
    _

// kernel: generator_forward.10
$region0: #{generator_forward.10}
  #allocation0 [shape = 'u32[]', space=smem, size = 0x4, offset = 0x4, fixed_abs, tag = 'smem constant byte address 0x4 - core index']
  #allocation1 [shape = 'u32[72,128]{1,0:T(1,128)}', space=vmem, size = 0x9000, scoped, tag = 'internal scratch']
  %s0 = inlined_call_operand.vmem [shape: f32[1,16,128], index: 0, kind: input, shape index: {}]
  %s1 = inlined_call_operand.vmem [shape: bf16[2,16,128], index: 1, kind: input, shape index: {}]
  %s2 = inlined_call_operand.vmem [shape: bf16[128,256], index: 2, kind: input, shape index: {}]
  %s3 = inlined_call_operand.vmem [shape: f32[1,256], index: 3, kind: input, shape index: {}]
  %s4 = inlined_call_operand.vmem [shape: f32[2,16,128], index: 4, kind: output, shape index: {}]
  %s5 = sld [smem:[#allocation0]]
  $region49: #{generator_forward.10} parent=0
    _
  %s7 = ssub.s32 1, %s5
  %s8 = scalar_select 0, %s7, %s5
  loop: start=0, step=1, limit=4
  $region2: #{generator_forward.10} parent=0 // loop_pre_header
    _
  $region3: #{generator_forward.10} parent=0 // loop_header
    %s10 = sphi 0, %s14
    %p11 = scmp.ge.s32.totalorder %s10, 4
    %s18 = sphi 0, %s18
    %s20 = sphi 0, %s18
    %s21 = sphi 0, %s20
    %s35 = sphi 0, %s21
    %s41 = sphi 0, %s43
    %s44 = sphi 0, %s41
    %s45 = sphi 0, %s44
    %s61 = sphi 0, %s45
    %s65 = sphi 0, %s65
    %s67 = sphi 0, %s65
    %s68 = sphi 0, %s67
    %s82 = sphi 0, %s68
    %s86 = sphi 0, %s86
    %s88 = sphi 0, %s86
    %s89 = sphi 0, %s88
    %s103 = sphi 0, %s89
    %s109 = sphi 0, %s111
    %s112 = sphi 0, %s109
    %s113 = sphi 0, %s112
    %s129 = sphi 0, %s113
  $region4: #{generator_forward.10} parent=0 // loop_header_branch
    %13 = sbr.rel (%p11) target = $region8
  $region5: #{generator_forward.10} parent=0 // loop_body
    %s15 = ssub.s32 %s10, 1
    %s16 = ssub.s32 %s10, 2
    %s17 = sadd.s32 %s10, 1
    %s19 = sadd.s32 %s18, 1
    %p22 = scmp.eq.s32.totalorder %s10, 1
    %p23 = scmp.ne.s32.totalorder %s18, %s20
    %p24 = scmp.eq.s32.totalorder %s10, 0
    %p25 = por %p23, %p24
    %p26 = scmp.ne.s32.totalorder %s18, %s20
    %p27 = scmp.eq.s32.totalorder %s15, 1
    %p28 = por %p26, %p27
    %p29 = scmp.ne.s32.totalorder %s20, %s21
    %p30 = scmp.eq.s32.totalorder %s15, 0
    %p31 = por %p29, %p30
    %p32 = scmp.ne.s32.totalorder %s20, %s21
    %p33 = scmp.eq.s32.totalorder %s16, 1
    %p34 = por %p32, %p33
    %p36 = scmp.ne.s32.totalorder %s21, %s35
    %p37 = scmp.eq.s32.totalorder %s16, 0
    %p38 = por %p36, %p37
    %s39 = ssub.s32 %s10, %s17
    %p40 = scmp.eq.s32.totalorder %s39, 0
    %s42 = sadd.s32 %s41, 1
    %s43 = scalar_select %p40, %s41, %s42
    %p46 = pneg %p40
    %p47 = scmp.eq.s32.totalorder %s10, 1
    %p48 = por %p46, %p47
    %p49 = scmp.ne.s32.totalorder %s41, %s44
    %p50 = scmp.eq.s32.totalorder %s10, 0
    %p51 = por %p49, %p50
    %p52 = scmp.ne.s32.totalorder %s41, %s44
    %p53 = scmp.eq.s32.totalorder %s15, 1
    %p54 = por %p52, %p53
    %p55 = scmp.ne.s32.totalorder %s44, %s45
    %p56 = scmp.eq.s32.totalorder %s15, 0
    %p57 = por %p55, %p56
    %p58 = scmp.ne.s32.totalorder %s44, %s45
    %p59 = scmp.eq.s32.totalorder %s16, 1
    %p60 = por %p58, %p59
    %p62 = scmp.ne.s32.totalorder %s45, %s61
    %p63 = scmp.eq.s32.totalorder %s16, 0
    %p64 = por %p62, %p63
    %s66 = sadd.s32 %s65, 1
    %p69 = scmp.eq.s32.totalorder %s10, 1
    %p70 = scmp.ne.s32.totalorder %s65, %s67
    %p71 = scmp.eq.s32.totalorder %s10, 0
    %p72 = por %p70, %p71
    %p73 = scmp.ne.s32.totalorder %s65, %s67
    %p74 = scmp.eq.s32.totalorder %s15, 1
    %p75 = por %p73, %p74
    %p76 = scmp.ne.s32.totalorder %s67, %s68
    %p77 = scmp.eq.s32.totalorder %s15, 0
    %p78 = por %p76, %p77
    %p79 = scmp.ne.s32.totalorder %s67, %s68
    %p80 = scmp.eq.s32.totalorder %s16, 1
    %p81 = por %p79, %p80
    %p83 = scmp.ne.s32.totalorder %s68, %s82
    %p84 = scmp.eq.s32.totalorder %s16, 0
    %p85 = por %p83, %p84
    %s87 = sadd.s32 %s86, 1
    %p90 = scmp.eq.s32.totalorder %s10, 1
    %p91 = scmp.ne.s32.totalorder %s86, %s88
    %p92 = scmp.eq.s32.totalorder %s10, 0
    %p93 = por %p91, %p92
    %p94 = scmp.ne.s32.totalorder %s86, %s88
    %p95 = scmp.eq.s32.totalorder %s15, 1
    %p96 = por %p94, %p95
    %p97 = scmp.ne.s32.totalorder %s88, %s89
    %p98 = scmp.eq.s32.totalorder %s15, 0
    %p99 = por %p97, %p98
    %p100 = scmp.ne.s32.totalorder %s88, %s89
    %p101 = scmp.eq.s32.totalorder %s16, 1
    %p102 = por %p100, %p101
    %p104 = scmp.ne.s32.totalorder %s89, %s103
    %p105 = scmp.eq.s32.totalorder %s16, 0
    %p106 = por %p104, %p105
    %s107 = ssub.s32 %s10, %s17
    %p108 = scmp.eq.s32.totalorder %s107, 0
    %s110 = sadd.s32 %s109, 1
    %s111 = scalar_select %p108, %s109, %s110
    %p114 = pneg %p108
    %p115 = scmp.eq.s32.totalorder %s10, 1
    %p116 = por %p114, %p115
    %p117 = scmp.ne.s32.totalorder %s109, %s112
    %p118 = scmp.eq.s32.totalorder %s10, 0
    %p119 = por %p117, %p118
    %p120 = scmp.ne.s32.totalorder %s109, %s112
    %p121 = scmp.eq.s32.totalorder %s15, 1
    %p122 = por %p120, %p121
    %p123 = scmp.ne.s32.totalorder %s112, %s113
    %p124 = scmp.eq.s32.totalorder %s15, 0
    %p125 = por %p123, %p124
    %p126 = scmp.ne.s32.totalorder %s112, %s113
    %p127 = scmp.eq.s32.totalorder %s16, 1
    %p128 = por %p126, %p127
    %p130 = scmp.ne.s32.totalorder %s113, %s129
    %p131 = scmp.eq.s32.totalorder %s16, 0
    %p132 = por %p130, %p131
    %p133 = scmp.le.s32.totalorder 1, %s10
    %p134 = scmp.lt.s32.totalorder %s10, 3
    %p135 = pnand %p133, %p134
    %p136 = pneg %p135
    // Predicated region
    $region9: #{generator_forward.10} parent=5 // pred_check
      _
    $region10: #{generator_forward.10} parent=5 // pred_check_branch
      %138 = sbr.rel (%p135) target = $region12
    $region11: #{generator_forward.10} parent=5 // pred_region
      %s139 = ssub.s32 %s10, 1
      // Predicated region
      $region13: #{generator_forward.10} parent=11 // pred_check
        %p140 = pneg %p31
      $region14: #{generator_forward.10} parent=11 // pred_check_branch
        %142 = sbr.rel (%p140) target = $region16
      $region15: #{generator_forward.10} parent=11 // pred_region
        _
      $region16: #{generator_forward.10} parent=11 // pred_fallthru
        _
      // Predicated region
      $region17: #{generator_forward.10} parent=11 // pred_check
        %p143 = pneg %p78
      $region18: #{generator_forward.10} parent=11 // pred_check_branch
        %145 = sbr.rel (%p143) target = $region20
      $region19: #{generator_forward.10} parent=11 // pred_region
        _
      $region20: #{generator_forward.10} parent=11 // pred_fallthru
        _
      // Predicated region
      $region21: #{generator_forward.10} parent=11 // pred_check
        %p146 = pneg %p99
      $region22: #{generator_forward.10} parent=11 // pred_check_branch
        %148 = sbr.rel (%p146) target = $region24
      $region23: #{generator_forward.10} parent=11 // pred_region
        _
      $region24: #{generator_forward.10} parent=11 // pred_fallthru
        _
    $region12: #{generator_forward.10} parent=5 // pred_fallthru
      _
    %p149 = scmp.lt.s32.totalorder %s10, 2
    // Predicated region
    $region25: #{generator_forward.10} parent=5 // pred_check
      %p150 = pneg %p149
    $region26: #{generator_forward.10} parent=5 // pred_check_branch
      %152 = sbr.rel (%p150) target = $region28
    $region27: #{generator_forward.10} parent=5 // pred_region
      // Predicated region
      $region29: #{generator_forward.10} parent=27 // pred_check
        %p153 = pneg %p51
      $region30: #{generator_forward.10} parent=27 // pred_check_branch
        %155 = sbr.rel (%p153) target = $region32
      $region31: #{generator_forward.10} parent=27 // pred_region
        %p156 = scmp.lt.s32.totalorder %s10, 1
        %s157 = scalar_select %p156, %s10, 1
        %s158 = smul.addr %s157, 2
        %s159 = smul.addr %s158, 4
        %s160 = scalar_lea.vmem %s1, %s159
      $region32: #{generator_forward.10} parent=27 // pred_fallthru
        _
    $region28: #{generator_forward.10} parent=5 // pred_fallthru
      _
    %p161 = scmp.le.s32.totalorder 1, %s10
    %p162 = scmp.lt.s32.totalorder %s10, 3
    %p163 = pnand %p161, %p162
    %p164 = pneg %p163
    // Predicated region
    $region33: #{generator_forward.10} parent=5 // pred_check
      _
    $region34: #{generator_forward.10} parent=5 // pred_check_branch
      %166 = sbr.rel (%p163) target = $region36
    $region35: #{generator_forward.10} parent=5 // pred_region
      %s167 = ssub.s32 %s10, 1
      %p168 = pneg %p31
      %p169 = pneg %p28
      %p170 = scmp.lt.s32.totalorder %s15, 1
      %s171 = scalar_select %p170, %s15, 1
      %s172 = smul.addr %s171, 2
      %s173 = smul.addr %s172, 4
      %s174 = scalar_lea.vmem %s1, %s173
      %p175 = pneg %p57
      %p176 = pneg %p54
      %p177 = pneg %p78
      %p178 = pneg %p75
      %p179 = pneg %p99
      %p180 = pneg %p96
      %p181 = pneg %p125
      %p182 = pneg %p122
      %p183 = scmp.lt.s32.totalorder %s15, 1
      %s184 = scalar_select %p183, %s15, 1
      %s185 = smul.addr %s184, 2
      %s186 = smul.addr %s185, 8
      %s187 = scalar_lea.vmem %s4, %s186
      %p188 = scmp.lt.s32.totalorder %s15, 1
      %s189 = scalar_select %p188, %s15, 1
      %s190 = smul.addr %s189, 2
      %s191 = smul.addr %s190, 4
      %s192 = scalar_lea.vmem %s1, %s191
      %p193 = scmp.lt.s32.totalorder %s15, 1
      %s194 = scalar_select %p193, %s15, 1
      %s195 = smul.addr %s194, 2
      %s196 = smul.addr %s195, 8
      %s197 = scalar_lea.vmem %s4, %s196
      %v198 = vld [vmem:[%s0] sm:$0xff]
      %v199 = vld [vmem:[%s0 + $0x8] sm:$0xff]
      %vm200 = vcmp.ge.f32.partialorder %v198, 0.0
      %vm201 = vcmp.ge.f32.partialorder %v199, 0.0
      %v202 = vmul.f32 %v198, 0.01
      %v203 = vmul.f32 %v199, 0.01
      %v204 = vsel %vm200, %v198, %v202
      %v205 = vsel %vm201, %v199, %v203
      %v206 = vadd.f32 %v204, %v205
      %v207 = vrot.slane %v206, 4
      %v208 = vadd.f32 %v206, %v207
      %v209 = vrot.slane %v208, 2
      %v210 = vadd.f32 %v208, %v209
      %v211 = vrot.slane %v210, 1
      %v212 = vadd.f32 %v210, %v211
      %v213 = vmul.f32 %v212, 0.0625
      %v214 = vmul.f32 %v204, %v204
      %v215 = vmul.f32 %v205, %v205
      %v216 = vadd.f32 %v214, %v215
      %v217 = vrot.slane %v216, 4
      %v218 = vadd.f32 %v216, %v217
      %v219 = vrot.slane %v218, 2
      %v220 = vadd.f32 %v218, %v219
      %v221 = vrot.slane %v220, 1
      %v222 = vadd.f32 %v220, %v221
      %v223 = vmul.f32 %v222, 0.0625
      %v224 = vmul.f32 %v213, %v213
      %v225 = vsub.f32 %v223, %v224
      %v226 = vmax.f32 %v225, 0.0
      %v227 = vsub.f32 %v204, %v213
      %v228 = vsub.f32 %v205, %v213
      %v229 = vadd.f32 %v226, 1e-05
      %v230 = vrsqrt.pop %v229
      %v231 = vmul.f32 %v230, %v229
      %v232 = vmul.f32 %v231, %v230
      %v233 = vmul.f32 0.5, %v232
      %v234 = vsub.f32 1.5, %v233
      %v235 = vmul.f32 %v230, %v234
      %vm236 = vweird.f32 %v229
      %vm237 = vweird.f32 %v230
      %vm238 = vmor %vm236, %vm237
      %v239 = vsel %vm238, %v230, %v235
      %v240 = vmul.f32 %v227, %v239
      %v241 = vmul.f32 %v228, %v239
      %v242 = vld [vmem:[%s192] sm:$0xf]
      %v243 = vld [vmem:[%s192 + $0x4] sm:$0xf]
      %v244 = vld [vmem:[%s2] sm:$0xff]
      %v245 = vld [vmem:[%s2 + $0x8] sm:$0xff]
      %v246 = vld [vmem:[%s2 + $0x10] sm:$0xff]
      %v247 = vld [vmem:[%s2 + $0x18] sm:$0xff]
      %v248 = vld [vmem:[%s2 + $0x20] sm:$0xff]
      %v249 = vld [vmem:[%s2 + $0x28] sm:$0xff]
      %v250 = vld [vmem:[%s2 + $0x30] sm:$0xff]
      %v251 = vld [vmem:[%s2 + $0x38] sm:$0xff]
      %v252 = vld [vmem:[%s2 + $0x40] sm:$0xff]
      %v253 = vld [vmem:[%s2 + $0x48] sm:$0xff]
      %v254 = vld [vmem:[%s2 + $0x50] sm:$0xff]
      %v255 = vld [vmem:[%s2 + $0x58] sm:$0xff]
      %v256 = vld [vmem:[%s2 + $0x60] sm:$0xff]
      %v257 = vld [vmem:[%s2 + $0x68] sm:$0xff]
      %v258 = vld [vmem:[%s2 + $0x70] sm:$0xff]
      %v259 = vld [vmem:[%s2 + $0x78] sm:$0xff]
      %v260 = vld [vmem:[%s3] sm:$0x3]
      %v262 = vperm.slane %v260, 0
      %v263 = vperm.slane %v260, 1
      %v268 = vunpack.c.l.b16 %v242
      %v269 = vunpack.c.l.b16 %v243
      %v270 = vpack.c.b16 %v269, %v268
      %v288 = vunpack.c.l.b16 %v244
      %v289 = vunpack.c.h.b16 %v244
      %v290 = vunpack.c.l.b16 %v245
      %v291 = vunpack.c.h.b16 %v245
      %v292 = vunpack.c.l.b16 %v246
      %v293 = vunpack.c.h.b16 %v246
      %v294 = vunpack.c.l.b16 %v247
      %v295 = vunpack.c.h.b16 %v247
      %v296 = vunpack.c.l.b16 %v248
      %v297 = vunpack.c.h.b16 %v248
      %v298 = vunpack.c.l.b16 %v249
      %v299 = vunpack.c.h.b16 %v249
      %v300 = vunpack.c.l.b16 %v250
      %v301 = vunpack.c.h.b16 %v250
      %v302 = vunpack.c.l.b16 %v251
      %v303 = vunpack.c.h.b16 %v251
      %v304 = vunpack.c.l.b16 %v252
      %v305 = vunpack.c.h.b16 %v252
      %v306 = vunpack.c.l.b16 %v253
      %v307 = vunpack.c.h.b16 %v253
      %v308 = vunpack.c.l.b16 %v254
      %v309 = vunpack.c.h.b16 %v254
      %v310 = vunpack.c.l.b16 %v255
      %v311 = vunpack.c.h.b16 %v255
      %v312 = vunpack.c.l.b16 %v256
      %v313 = vunpack.c.h.b16 %v256
      %v314 = vunpack.c.l.b16 %v257
      %v315 = vunpack.c.h.b16 %v257
      %v316 = vunpack.c.l.b16 %v258
      %v317 = vunpack.c.h.b16 %v258
      %v318 = vunpack.c.l.b16 %v259
      %v319 = vunpack.c.h.b16 %v259
      %v320 = vpack.c.b16 %v290, %v288
      %v321 = vpack.c.b16 %v291, %v289
      %v322 = vpack.c.b16 %v294, %v292
      %v323 = vpack.c.b16 %v295, %v293
      %v324 = vpack.c.b16 %v298, %v296
      %v325 = vpack.c.b16 %v299, %v297
      %v326 = vpack.c.b16 %v302, %v300
      %v327 = vpack.c.b16 %v303, %v301
      %v328 = vpack.c.b16 %v306, %v304
      %v329 = vpack.c.b16 %v307, %v305
      %v330 = vpack.c.b16 %v310, %v308
      %v331 = vpack.c.b16 %v311, %v309
      %v332 = vpack.c.b16 %v314, %v312
      %v333 = vpack.c.b16 %v315, %v313
      %v334 = vpack.c.b16 %v318, %v316
      %v335 = vpack.c.b16 %v319, %v317
      %352 = vmatpush.bf16.msra.mxu0 %v334
      %353 = vmatpush.bf16.msra.mxu0 %v332
      %354 = vmatpush.bf16.msra.mxu0 %v330
      %355 = vmatpush.bf16.msra.mxu0 %v328
      %356 = vmatpush.bf16.msra.mxu0 %v326
      %357 = vmatpush.bf16.msra.mxu0 %v324
      %358 = vmatpush.bf16.msra.mxu0 %v322
      %359 = vmatpush.bf16.msra.mxu0 %v320
      %360 = vmatmul.bf16.gmra.mxu0 %v270
      %v361 = vpop.f32.mrf.mxu0
      %v362 = vadd.f32 %v262, %v361
      %v363 = vpop.f32.mrf.mxu0
      %v364 = vadd.f32 %v262, %v363
      %365 = vdwg.mxu0
      %366 = vmatpush.bf16.msra.mxu0 %v335
      %367 = vmatpush.bf16.msra.mxu0 %v333
      %368 = vmatpush.bf16.msra.mxu0 %v331
      %369 = vmatpush.bf16.msra.mxu0 %v329
      %370 = vmatpush.bf16.msra.mxu0 %v327
      %371 = vmatpush.bf16.msra.mxu0 %v325
      %372 = vmatpush.bf16.msra.mxu0 %v323
      %373 = vmatpush.bf16.msra.mxu0 %v321
      %374 = vmatmul.bf16.gmra.mxu0 %v270
      %v375 = vpop.f32.mrf.mxu0
      %v376 = vadd.f32 %v263, %v375
      %v377 = vpop.f32.mrf.mxu0
      %v378 = vadd.f32 %v263, %v377
      %379 = vdwg.mxu0
      %v380 = vmul.f32 %v362, %v240
      %v381 = vmul.f32 %v364, %v241
      %v382 = vadd.f32 %v380, %v376
      %v383 = vadd.f32 %v381, %v378
      %384 = vst [vmem:[%s197] sm:$0xff] %v382
      %385 = vst [vmem:[%s197 + $0x8] sm:$0xff] %v383
      %p386 = scmp.lt.s32.totalorder %s15, 1
      %s387 = scalar_select %p386, %s15, 1
      %s388 = smul.addr %s387, 2
      %s389 = smul.addr %s388, 8
      %s390 = scalar_lea.vmem %s4, %s389
      // Predicated region
      $region37: #{generator_forward.10} parent=35 // pred_check
        %p391 = pneg %p122
      $region38: #{generator_forward.10} parent=35 // pred_check_branch
        %393 = sbr.rel (%p391) target = $region40
      $region39: #{generator_forward.10} parent=35 // pred_region
        _
      $region40: #{generator_forward.10} parent=35 // pred_fallthru
        _
    $region36: #{generator_forward.10} parent=5 // pred_fallthru
      _
    %p394 = scmp.le.s32.totalorder 2, %s10
    // Predicated region
    $region41: #{generator_forward.10} parent=5 // pred_check
      %p395 = pneg %p394
    $region42: #{generator_forward.10} parent=5 // pred_check_branch
      %397 = sbr.rel (%p395) target = $region44
    $region43: #{generator_forward.10} parent=5 // pred_region
      %s398 = ssub.s32 %s10, 2
      // Predicated region
      $region45: #{generator_forward.10} parent=43 // pred_check
        %p399 = pneg %p128
      $region46: #{generator_forward.10} parent=43 // pred_check_branch
        %401 = sbr.rel (%p399) target = $region48
      $region47: #{generator_forward.10} parent=43 // pred_region
        %p402 = scmp.lt.s32.totalorder %s16, 1
        %s403 = scalar_select %p402, %s16, 1
        %s404 = smul.addr %s403, 2
        %s405 = smul.addr %s404, 8
        %s406 = scalar_lea.vmem %s4, %s405
      $region48: #{generator_forward.10} parent=43 // pred_fallthru
        _
    $region44: #{generator_forward.10} parent=5 // pred_fallthru
      _
  $region6: #{generator_forward.10} parent=0 // loop_footer
    %s14 = sadd.s32 1, %s10
  $region7: #{generator_forward.10} parent=0 // loop_footer_branch
    %9 = sbr.rel target = $region3
  $region8: #{generator_forward.10} parent=0 // loop_exit
    _

// kernel: generator_forward.12
$region0: #{generator_forward.12}
  #allocation0 [shape = 'u32[]', space=smem, size = 0x4, offset = 0x4, fixed_abs, tag = 'smem constant byte address 0x4 - core index']
  #allocation1 [shape = 'u32[72,128]{1,0:T(1,128)}', space=vmem, size = 0x9000, scoped, tag = 'internal scratch']
  %s0 = inlined_call_operand.vmem [shape: f32[2,16,128], index: 0, kind: input, shape index: {}]
  %s1 = inlined_call_operand.vmem [shape: bf16[2,16,128], index: 1, kind: input, shape index: {}]
  %s2 = inlined_call_operand.vmem [shape: bf16[128,256], index: 2, kind: input, shape index: {}]
  %s3 = inlined_call_operand.vmem [shape: f32[1,256], index: 3, kind: input, shape index: {}]
  %s4 = inlined_call_operand.vmem [shape: f32[2,16,128], index: 4, kind: output, shape index: {0}]
  %s5 = inlined_call_operand.vmem [shape: f32[2,1,128], index: 5, kind: output, shape index: {1}]
  %6 = xla_tuple %s4, %s5
  %s7 = sld [smem:[#allocation0]]
  $region57: #{generator_forward.12} parent=0
    _
  %s9 = ssub.s32 1, %s7
  %s10 = scalar_select 0, %s9, %s7
  loop: start=0, step=1, limit=4
  $region2: #{generator_forward.12} parent=0 // loop_pre_header
    _
  $region3: #{generator_forward.12} parent=0 // loop_header
    %s12 = sphi 0, %s16
    %p13 = scmp.ge.s32.totalorder %s12, 4
    %s22 = sphi 0, %s24
    %s25 = sphi 0, %s22
    %s26 = sphi 0, %s25
    %s42 = sphi 0, %s26
    %s48 = sphi 0, %s50
    %s51 = sphi 0, %s48
    %s52 = sphi 0, %s51
    %s68 = sphi 0, %s52
    %s72 = sphi 0, %s72
    %s74 = sphi 0, %s72
    %s75 = sphi 0, %s74
    %s89 = sphi 0, %s75
    %s93 = sphi 0, %s93
    %s95 = sphi 0, %s93
    %s96 = sphi 0, %s95
    %s110 = sphi 0, %s96
    %s116 = sphi 0, %s118
    %s119 = sphi 0, %s116
    %s120 = sphi 0, %s119
    %s136 = sphi 0, %s120
    %s142 = sphi 0, %s144
    %s145 = sphi 0, %s142
    %s146 = sphi 0, %s145
    %s162 = sphi 0, %s146
  $region4: #{generator_forward.12} parent=0 // loop_header_branch
    %15 = sbr.rel (%p13) target = $region8
  $region5: #{generator_forward.12} parent=0 // loop_body
    %s17 = ssub.s32 %s12, 1
    %s18 = ssub.s32 %s12, 2
    %s19 = sadd.s32 %s12, 1
    %s20 = ssub.s32 %s12, %s19
    %p21 = scmp.eq.s32.totalorder %s20, 0
    %s23 = sadd.s32 %s22, 1
    %s24 = scalar_select %p21, %s22, %s23
    %p27 = pneg %p21
    %p28 = scmp.eq.s32.totalorder %s12, 1
    %p29 = por %p27, %p28
    %p30 = scmp.ne.s32.totalorder %s22, %s25
    %p31 = scmp.eq.s32.totalorder %s12, 0
    %p32 = por %p30, %p31
    %p33 = scmp.ne.s32.totalorder %s22, %s25
    %p34 = scmp.eq.s32.totalorder %s17, 1
    %p35 = por %p33, %p34
    %p36 = scmp.ne.s32.totalorder %s25, %s26
    %p37 = scmp.eq.s32.totalorder %s17, 0
    %p38 = por %p36, %p37
    %p39 = scmp.ne.s32.totalorder %s25, %s26
    %p40 = scmp.eq.s32.totalorder %s18, 1
    %p41 = por %p39, %p40
    %p43 = scmp.ne.s32.totalorder %s26, %s42
    %p44 = scmp.eq.s32.totalorder %s18, 0
    %p45 = por %p43, %p44
    %s46 = ssub.s32 %s12, %s19
    %p47 = scmp.eq.s32.totalorder %s46, 0
    %s49 = sadd.s32 %s48, 1
    %s50 = scalar_select %p47, %s48, %s49
    %p53 = pneg %p47
    %p54 = scmp.eq.s32.totalorder %s12, 1
    %p55 = por %p53, %p54
    %p56 = scmp.ne.s32.totalorder %s48, %s51
    %p57 = scmp.eq.s32.totalorder %s12, 0
    %p58 = por %p56, %p57
    %p59 = scmp.ne.s32.totalorder %s48, %s51
    %p60 = scmp.eq.s32.totalorder %s17, 1
    %p61 = por %p59, %p60
    %p62 = scmp.ne.s32.totalorder %s51, %s52
    %p63 = scmp.eq.s32.totalorder %s17, 0
    %p64 = por %p62, %p63
    %p65 = scmp.ne.s32.totalorder %s51, %s52
    %p66 = scmp.eq.s32.totalorder %s18, 1
    %p67 = por %p65, %p66
    %p69 = scmp.ne.s32.totalorder %s52, %s68
    %p70 = scmp.eq.s32.totalorder %s18, 0
    %p71 = por %p69, %p70
    %s73 = sadd.s32 %s72, 1
    %p76 = scmp.eq.s32.totalorder %s12, 1
    %p77 = scmp.ne.s32.totalorder %s72, %s74
    %p78 = scmp.eq.s32.totalorder %s12, 0
    %p79 = por %p77, %p78
    %p80 = scmp.ne.s32.totalorder %s72, %s74
    %p81 = scmp.eq.s32.totalorder %s17, 1
    %p82 = por %p80, %p81
    %p83 = scmp.ne.s32.totalorder %s74, %s75
    %p84 = scmp.eq.s32.totalorder %s17, 0
    %p85 = por %p83, %p84
    %p86 = scmp.ne.s32.totalorder %s74, %s75
    %p87 = scmp.eq.s32.totalorder %s18, 1
    %p88 = por %p86, %p87
    %p90 = scmp.ne.s32.totalorder %s75, %s89
    %p91 = scmp.eq.s32.totalorder %s18, 0
    %p92 = por %p90, %p91
    %s94 = sadd.s32 %s93, 1
    %p97 = scmp.eq.s32.totalorder %s12, 1
    %p98 = scmp.ne.s32.totalorder %s93, %s95
    %p99 = scmp.eq.s32.totalorder %s12, 0
    %p100 = por %p98, %p99
    %p101 = scmp.ne.s32.totalorder %s93, %s95
    %p102 = scmp.eq.s32.totalorder %s17, 1
    %p103 = por %p101, %p102
    %p104 = scmp.ne.s32.totalorder %s95, %s96
    %p105 = scmp.eq.s32.totalorder %s17, 0
    %p106 = por %p104, %p105
    %p107 = scmp.ne.s32.totalorder %s95, %s96
    %p108 = scmp.eq.s32.totalorder %s18, 1
    %p109 = por %p107, %p108
    %p111 = scmp.ne.s32.totalorder %s96, %s110
    %p112 = scmp.eq.s32.totalorder %s18, 0
    %p113 = por %p111, %p112
    %s114 = ssub.s32 %s12, %s19
    %p115 = scmp.eq.s32.totalorder %s114, 0
    %s117 = sadd.s32 %s116, 1
    %s118 = scalar_select %p115, %s116, %s117
    %p121 = pneg %p115
    %p122 = scmp.eq.s32.totalorder %s12, 1
    %p123 = por %p121, %p122
    %p124 = scmp.ne.s32.totalorder %s116, %s119
    %p125 = scmp.eq.s32.totalorder %s12, 0
    %p126 = por %p124, %p125
    %p127 = scmp.ne.s32.totalorder %s116, %s119
    %p128 = scmp.eq.s32.totalorder %s17, 1
    %p129 = por %p127, %p128
    %p130 = scmp.ne.s32.totalorder %s119, %s120
    %p131 = scmp.eq.s32.totalorder %s17, 0
    %p132 = por %p130, %p131
    %p133 = scmp.ne.s32.totalorder %s119, %s120
    %p134 = scmp.eq.s32.totalorder %s18, 1
    %p135 = por %p133, %p134
    %p137 = scmp.ne.s32.totalorder %s120, %s136
    %p138 = scmp.eq.s32.totalorder %s18, 0
    %p139 = por %p137, %p138
    %s140 = ssub.s32 %s12, %s19
    %p141 = scmp.eq.s32.totalorder %s140, 0
    %s143 = sadd.s32 %s142, 1
    %s144 = scalar_select %p141, %s142, %s143
    %p147 = pneg %p141
    %p148 = scmp.eq.s32.totalorder %s12, 1
    %p149 = por %p147, %p148
    %p150 = scmp.ne.s32.totalorder %s142, %s145
    %p151 = scmp.eq.s32.totalorder %s12, 0
    %p152 = por %p150, %p151
    %p153 = scmp.ne.s32.totalorder %s142, %s145
    %p154 = scmp.eq.s32.totalorder %s17, 1
    %p155 = por %p153, %p154
    %p156 = scmp.ne.s32.totalorder %s145, %s146
    %p157 = scmp.eq.s32.totalorder %s17, 0
    %p158 = por %p156, %p157
    %p159 = scmp.ne.s32.totalorder %s145, %s146
    %p160 = scmp.eq.s32.totalorder %s18, 1
    %p161 = por %p159, %p160
    %p163 = scmp.ne.s32.totalorder %s146, %s162
    %p164 = scmp.eq.s32.totalorder %s18, 0
    %p165 = por %p163, %p164
    %p166 = scmp.le.s32.totalorder 1, %s12
    %p167 = scmp.lt.s32.totalorder %s12, 3
    %p168 = pnand %p166, %p167
    %p169 = pneg %p168
    // Predicated region
    $region9: #{generator_forward.12} parent=5 // pred_check
      _
    $region10: #{generator_forward.12} parent=5 // pred_check_branch
      %171 = sbr.rel (%p168) target = $region12
    $region11: #{generator_forward.12} parent=5 // pred_region
      %s172 = ssub.s32 %s12, 1
      // Predicated region
      $region13: #{generator_forward.12} parent=11 // pred_check
        %p173 = pneg %p85
      $region14: #{generator_forward.12} parent=11 // pred_check_branch
        %175 = sbr.rel (%p173) target = $region16
      $region15: #{generator_forward.12} parent=11 // pred_region
        _
      $region16: #{generator_forward.12} parent=11 // pred_fallthru
        _
      // Predicated region
      $region17: #{generator_forward.12} parent=11 // pred_check
        %p176 = pneg %p106
      $region18: #{generator_forward.12} parent=11 // pred_check_branch
        %178 = sbr.rel (%p176) target = $region20
      $region19: #{generator_forward.12} parent=11 // pred_region
        _
      $region20: #{generator_forward.12} parent=11 // pred_fallthru
        _
    $region12: #{generator_forward.12} parent=5 // pred_fallthru
      _
    %p179 = scmp.lt.s32.totalorder %s12, 2
    // Predicated region
    $region21: #{generator_forward.12} parent=5 // pred_check
      %p180 = pneg %p179
    $region22: #{generator_forward.12} parent=5 // pred_check_branch
      %182 = sbr.rel (%p180) target = $region24
    $region23: #{generator_forward.12} parent=5 // pred_region
      // Predicated region
      $region25: #{generator_forward.12} parent=23 // pred_check
        %p183 = pneg %p32
      $region26: #{generator_forward.12} parent=23 // pred_check_branch
        %185 = sbr.rel (%p183) target = $region28
      $region27: #{generator_forward.12} parent=23 // pred_region
        %p186 = scmp.lt.s32.totalorder %s12, 1
        %s187 = scalar_select %p186, %s12, 1
        %s188 = smul.addr %s187, 2
        %s189 = smul.addr %s188, 8
        %s190 = scalar_lea.vmem %s0, %s189
      $region28: #{generator_forward.12} parent=23 // pred_fallthru
        _
      // Predicated region
      $region29: #{generator_forward.12} parent=23 // pred_check
        %p191 = pneg %p58
      $region30: #{generator_forward.12} parent=23 // pred_check_branch
        %193 = sbr.rel (%p191) target = $region32
      $region31: #{generator_forward.12} parent=23 // pred_region
        %p194 = scmp.lt.s32.totalorder %s12, 1
        %s195 = scalar_select %p194, %s12, 1
        %s196 = smul.addr %s195, 2
        %s197 = smul.addr %s196, 4
        %s198 = scalar_lea.vmem %s1, %s197
      $region32: #{generator_forward.12} parent=23 // pred_fallthru
        _
    $region24: #{generator_forward.12} parent=5 // pred_fallthru
      _
    %p199 = scmp.le.s32.totalorder 1, %s12
    %p200 = scmp.lt.s32.totalorder %s12, 3
    %p201 = pnand %p199, %p200
    %p202 = pneg %p201
    // Predicated region
    $region33: #{generator_forward.12} parent=5 // pred_check
      _
    $region34: #{generator_forward.12} parent=5 // pred_check_branch
      %204 = sbr.rel (%p201) target = $region36
    $region35: #{generator_forward.12} parent=5 // pred_region
      %s205 = ssub.s32 %s12, 1
      %p206 = scmp.lt.s32.totalorder %s17, 1
      %s207 = scalar_select %p206, %s17, 1
      %s208 = smul.addr %s207, 2
      %s209 = smul.addr %s208, 8
      %s210 = scalar_lea.vmem %s0, %s209
      %p211 = pneg %p38
      %p212 = pneg %p35
      %p213 = scmp.lt.s32.totalorder %s17, 1
      %s214 = scalar_select %p213, %s17, 1
      %s215 = smul.addr %s214, 2
      %s216 = smul.addr %s215, 4
      %s217 = scalar_lea.vmem %s1, %s216
      %p218 = pneg %p64
      %p219 = pneg %p61
      %p220 = pneg %p85
      %p221 = pneg %p82
      %p222 = pneg %p106
      %p223 = pneg %p103
      %p224 = pneg %p132
      %p225 = pneg %p129
      %p226 = scmp.lt.s32.totalorder %s17, 1
      %s227 = scalar_select %p226, %s17, 1
      %s228 = smul.addr %s227, 2
      %s229 = smul.addr %s228, 8
      %s230 = scalar_lea.vmem %s4, %s229
      %p231 = pneg %p158
      %p232 = pneg %p155
      %p233 = scmp.lt.s32.totalorder %s17, 1
      %s234 = scalar_select %p233, %s17, 1
      %s235 = scalar_lea.vmem %s5, %s234
      %p236 = scmp.lt.s32.totalorder %s17, 1
      %s237 = scalar_select %p236, %s17, 1
      %s238 = smul.addr %s237, 2
      %s239 = smul.addr %s238, 8
      %s240 = scalar_lea.vmem %s0, %s239
      %p241 = scmp.lt.s32.totalorder %s17, 1
      %s242 = scalar_select %p241, %s17, 1
      %s243 = smul.addr %s242, 2
      %s244 = smul.addr %s243, 4
      %s245 = scalar_lea.vmem %s1, %s244
      %p246 = scmp.lt.s32.totalorder %s17, 1
      %s247 = scalar_select %p246, %s17, 1
      %s248 = smul.addr %s247, 2
      %s249 = smul.addr %s248, 8
      %s250 = scalar_lea.vmem %s4, %s249
      %p251 = scmp.lt.s32.totalorder %s17, 1
      %s252 = scalar_select %p251, %s17, 1
      %s253 = scalar_lea.vmem %s5, %s252
      %v254 = vld [vmem:[%s240] sm:$0xff]
      %v255 = vld [vmem:[%s240 + $0x8] sm:$0xff]
      %vm256 = vcmp.ge.f32.partialorder %v254, 0.0
      %vm257 = vcmp.ge.f32.partialorder %v255, 0.0
      %v258 = vmul.f32 %v254, 0.01
      %v259 = vmul.f32 %v255, 0.01
      %v260 = vsel %vm256, %v254, %v258
      %v261 = vsel %vm257, %v255, %v259
      %v262 = vadd.f32 %v260, %v261
      %v263 = vrot.slane %v262, 4
      %v264 = vadd.f32 %v262, %v263
      %v265 = vrot.slane %v264, 2
      %v266 = vadd.f32 %v264, %v265
      %v267 = vrot.slane %v266, 1
      %v268 = vadd.f32 %v266, %v267
      %v269 = vmul.f32 %v268, 0.0625
      %v270 = vmul.f32 %v260, %v260
      %v271 = vmul.f32 %v261, %v261
      %v272 = vadd.f32 %v270, %v271
      %v273 = vrot.slane %v272, 4
      %v274 = vadd.f32 %v272, %v273
      %v275 = vrot.slane %v274, 2
      %v276 = vadd.f32 %v274, %v275
      %v277 = vrot.slane %v276, 1
      %v278 = vadd.f32 %v276, %v277
      %v279 = vmul.f32 %v278, 0.0625
      %v280 = vmul.f32 %v269, %v269
      %v281 = vsub.f32 %v279, %v280
      %v282 = vmax.f32 %v281, 0.0
      %v283 = vsub.f32 %v260, %v269
      %v284 = vsub.f32 %v261, %v269
      %v285 = vadd.f32 %v282, 1e-05
      %v286 = vrsqrt.pop %v285
      %v287 = vmul.f32 %v286, %v285
      %v288 = vmul.f32 %v287, %v286
      %v289 = vmul.f32 0.5, %v288
      %v290 = vsub.f32 1.5, %v289
      %v291 = vmul.f32 %v286, %v290
      %vm292 = vweird.f32 %v285
      %vm293 = vweird.f32 %v286
      %vm294 = vmor %vm292, %vm293
      %v295 = vsel %vm294, %v286, %v291
      %v296 = vmul.f32 %v283, %v295
      %v297 = vmul.f32 %v284, %v295
      %v298 = vld [vmem:[%s245] sm:$0xf]
      %v299 = vld [vmem:[%s245 + $0x4] sm:$0xf]
      %v300 = vld [vmem:[%s2] sm:$0xff]
      %v301 = vld [vmem:[%s2 + $0x8] sm:$0xff]
      %v302 = vld [vmem:[%s2 + $0x10] sm:$0xff]
      %v303 = vld [vmem:[%s2 + $0x18] sm:$0xff]
      %v304 = vld [vmem:[%s2 + $0x20] sm:$0xff]
      %v305 = vld [vmem:[%s2 + $0x28] sm:$0xff]
      %v306 = vld [vmem:[%s2 + $0x30] sm:$0xff]
      %v307 = vld [vmem:[%s2 + $0x38] sm:$0xff]
      %v308 = vld [vmem:[%s2 + $0x40] sm:$0xff]
      %v309 = vld [vmem:[%s2 + $0x48] sm:$0xff]
      %v310 = vld [vmem:[%s2 + $0x50] sm:$0xff]
      %v311 = vld [vmem:[%s2 + $0x58] sm:$0xff]
      %v312 = vld [vmem:[%s2 + $0x60] sm:$0xff]
      %v313 = vld [vmem:[%s2 + $0x68] sm:$0xff]
      %v314 = vld [vmem:[%s2 + $0x70] sm:$0xff]
      %v315 = vld [vmem:[%s2 + $0x78] sm:$0xff]
      %v316 = vld [vmem:[%s3] sm:$0x3]
      %v318 = vperm.slane %v316, 0
      %v319 = vperm.slane %v316, 1
      %v324 = vunpack.c.l.b16 %v298
      %v325 = vunpack.c.l.b16 %v299
      %v326 = vpack.c.b16 %v325, %v324
      %v344 = vunpack.c.l.b16 %v300
      %v345 = vunpack.c.h.b16 %v300
      %v346 = vunpack.c.l.b16 %v301
      %v347 = vunpack.c.h.b16 %v301
      %v348 = vunpack.c.l.b16 %v302
      %v349 = vunpack.c.h.b16 %v302
      %v350 = vunpack.c.l.b16 %v303
      %v351 = vunpack.c.h.b16 %v303
      %v352 = vunpack.c.l.b16 %v304
      %v353 = vunpack.c.h.b16 %v304
      %v354 = vunpack.c.l.b16 %v305
      %v355 = vunpack.c.h.b16 %v305
      %v356 = vunpack.c.l.b16 %v306
      %v357 = vunpack.c.h.b16 %v306
      %v358 = vunpack.c.l.b16 %v307
      %v359 = vunpack.c.h.b16 %v307
      %v360 = vunpack.c.l.b16 %v308
      %v361 = vunpack.c.h.b16 %v308
      %v362 = vunpack.c.l.b16 %v309
      %v363 = vunpack.c.h.b16 %v309
      %v364 = vunpack.c.l.b16 %v310
      %v365 = vunpack.c.h.b16 %v310
      %v366 = vunpack.c.l.b16 %v311
      %v367 = vunpack.c.h.b16 %v311
      %v368 = vunpack.c.l.b16 %v312
      %v369 = vunpack.c.h.b16 %v312
      %v370 = vunpack.c.l.b16 %v313
      %v371 = vunpack.c.h.b16 %v313
      %v372 = vunpack.c.l.b16 %v314
      %v373 = vunpack.c.h.b16 %v314
      %v374 = vunpack.c.l.b16 %v315
      %v375 = vunpack.c.h.b16 %v315
      %v376 = vpack.c.b16 %v346, %v344
      %v377 = vpack.c.b16 %v347, %v345
      %v378 = vpack.c.b16 %v350, %v348
      %v379 = vpack.c.b16 %v351, %v349
      %v380 = vpack.c.b16 %v354, %v352
      %v381 = vpack.c.b16 %v355, %v353
      %v382 = vpack.c.b16 %v358, %v356
      %v383 = vpack.c.b16 %v359, %v357
      %v384 = vpack.c.b16 %v362, %v360
      %v385 = vpack.c.b16 %v363, %v361
      %v386 = vpack.c.b16 %v366, %v364
      %v387 = vpack.c.b16 %v367, %v365
      %v388 = vpack.c.b16 %v370, %v368
      %v389 = vpack.c.b16 %v371, %v369
      %v390 = vpack.c.b16 %v374, %v372
      %v391 = vpack.c.b16 %v375, %v373
      %408 = vmatpush.bf16.msra.mxu0 %v390
      %409 = vmatpush.bf16.msra.mxu0 %v388
      %410 = vmatpush.bf16.msra.mxu0 %v386
      %411 = vmatpush.bf16.msra.mxu0 %v384
      %412 = vmatpush.bf16.msra.mxu0 %v382
      %413 = vmatpush.bf16.msra.mxu0 %v380
      %414 = vmatpush.bf16.msra.mxu0 %v378
      %415 = vmatpush.bf16.msra.mxu0 %v376
      %416 = vmatmul.bf16.gmra.mxu0 %v326
      %v417 = vpop.f32.mrf.mxu0
      %v418 = vadd.f32 %v318, %v417
      %v419 = vpop.f32.mrf.mxu0
      %v420 = vadd.f32 %v318, %v419
      %421 = vdwg.mxu0
      %422 = vmatpush.bf16.msra.mxu0 %v391
      %423 = vmatpush.bf16.msra.mxu0 %v389
      %424 = vmatpush.bf16.msra.mxu0 %v387
      %425 = vmatpush.bf16.msra.mxu0 %v385
      %426 = vmatpush.bf16.msra.mxu0 %v383
      %427 = vmatpush.bf16.msra.mxu0 %v381
      %428 = vmatpush.bf16.msra.mxu0 %v379
      %429 = vmatpush.bf16.msra.mxu0 %v377
      %430 = vmatmul.bf16.gmra.mxu0 %v326
      %v431 = vpop.f32.mrf.mxu0
      %v432 = vadd.f32 %v319, %v431
      %v433 = vpop.f32.mrf.mxu0
      %v434 = vadd.f32 %v319, %v433
      %435 = vdwg.mxu0
      %v436 = vmul.f32 %v418, %v296
      %v437 = vmul.f32 %v420, %v297
      %v438 = vadd.f32 %v436, %v432
      %v439 = vadd.f32 %v437, %v434
      %440 = vst [vmem:[%s250] sm:$0xff] %v438
      %441 = vst [vmem:[%s250 + $0x8] sm:$0xff] %v439
      %v442 = vmax.f32 %v438, %v439
      %v443 = vrot.slane %v442, 4
      %v444 = vmax.f32 %v442, %v443
      %v445 = vrot.slane %v444, 2
      %v446 = vmax.f32 %v444, %v445
      %v447 = vrot.slane %v446, 1
      %v448 = vmax.f32 %v446, %v447
      %449 = vst [vmem:[%s253] sm:$0x1] %v448
      %p450 = scmp.lt.s32.totalorder %s17, 1
      %s451 = scalar_select %p450, %s17, 1
      %s452 = smul.addr %s451, 2
      %s453 = smul.addr %s452, 8
      %s454 = scalar_lea.vmem %s4, %s453
      %p455 = scmp.lt.s32.totalorder %s17, 1
      %s456 = scalar_select %p455, %s17, 1
      %s457 = scalar_lea.vmem %s5, %s456
      // Predicated region
      $region37: #{generator_forward.12} parent=35 // pred_check
        %p458 = pneg %p129
      $region38: #{generator_forward.12} parent=35 // pred_check_branch
        %460 = sbr.rel (%p458) target = $region40
      $region39: #{generator_forward.12} parent=35 // pred_region
        _
      $region40: #{generator_forward.12} parent=35 // pred_fallthru
        _
      // Predicated region
      $region41: #{generator_forward.12} parent=35 // pred_check
        %p461 = pneg %p155
      $region42: #{generator_forward.12} parent=35 // pred_check_branch
        %463 = sbr.rel (%p461) target = $region44
      $region43: #{generator_forward.12} parent=35 // pred_region
        _
      $region44: #{generator_forward.12} parent=35 // pred_fallthru
        _
    $region36: #{generator_forward.12} parent=5 // pred_fallthru
      _
    %p464 = scmp.le.s32.totalorder 2, %s12
    // Predicated region
    $region45: #{generator_forward.12} parent=5 // pred_check
      %p465 = pneg %p464
    $region46: #{generator_forward.12} parent=5 // pred_check_branch
      %467 = sbr.rel (%p465) target = $region48
    $region47: #{generator_forward.12} parent=5 // pred_region
      %s468 = ssub.s32 %s12, 2
      // Predicated region
      $region49: #{generator_forward.12} parent=47 // pred_check
        %p469 = pneg %p135
      $region50: #{generator_forward.12} parent=47 // pred_check_branch
        %471 = sbr.rel (%p469) target = $region52
      $region51: #{generator_forward.12} parent=47 // pred_region
        %p472 = scmp.lt.s32.totalorder %s18, 1
        %s473 = scalar_select %p472, %s18, 1
        %s474 = smul.addr %s473, 2
        %s475 = smul.addr %s474, 8
        %s476 = scalar_lea.vmem %s4, %s475
      $region52: #{generator_forward.12} parent=47 // pred_fallthru
        _
      // Predicated region
      $region53: #{generator_forward.12} parent=47 // pred_check
        %p477 = pneg %p161
      $region54: #{generator_forward.12} parent=47 // pred_check_branch
        %479 = sbr.rel (%p477) target = $region56
      $region55: #{generator_forward.12} parent=47 // pred_region
        %p480 = scmp.lt.s32.totalorder %s18, 1
        %s481 = scalar_select %p480, %s18, 1
        %s482 = scalar_lea.vmem %s5, %s481
      $region56: #{generator_forward.12} parent=47 // pred_fallthru
        _
    $region48: #{generator_forward.12} parent=5 // pred_fallthru
      _
  $region6: #{generator_forward.12} parent=0 // loop_footer
    %s16 = sadd.s32 1, %s12
  $region7: #{generator_forward.12} parent=0 // loop_footer_branch
    %11 = sbr.rel target = $region3
  $region8: #{generator_forward.12} parent=0 // loop_exit
    _

// kernel: generator_forward.11
$region0: #{generator_forward.11}
  #allocation0 [shape = 'u32[]', space=smem, size = 0x4, offset = 0x4, fixed_abs, tag = 'smem constant byte address 0x4 - core index']
  #allocation1 [shape = 'u32[72,128]{1,0:T(1,128)}', space=vmem, size = 0x9000, scoped, tag = 'internal scratch']
  %s0 = inlined_call_operand.vmem [shape: f32[2,16,128], index: 0, kind: input, shape index: {}]
  %s1 = inlined_call_operand.vmem [shape: f32[16,3], index: 1, kind: input, shape index: {}]
  %s2 = inlined_call_operand.vmem [shape: bf16[2,16,128], index: 2, kind: input, shape index: {}]
  %s3 = inlined_call_operand.vmem [shape: f32[16,1], index: 3, kind: input, shape index: {}]
  %s4 = inlined_call_operand.vmem [shape: bf16[128,128], index: 4, kind: input, shape index: {}]
  %s5 = inlined_call_operand.vmem [shape: f32[1,128], index: 5, kind: input, shape index: {}]
  %s6 = inlined_call_operand.vmem [shape: bf16[128,3], index: 6, kind: input, shape index: {}]
  %s7 = inlined_call_operand.vmem [shape: f32[1,3], index: 7, kind: input, shape index: {}]
  %s8 = inlined_call_operand.vmem [shape: f32[3,128], index: 8, kind: input, shape index: {}]
  %s9 = inlined_call_operand.vmem [shape: bf16[128,128], index: 9, kind: input, shape index: {}]
  %s10 = inlined_call_operand.vmem [shape: f32[1,128], index: 10, kind: input, shape index: {}]
  %s11 = inlined_call_operand.vmem [shape: bf16[128,128], index: 11, kind: input, shape index: {}]
  %s12 = inlined_call_operand.vmem [shape: f32[1,128], index: 12, kind: input, shape index: {}]
  %s13 = inlined_call_operand.vmem [shape: f32[2,16,128], index: 13, kind: output, shape index: {}]
  %s14 = sld [smem:[#allocation0]]
  $region85: #{generator_forward.11} parent=0
    _
  %s16 = ssub.s32 1, %s14
  %s17 = scalar_select 0, %s16, %s14
  loop: start=0, step=1, limit=4
  $region2: #{generator_forward.11} parent=0 // loop_pre_header
    _
  $region3: #{generator_forward.11} parent=0 // loop_header
    %s19 = sphi 0, %s23
    %p20 = scmp.ge.s32.totalorder %s19, 4
    %s26 = sphi 0, %s38
    %s27 = sphi 0, %s34
    %s28 = sphi 0, %s26
    %s29 = sphi 0, %s27
    %s30 = sphi 0, %s28
    %s31 = sphi 0, %s29
    %s43 = sphi 0, %s45
    %s46 = sphi 0, %s43
    %s47 = sphi 0, %s46
    %s63 = sphi 0, %s47
    %s69 = sphi 0, %s71
    %s72 = sphi 0, %s69
    %s73 = sphi 0, %s72
    %s89 = sphi 0, %s73
    %s97 = sphi 0, %s99
    %s100 = sphi 0, %s97
    %s101 = sphi 0, %s100
    %s117 = sphi 0, %s101
    %s123 = sphi 0, %s125
    %s126 = sphi 0, %s123
    %s127 = sphi 0, %s126
    %s143 = sphi 0, %s127
    %s147 = sphi 0, %s147
    %s149 = sphi 0, %s147
    %s150 = sphi 0, %s149
    %s164 = sphi 0, %s150
    %s168 = sphi 0, %s168
    %s170 = sphi 0, %s168
    %s171 = sphi 0, %s170
    %s185 = sphi 0, %s171
    %s189 = sphi 0, %s189
    %s191 = sphi 0, %s189
    %s192 = sphi 0, %s191
    %s206 = sphi 0, %s192
    %s210 = sphi 0, %s210
    %s212 = sphi 0, %s210
    %s213 = sphi 0, %s212
    %s227 = sphi 0, %s213
    %s231 = sphi 0, %s231
    %s233 = sphi 0, %s231
    %s234 = sphi 0, %s233
    %s248 = sphi 0, %s234
    %s252 = sphi 0, %s252
    %s254 = sphi 0, %s252
    %s255 = sphi 0, %s254
    %s269 = sphi 0, %s255
    %s273 = sphi 0, %s273
    %s275 = sphi 0, %s273
    %s276 = sphi 0, %s275
    %s290 = sphi 0, %s276
    %s294 = sphi 0, %s294
    %s296 = sphi 0, %s294
    %s297 = sphi 0, %s296
    %s311 = sphi 0, %s297
    %s315 = sphi 0, %s315
    %s317 = sphi 0, %s315
    %s318 = sphi 0, %s317
    %s332 = sphi 0, %s318
    %s340 = sphi 0, %s342
    %s343 = sphi 0, %s340
    %s344 = sphi 0, %s343
    %s360 = sphi 0, %s344
  $region4: #{generator_forward.11} parent=0 // loop_header_branch
    %22 = sbr.rel (%p20) target = $region8
  $region5: #{generator_forward.11} parent=0 // loop_body
    %s24 = ssub.s32 %s19, 1
    %s25 = ssub.s32 %s19, 2
    %s32 = sadd.s32 1, %s27
    %p33 = scmp.ge.s32.totalorder %s32, 1
    %s34 = scalar_select %p33, 0, %s32
    %s35 = sadd.s32 1, %s26
    %s36 = scalar_select %p33, %s35, %s26
    %p37 = scmp.ge.s32.totalorder %s36, 2
    %s38 = scalar_select %p37, 0, %s36
    %s39 = ssub.s32 %s26, %s38
    %s40 = ssub.s32 %s27, %s34
    %s41 = sor.u32 %s39, %s40
    %p42 = scmp.eq.s32.totalorder %s41, 0
    %s44 = sadd.s32 %s43, 1
    %s45 = scalar_select %p42, %s43, %s44
    %p48 = pneg %p42
    %p49 = scmp.eq.s32.totalorder %s19, 1
    %p50 = por %p48, %p49
    %p51 = scmp.ne.s32.totalorder %s43, %s46
    %p52 = scmp.eq.s32.totalorder %s19, 0
    %p53 = por %p51, %p52
    %p54 = scmp.ne.s32.totalorder %s43, %s46
    %p55 = scmp.eq.s32.totalorder %s24, 1
    %p56 = por %p54, %p55
    %p57 = scmp.ne.s32.totalorder %s46, %s47
    %p58 = scmp.eq.s32.totalorder %s24, 0
    %p59 = por %p57, %p58
    %p60 = scmp.ne.s32.totalorder %s46, %s47
    %p61 = scmp.eq.s32.totalorder %s25, 1
    %p62 = por %p60, %p61
    %p64 = scmp.ne.s32.totalorder %s47, %s63
    %p65 = scmp.eq.s32.totalorder %s25, 0
    %p66 = por %p64, %p65
    %s67 = ssub.s32 %s27, %s34
    %p68 = scmp.eq.s32.totalorder %s67, 0
    %s70 = sadd.s32 %s69, 1
    %s71 = scalar_select %p68, %s69, %s70
    %p74 = pneg %p68
    %p75 = scmp.eq.s32.totalorder %s19, 1
    %p76 = por %p74, %p75
    %p77 = scmp.ne.s32.totalorder %s69, %s72
    %p78 = scmp.eq.s32.totalorder %s19, 0
    %p79 = por %p77, %p78
    %p80 = scmp.ne.s32.totalorder %s69, %s72
    %p81 = scmp.eq.s32.totalorder %s24, 1
    %p82 = por %p80, %p81
    %p83 = scmp.ne.s32.totalorder %s72, %s73
    %p84 = scmp.eq.s32.totalorder %s24, 0
    %p85 = por %p83, %p84
    %p86 = scmp.ne.s32.totalorder %s72, %s73
    %p87 = scmp.eq.s32.totalorder %s25, 1
    %p88 = por %p86, %p87
    %p90 = scmp.ne.s32.totalorder %s73, %s89
    %p91 = scmp.eq.s32.totalorder %s25, 0
    %p92 = por %p90, %p91
    %s93 = ssub.s32 %s26, %s38
    %s94 = ssub.s32 %s27, %s34
    %s95 = sor.u32 %s93, %s94
    %p96 = scmp.eq.s32.totalorder %s95, 0
    %s98 = sadd.s32 %s97, 1
    %s99 = scalar_select %p96, %s97, %s98
    %p102 = pneg %p96
    %p103 = scmp.eq.s32.totalorder %s19, 1
    %p104 = por %p102, %p103
    %p105 = scmp.ne.s32.totalorder %s97, %s100
    %p106 = scmp.eq.s32.totalorder %s19, 0
    %p107 = por %p105, %p106
    %p108 = scmp.ne.s32.totalorder %s97, %s100
    %p109 = scmp.eq.s32.totalorder %s24, 1
    %p110 = por %p108, %p109
    %p111 = scmp.ne.s32.totalorder %s100, %s101
    %p112 = scmp.eq.s32.totalorder %s24, 0
    %p113 = por %p111, %p112
    %p114 = scmp.ne.s32.totalorder %s100, %s101
    %p115 = scmp.eq.s32.totalorder %s25, 1
    %p116 = por %p114, %p115
    %p118 = scmp.ne.s32.totalorder %s101, %s117
    %p119 = scmp.eq.s32.totalorder %s25, 0
    %p120 = por %p118, %p119
    %s121 = ssub.s32 %s27, %s34
    %p122 = scmp.eq.s32.totalorder %s121, 0
    %s124 = sadd.s32 %s123, 1
    %s125 = scalar_select %p122, %s123, %s124
    %p128 = pneg %p122
    %p129 = scmp.eq.s32.totalorder %s19, 1
    %p130 = por %p128, %p129
    %p131 = scmp.ne.s32.totalorder %s123, %s126
    %p132 = scmp.eq.s32.totalorder %s19, 0
    %p133 = por %p131, %p132
    %p134 = scmp.ne.s32.totalorder %s123, %s126
    %p135 = scmp.eq.s32.totalorder %s24, 1
    %p136 = por %p134, %p135
    %p137 = scmp.ne.s32.totalorder %s126, %s127
    %p138 = scmp.eq.s32.totalorder %s24, 0
    %p139 = por %p137, %p138
    %p140 = scmp.ne.s32.totalorder %s126, %s127
    %p141 = scmp.eq.s32.totalorder %s25, 1
    %p142 = por %p140, %p141
    %p144 = scmp.ne.s32.totalorder %s127, %s143
    %p145 = scmp.eq.s32.totalorder %s25, 0
    %p146 = por %p144, %p145
    %s148 = sadd.s32 %s147, 1
    %p151 = scmp.eq.s32.totalorder %s19, 1
    %p152 = scmp.ne.s32.totalorder %s147, %s149
    %p153 = scmp.eq.s32.totalorder %s19, 0
    %p154 = por %p152, %p153
    %p155 = scmp.ne.s32.totalorder %s147, %s149
    %p156 = scmp.eq.s32.totalorder %s24, 1
    %p157 = por %p155, %p156
    %p158 = scmp.ne.s32.totalorder %s149, %s150
    %p159 = scmp.eq.s32.totalorder %s24, 0
    %p160 = por %p158, %p159
    %p161 = scmp.ne.s32.totalorder %s149, %s150
    %p162 = scmp.eq.s32.totalorder %s25, 1
    %p163 = por %p161, %p162
    %p165 = scmp.ne.s32.totalorder %s150, %s164
    %p166 = scmp.eq.s32.totalorder %s25, 0
    %p167 = por %p165, %p166
    %s169 = sadd.s32 %s168, 1
    %p172 = scmp.eq.s32.totalorder %s19, 1
    %p173 = scmp.ne.s32.totalorder %s168, %s170
    %p174 = scmp.eq.s32.totalorder %s19, 0
    %p175 = por %p173, %p174
    %p176 = scmp.ne.s32.totalorder %s168, %s170
    %p177 = scmp.eq.s32.totalorder %s24, 1
    %p178 = por %p176, %p177
    %p179 = scmp.ne.s32.totalorder %s170, %s171
    %p180 = scmp.eq.s32.totalorder %s24, 0
    %p181 = por %p179, %p180
    %p182 = scmp.ne.s32.totalorder %s170, %s171
    %p183 = scmp.eq.s32.totalorder %s25, 1
    %p184 = por %p182, %p183
    %p186 = scmp.ne.s32.totalorder %s171, %s185
    %p187 = scmp.eq.s32.totalorder %s25, 0
    %p188 = por %p186, %p187
    %s190 = sadd.s32 %s189, 1
    %p193 = scmp.eq.s32.totalorder %s19, 1
    %p194 = scmp.ne.s32.totalorder %s189, %s191
    %p195 = scmp.eq.s32.totalorder %s19, 0
    %p196 = por %p194, %p195
    %p197 = scmp.ne.s32.totalorder %s189, %s191
    %p198 = scmp.eq.s32.totalorder %s24, 1
    %p199 = por %p197, %p198
    %p200 = scmp.ne.s32.totalorder %s191, %s192
    %p201 = scmp.eq.s32.totalorder %s24, 0
    %p202 = por %p200, %p201
    %p203 = scmp.ne.s32.totalorder %s191, %s192
    %p204 = scmp.eq.s32.totalorder %s25, 1
    %p205 = por %p203, %p204
    %p207 = scmp.ne.s32.totalorder %s192, %s206
    %p208 = scmp.eq.s32.totalorder %s25, 0
    %p209 = por %p207, %p208
    %s211 = sadd.s32 %s210, 1
    %p214 = scmp.eq.s32.totalorder %s19, 1
    %p215 = scmp.ne.s32.totalorder %s210, %s212
    %p216 = scmp.eq.s32.totalorder %s19, 0
    %p217 = por %p215, %p216
    %p218 = scmp.ne.s32.totalorder %s210, %s212
    %p219 = scmp.eq.s32.totalorder %s24, 1
    %p220 = por %p218, %p219
    %p221 = scmp.ne.s32.totalorder %s212, %s213
    %p222 = scmp.eq.s32.totalorder %s24, 0
    %p223 = por %p221, %p222
    %p224 = scmp.ne.s32.totalorder %s212, %s213
    %p225 = scmp.eq.s32.totalorder %s25, 1
    %p226 = por %p224, %p225
    %p228 = scmp.ne.s32.totalorder %s213, %s227
    %p229 = scmp.eq.s32.totalorder %s25, 0
    %p230 = por %p228, %p229
    %s232 = sadd.s32 %s231, 1
    %p235 = scmp.eq.s32.totalorder %s19, 1
    %p236 = scmp.ne.s32.totalorder %s231, %s233
    %p237 = scmp.eq.s32.totalorder %s19, 0
    %p238 = por %p236, %p237
    %p239 = scmp.ne.s32.totalorder %s231, %s233
    %p240 = scmp.eq.s32.totalorder %s24, 1
    %p241 = por %p239, %p240
    %p242 = scmp.ne.s32.totalorder %s233, %s234
    %p243 = scmp.eq.s32.totalorder %s24, 0
    %p244 = por %p242, %p243
    %p245 = scmp.ne.s32.totalorder %s233, %s234
    %p246 = scmp.eq.s32.totalorder %s25, 1
    %p247 = por %p245, %p246
    %p249 = scmp.ne.s32.totalorder %s234, %s248
    %p250 = scmp.eq.s32.totalorder %s25, 0
    %p251 = por %p249, %p250
    %s253 = sadd.s32 %s252, 1
    %p256 = scmp.eq.s32.totalorder %s19, 1
    %p257 = scmp.ne.s32.totalorder %s252, %s254
    %p258 = scmp.eq.s32.totalorder %s19, 0
    %p259 = por %p257, %p258
    %p260 = scmp.ne.s32.totalorder %s252, %s254
    %p261 = scmp.eq.s32.totalorder %s24, 1
    %p262 = por %p260, %p261
    %p263 = scmp.ne.s32.totalorder %s254, %s255
    %p264 = scmp.eq.s32.totalorder %s24, 0
    %p265 = por %p263, %p264
    %p266 = scmp.ne.s32.totalorder %s254, %s255
    %p267 = scmp.eq.s32.totalorder %s25, 1
    %p268 = por %p266, %p267
    %p270 = scmp.ne.s32.totalorder %s255, %s269
    %p271 = scmp.eq.s32.totalorder %s25, 0
    %p272 = por %p270, %p271
    %s274 = sadd.s32 %s273, 1
    %p277 = scmp.eq.s32.totalorder %s19, 1
    %p278 = scmp.ne.s32.totalorder %s273, %s275
    %p279 = scmp.eq.s32.totalorder %s19, 0
    %p280 = por %p278, %p279
    %p281 = scmp.ne.s32.totalorder %s273, %s275
    %p282 = scmp.eq.s32.totalorder %s24, 1
    %p283 = por %p281, %p282
    %p284 = scmp.ne.s32.totalorder %s275, %s276
    %p285 = scmp.eq.s32.totalorder %s24, 0
    %p286 = por %p284, %p285
    %p287 = scmp.ne.s32.totalorder %s275, %s276
    %p288 = scmp.eq.s32.totalorder %s25, 1
    %p289 = por %p287, %p288
    %p291 = scmp.ne.s32.totalorder %s276, %s290
    %p292 = scmp.eq.s32.totalorder %s25, 0
    %p293 = por %p291, %p292
    %s295 = sadd.s32 %s294, 1
    %p298 = scmp.eq.s32.totalorder %s19, 1
    %p299 = scmp.ne.s32.totalorder %s294, %s296
    %p300 = scmp.eq.s32.totalorder %s19, 0
    %p301 = por %p299, %p300
    %p302 = scmp.ne.s32.totalorder %s294, %s296
    %p303 = scmp.eq.s32.totalorder %s24, 1
    %p304 = por %p302, %p303
    %p305 = scmp.ne.s32.totalorder %s296, %s297
    %p306 = scmp.eq.s32.totalorder %s24, 0
    %p307 = por %p305, %p306
    %p308 = scmp.ne.s32.totalorder %s296, %s297
    %p309 = scmp.eq.s32.totalorder %s25, 1
    %p310 = por %p308, %p309
    %p312 = scmp.ne.s32.totalorder %s297, %s311
    %p313 = scmp.eq.s32.totalorder %s25, 0
    %p314 = por %p312, %p313
    %s316 = sadd.s32 %s315, 1
    %p319 = scmp.eq.s32.totalorder %s19, 1
    %p320 = scmp.ne.s32.totalorder %s315, %s317
    %p321 = scmp.eq.s32.totalorder %s19, 0
    %p322 = por %p320, %p321
    %p323 = scmp.ne.s32.totalorder %s315, %s317
    %p324 = scmp.eq.s32.totalorder %s24, 1
    %p325 = por %p323, %p324
    %p326 = scmp.ne.s32.totalorder %s317, %s318
    %p327 = scmp.eq.s32.totalorder %s24, 0
    %p328 = por %p326, %p327
    %p329 = scmp.ne.s32.totalorder %s317, %s318
    %p330 = scmp.eq.s32.totalorder %s25, 1
    %p331 = por %p329, %p330
    %p333 = scmp.ne.s32.totalorder %s318, %s332
    %p334 = scmp.eq.s32.totalorder %s25, 0
    %p335 = por %p333, %p334
    %s336 = ssub.s32 %s26, %s38
    %s337 = ssub.s32 %s27, %s34
    %s338 = sor.u32 %s336, %s337
    %p339 = scmp.eq.s32.totalorder %s338, 0
    %s341 = sadd.s32 %s340, 1
    %s342 = scalar_select %p339, %s340, %s341
    %p345 = pneg %p339
    %p346 = scmp.eq.s32.totalorder %s19, 1
    %p347 = por %p345, %p346
    %p348 = scmp.ne.s32.totalorder %s340, %s343
    %p349 = scmp.eq.s32.totalorder %s19, 0
    %p350 = por %p348, %p349
    %p351 = scmp.ne.s32.totalorder %s340, %s343
    %p352 = scmp.eq.s32.totalorder %s24, 1
    %p353 = por %p351, %p352
    %p354 = scmp.ne.s32.totalorder %s343, %s344
    %p355 = scmp.eq.s32.totalorder %s24, 0
    %p356 = por %p354, %p355
    %p357 = scmp.ne.s32.totalorder %s343, %s344
    %p358 = scmp.eq.s32.totalorder %s25, 1
    %p359 = por %p357, %p358
    %p361 = scmp.ne.s32.totalorder %s344, %s360
    %p362 = scmp.eq.s32.totalorder %s25, 0
    %p363 = por %p361, %p362
    %p364 = scmp.le.s32.totalorder 1, %s19
    %p365 = scmp.lt.s32.totalorder %s19, 3
    %p366 = pnand %p364, %p365
    %p367 = pneg %p366
    // Predicated region
    $region9: #{generator_forward.11} parent=5 // pred_check
      _
    $region10: #{generator_forward.11} parent=5 // pred_check_branch
      %369 = sbr.rel (%p366) target = $region12
    $region11: #{generator_forward.11} parent=5 // pred_region
      %s370 = ssub.s32 %s19, 1
      // Predicated region
      $region13: #{generator_forward.11} parent=11 // pred_check
        %p371 = pneg %p85
      $region14: #{generator_forward.11} parent=11 // pred_check_branch
        %373 = sbr.rel (%p371) target = $region16
      $region15: #{generator_forward.11} parent=11 // pred_region
        %s374 = smul.u32 2, %s29
        %p375 = scmp.lt.s32.totalorder %s374, 1
        %s376 = scalar_select %p375, %s374, 1
        %s377 = smul.addr %s376, 8
        %s378 = scalar_lea.vmem %s1, %s377
        %s379 = smul.u32 2, %s29
      $region16: #{generator_forward.11} parent=11 // pred_fallthru
        _
      // Predicated region
      $region17: #{generator_forward.11} parent=11 // pred_check
        %p380 = pneg %p139
      $region18: #{generator_forward.11} parent=11 // pred_check_branch
        %382 = sbr.rel (%p380) target = $region20
      $region19: #{generator_forward.11} parent=11 // pred_region
        %s383 = smul.u32 2, %s29
        %p384 = scmp.lt.s32.totalorder %s383, 1
        %s385 = scalar_select %p384, %s383, 1
        %s386 = smul.addr %s385, 8
        %s387 = scalar_lea.vmem %s3, %s386
        %s388 = smul.u32 2, %s29
      $region20: #{generator_forward.11} parent=11 // pred_fallthru
        _
      // Predicated region
      $region21: #{generator_forward.11} parent=11 // pred_check
        %p389 = pneg %p160
      $region22: #{generator_forward.11} parent=11 // pred_check_branch
        %391 = sbr.rel (%p389) target = $region24
      $region23: #{generator_forward.11} parent=11 // pred_region
        _
      $region24: #{generator_forward.11} parent=11 // pred_fallthru
        _
      // Predicated region
      $region25: #{generator_forward.11} parent=11 // pred_check
        %p392 = pneg %p181
      $region26: #{generator_forward.11} parent=11 // pred_check_branch
        %394 = sbr.rel (%p392) target = $region28
      $region27: #{generator_forward.11} parent=11 // pred_region
        _
      $region28: #{generator_forward.11} parent=11 // pred_fallthru
        _
      // Predicated region
      $region29: #{generator_forward.11} parent=11 // pred_check
        %p395 = pneg %p202
      $region30: #{generator_forward.11} parent=11 // pred_check_branch
        %397 = sbr.rel (%p395) target = $region32
      $region31: #{generator_forward.11} parent=11 // pred_region
        _
      $region32: #{generator_forward.11} parent=11 // pred_fallthru
        _
      // Predicated region
      $region33: #{generator_forward.11} parent=11 // pred_check
        %p398 = pneg %p223
      $region34: #{generator_forward.11} parent=11 // pred_check_branch
        %400 = sbr.rel (%p398) target = $region36
      $region35: #{generator_forward.11} parent=11 // pred_region
        _
      $region36: #{generator_forward.11} parent=11 // pred_fallthru
        _
      // Predicated region
      $region37: #{generator_forward.11} parent=11 // pred_check
        %p401 = pneg %p244
      $region38: #{generator_forward.11} parent=11 // pred_check_branch
        %403 = sbr.rel (%p401) target = $region40
      $region39: #{generator_forward.11} parent=11 // pred_region
        _
      $region40: #{generator_forward.11} parent=11 // pred_fallthru
        _
      // Predicated region
      $region41: #{generator_forward.11} parent=11 // pred_check
        %p404 = pneg %p265
      $region42: #{generator_forward.11} parent=11 // pred_check_branch
        %406 = sbr.rel (%p404) target = $region44
      $region43: #{generator_forward.11} parent=11 // pred_region
        _
      $region44: #{generator_forward.11} parent=11 // pred_fallthru
        _
      // Predicated region
      $region45: #{generator_forward.11} parent=11 // pred_check
        %p407 = pneg %p286
      $region46: #{generator_forward.11} parent=11 // pred_check_branch
        %409 = sbr.rel (%p407) target = $region48
      $region47: #{generator_forward.11} parent=11 // pred_region
        _
      $region48: #{generator_forward.11} parent=11 // pred_fallthru
        _
      // Predicated region
      $region49: #{generator_forward.11} parent=11 // pred_check
        %p410 = pneg %p307
      $region50: #{generator_forward.11} parent=11 // pred_check_branch
        %412 = sbr.rel (%p410) target = $region52
      $region51: #{generator_forward.11} parent=11 // pred_region
        _
      $region52: #{generator_forward.11} parent=11 // pred_fallthru
        _
      // Predicated region
      $region53: #{generator_forward.11} parent=11 // pred_check
        %p413 = pneg %p328
      $region54: #{generator_forward.11} parent=11 // pred_check_branch
        %415 = sbr.rel (%p413) target = $region56
      $region55: #{generator_forward.11} parent=11 // pred_region
        _
      $region56: #{generator_forward.11} parent=11 // pred_fallthru
        _
    $region12: #{generator_forward.11} parent=5 // pred_fallthru
      _
    %p416 = scmp.lt.s32.totalorder %s19, 2
    // Predicated region
    $region57: #{generator_forward.11} parent=5 // pred_check
      %p417 = pneg %p416
    $region58: #{generator_forward.11} parent=5 // pred_check_branch
      %419 = sbr.rel (%p417) target = $region60
    $region59: #{generator_forward.11} parent=5 // pred_region
      // Predicated region
      $region61: #{generator_forward.11} parent=59 // pred_check
        %p420 = pneg %p53
      $region62: #{generator_forward.11} parent=59 // pred_check_branch
        %422 = sbr.rel (%p420) target = $region64
      $region63: #{generator_forward.11} parent=59 // pred_region
        %s423 = smul.u32 2, %s27
        %p424 = scmp.lt.s32.totalorder %s26, 1
        %s425 = scalar_select %p424, %s26, 1
        %p426 = scmp.lt.s32.totalorder %s423, 1
        %s427 = scalar_select %p426, %s423, 1
        %s428 = smul.addr %s425, 2
        %s429 = sadd.s32 %s427, %s428
        %s430 = smul.addr %s429, 8
        %s431 = scalar_lea.vmem %s0, %s430
        %s432 = smul.u32 2, %s27
      $region64: #{generator_forward.11} parent=59 // pred_fallthru
        _
      // Predicated region
      $region65: #{generator_forward.11} parent=59 // pred_check
        %p433 = pneg %p107
      $region66: #{generator_forward.11} parent=59 // pred_check_branch
        %435 = sbr.rel (%p433) target = $region68
      $region67: #{generator_forward.11} parent=59 // pred_region
        %s436 = smul.u32 2, %s27
        %p437 = scmp.lt.s32.totalorder %s26, 1
        %s438 = scalar_select %p437, %s26, 1
        %p439 = scmp.lt.s32.totalorder %s436, 1
        %s440 = scalar_select %p439, %s436, 1
        %s441 = smul.addr %s438, 2
        %s442 = sadd.s32 %s440, %s441
        %s443 = smul.addr %s442, 4
        %s444 = scalar_lea.vmem %s2, %s443
        %s445 = smul.u32 2, %s27
      $region68: #{generator_forward.11} parent=59 // pred_fallthru
        _
    $region60: #{generator_forward.11} parent=5 // pred_fallthru
      _
    %p446 = scmp.le.s32.totalorder 1, %s19
    %p447 = scmp.lt.s32.totalorder %s19, 3
    %p448 = pnand %p446, %p447
    %p449 = pneg %p448
    // Predicated region
    $region69: #{generator_forward.11} parent=5 // pred_check
      _
    $region70: #{generator_forward.11} parent=5 // pred_check_branch
      %451 = sbr.rel (%p448) target = $region72
    $region71: #{generator_forward.11} parent=5 // pred_region
      %s452 = ssub.s32 %s19, 1
      %s453 = smul.u32 2, %s29
      %p454 = scmp.lt.s32.totalorder %s28, 1
      %s455 = scalar_select %p454, %s28, 1
      %p456 = scmp.lt.s32.totalorder %s453, 1
      %s457 = scalar_select %p456, %s453, 1
      %s458 = smul.addr %s455, 2
      %s459 = sadd.s32 %s457, %s458
      %s460 = smul.addr %s459, 8
      %s461 = scalar_lea.vmem %s0, %s460
      %p462 = pneg %p59
      %p463 = pneg %p56
      %s464 = smul.u32 2, %s29
      %p465 = scmp.lt.s32.totalorder %s464, 1
      %s466 = scalar_select %p465, %s464, 1
      %s467 = smul.addr %s466, 8
      %s468 = scalar_lea.vmem %s1, %s467
      %p469 = pneg %p85
      %p470 = pneg %p82
      %s471 = smul.u32 2, %s29
      %p472 = scmp.lt.s32.totalorder %s28, 1
      %s473 = scalar_select %p472, %s28, 1
      %p474 = scmp.lt.s32.totalorder %s471, 1
      %s475 = scalar_select %p474, %s471, 1
      %s476 = smul.addr %s473, 2
      %s477 = sadd.s32 %s475, %s476
      %s478 = smul.addr %s477, 4
      %s479 = scalar_lea.vmem %s2, %s478
      %p480 = pneg %p113
      %p481 = pneg %p110
      %s482 = smul.u32 2, %s29
      %p483 = scmp.lt.s32.totalorder %s482, 1
      %s484 = scalar_select %p483, %s482, 1
      %s485 = smul.addr %s484, 8
      %s486 = scalar_lea.vmem %s3, %s485
      %p487 = pneg %p139
      %p488 = pneg %p136
      %p489 = pneg %p160
      %p490 = pneg %p157
      %p491 = pneg %p181
      %p492 = pneg %p178
      %p493 = pneg %p202
      %p494 = pneg %p199
      %p495 = pneg %p223
      %p496 = pneg %p220
      %p497 = pneg %p244
      %p498 = pneg %p241
      %p499 = pneg %p265
      %p500 = pneg %p262
      %p501 = pneg %p286
      %p502 = pneg %p283
      %p503 = pneg %p307
      %p504 = pneg %p304
      %p505 = pneg %p328
      %p506 = pneg %p325
      %p507 = pneg %p356
      %p508 = pneg %p353
      %s509 = smul.u32 2, %s29
      %p510 = scmp.lt.s32.totalorder %s28, 1
      %s511 = scalar_select %p510, %s28, 1
      %p512 = scmp.lt.s32.totalorder %s509, 1
      %s513 = scalar_select %p512, %s509, 1
      %s514 = smul.addr %s511, 2
      %s515 = sadd.s32 %s513, %s514
      %s516 = smul.addr %s515, 8
      %s517 = scalar_lea.vmem %s13, %s516
      %s518 = smul.u32 2, %s29
      %p519 = scmp.lt.s32.totalorder %s28, 1
      %s520 = scalar_select %p519, %s28, 1
      %p521 = scmp.lt.s32.totalorder %s518, 1
      %s522 = scalar_select %p521, %s518, 1
      %s523 = smul.addr %s520, 2
      %s524 = sadd.s32 %s522, %s523
      %s525 = smul.addr %s524, 8
      %s526 = scalar_lea.vmem %s0, %s525
      %s527 = smul.u32 2, %s29
      %s528 = smul.u32 2, %s29
      %p529 = scmp.lt.s32.totalorder %s528, 1
      %s530 = scalar_select %p529, %s528, 1
      %s531 = smul.addr %s530, 8
      %s532 = scalar_lea.vmem %s1, %s531
      %s533 = smul.u32 2, %s29
      %s534 = smul.u32 2, %s29
      %p535 = scmp.lt.s32.totalorder %s28, 1
      %s536 = scalar_select %p535, %s28, 1
      %p537 = scmp.lt.s32.totalorder %s534, 1
      %s538 = scalar_select %p537, %s534, 1
      %s539 = smul.addr %s536, 2
      %s540 = sadd.s32 %s538, %s539
      %s541 = smul.addr %s540, 4
      %s542 = scalar_lea.vmem %s2, %s541
      %s543 = smul.u32 2, %s29
      %s544 = smul.u32 2, %s29
      %p545 = scmp.lt.s32.totalorder %s544, 1
      %s546 = scalar_select %p545, %s544, 1
      %s547 = smul.addr %s546, 8
      %s548 = scalar_lea.vmem %s3, %s547
      %s549 = smul.u32 2, %s29
      %s550 = smul.u32 2, %s29
      %p551 = scmp.lt.s32.totalorder %s28, 1
      %s552 = scalar_select %p551, %s28, 1
      %p553 = scmp.lt.s32.totalorder %s550, 1
      %s554 = scalar_select %p553, %s550, 1
      %s555 = smul.addr %s552, 2
      %s556 = sadd.s32 %s554, %s555
      %s557 = smul.addr %s556, 8
      %s558 = scalar_lea.vmem %s13, %s557
      %s559 = smul.u32 2, %s29
      %v560 = vld [vmem:[%s526] sm:$0xff]
      %v561 = vld [vmem:[%s526 + $0x8] sm:$0xff]
      %v562 = vpack.c.bf16 %v561, %v560
      %v563 = vld [vmem:[%s4] sm:$0xf]
      %v564 = vld [vmem:[%s4 + $0x4] sm:$0xf]
      %v565 = vld [vmem:[%s4 + $0x8] sm:$0xf]
      %v566 = vld [vmem:[%s4 + $0xc] sm:$0xf]
      %v567 = vld [vmem:[%s4 + $0x10] sm:$0xf]
      %v568 = vld [vmem:[%s4 + $0x14] sm:$0xf]
      %v569 = vld [vmem:[%s4 + $0x18] sm:$0xf]
      %v570 = vld [vmem:[%s4 + $0x1c] sm:$0xf]
      %v571 = vld [vmem:[%s4 + $0x20] sm:$0xf]
      %v572 = vld [vmem:[%s4 + $0x24] sm:$0xf]
      %v573 = vld [vmem:[%s4 + $0x28] sm:$0xf]
      %v574 = vld [vmem:[%s4 + $0x2c] sm:$0xf]
      %v575 = vld [vmem:[%s4 + $0x30] sm:$0xf]
      %v576 = vld [vmem:[%s4 + $0x34] sm:$0xf]
      %v577 = vld [vmem:[%s4 + $0x38] sm:$0xf]
      %v578 = vld [vmem:[%s4 + $0x3c] sm:$0xf]
      %v579 = vld [vmem:[%s5] sm:$0x1]
      %v581 = vperm.slane %v579, 0
      %v599 = vunpack.c.l.b16 %v563
      %v600 = vunpack.c.l.b16 %v564
      %v601 = vunpack.c.l.b16 %v565
      %v602 = vunpack.c.l.b16 %v566
      %v603 = vunpack.c.l.b16 %v567
      %v604 = vunpack.c.l.b16 %v568
      %v605 = vunpack.c.l.b16 %v569
      %v606 = vunpack.c.l.b16 %v570
      %v607 = vunpack.c.l.b16 %v571
      %v608 = vunpack.c.l.b16 %v572
      %v609 = vunpack.c.l.b16 %v573
      %v610 = vunpack.c.l.b16 %v574
      %v611 = vunpack.c.l.b16 %v575
      %v612 = vunpack.c.l.b16 %v576
      %v613 = vunpack.c.l.b16 %v577
      %v614 = vunpack.c.l.b16 %v578
      %v615 = vpack.c.b16 %v600, %v599
      %v616 = vpack.c.b16 %v602, %v601
      %v617 = vpack.c.b16 %v604, %v603
      %v618 = vpack.c.b16 %v606, %v605
      %v619 = vpack.c.b16 %v608, %v607
      %v620 = vpack.c.b16 %v610, %v609
      %v621 = vpack.c.b16 %v612, %v611
      %v622 = vpack.c.b16 %v614, %v613
      %631 = vmatpush.bf16.msra.mxu0 %v622
      %632 = vmatpush.bf16.msra.mxu0 %v621
      %633 = vmatpush.bf16.msra.mxu0 %v620
      %634 = vmatpush.bf16.msra.mxu0 %v619
      %635 = vmatpush.bf16.msra.mxu0 %v618
      %636 = vmatpush.bf16.msra.mxu0 %v617
      %637 = vmatpush.bf16.msra.mxu0 %v616
      %638 = vmatpush.bf16.msra.mxu0 %v615
      %639 = vmatmul.bf16.gmra.mxu0 %v562
      %v640 = vpop.f32.mrf.mxu0
      %v641 = vadd.f32 %v581, %v640
      %v642 = vpop.f32.mrf.mxu0
      %v643 = vadd.f32 %v581, %v642
      %644 = vdwg.mxu0
      %vm645 = vcmp.ge.f32.partialorder %v641, 0.0
      %vm646 = vcmp.ge.f32.partialorder %v643, 0.0
      %v647 = vmul.f32 %v641, 0.01
      %v648 = vmul.f32 %v643, 0.01
      %v649 = vsel %vm645, %v641, %v647
      %v650 = vsel %vm646, %v643, %v648
      %v651 = vpack.c.bf16 %v650, %v649
      %v652 = vld [vmem:[%s6] sm:$0xf]
      %v653 = vld [vmem:[%s6 + $0x4] sm:$0xf]
      %v654 = vld [vmem:[%s6 + $0x8] sm:$0xf]
      %v655 = vld [vmem:[%s6 + $0xc] sm:$0xf]
      %v656 = vld [vmem:[%s6 + $0x10] sm:$0xf]
      %v657 = vld [vmem:[%s6 + $0x14] sm:$0xf]
      %v658 = vld [vmem:[%s6 + $0x18] sm:$0xf]
      %v659 = vld [vmem:[%s6 + $0x1c] sm:$0xf]
      %v660 = vld [vmem:[%s6 + $0x20] sm:$0xf]
      %v661 = vld [vmem:[%s6 + $0x24] sm:$0xf]
      %v662 = vld [vmem:[%s6 + $0x28] sm:$0xf]
      %v663 = vld [vmem:[%s6 + $0x2c] sm:$0xf]
      %v664 = vld [vmem:[%s6 + $0x30] sm:$0xf]
      %v665 = vld [vmem:[%s6 + $0x34] sm:$0xf]
      %v666 = vld [vmem:[%s6 + $0x38] sm:$0xf]
      %v667 = vld [vmem:[%s6 + $0x3c] sm:$0xf]
      %v668 = vld [vmem:[%s7] sm:$0x1]
      %v670 = vperm.slane %v668, 0
      %v688 = vunpack.c.l.b16 %v652
      %v689 = vunpack.c.l.b16 %v653
      %v690 = vunpack.c.l.b16 %v654
      %v691 = vunpack.c.l.b16 %v655
      %v692 = vunpack.c.l.b16 %v656
      %v693 = vunpack.c.l.b16 %v657
      %v694 = vunpack.c.l.b16 %v658
      %v695 = vunpack.c.l.b16 %v659
      %v696 = vunpack.c.l.b16 %v660
      %v697 = vunpack.c.l.b16 %v661
      %v698 = vunpack.c.l.b16 %v662
      %v699 = vunpack.c.l.b16 %v663
      %v700 = vunpack.c.l.b16 %v664
      %v701 = vunpack.c.l.b16 %v665
      %v702 = vunpack.c.l.b16 %v666
      %v703 = vunpack.c.l.b16 %v667
      %v704 = vpack.c.b16 %v689, %v688
      %v705 = vpack.c.b16 %v691, %v690
      %v706 = vpack.c.b16 %v693, %v692
      %v707 = vpack.c.b16 %v695, %v694
      %v708 = vpack.c.b16 %v697, %v696
      %v709 = vpack.c.b16 %v699, %v698
      %v710 = vpack.c.b16 %v701, %v700
      %v711 = vpack.c.b16 %v703, %v702
      %720 = vmatpush.bf16.msra.mxu0 %v711
      %721 = vmatpush.bf16.msra.mxu0 %v710
      %722 = vmatpush.bf16.msra.mxu0 %v709
      %723 = vmatpush.bf16.msra.mxu0 %v708
      %724 = vmatpush.bf16.msra.mxu0 %v707
      %725 = vmatpush.bf16.msra.mxu0 %v706
      %726 = vmatpush.bf16.msra.mxu0 %v705
      %727 = vmatpush.bf16.msra.mxu0 %v704
      %728 = vmatmul.bf16.gmra.mxu0 %v651
      %v729 = vpop.f32.mrf.mxu0
      %v730 = vadd.f32 %v670, %v729
      %v731 = vpop.f32.mrf.mxu0
      %v732 = vadd.f32 %v670, %v731
      %733 = vdwg.mxu0
      %v734 = vtanh.pop %v730
      %v735 = vtanh.pop %v732
      %v736 = vld [vmem:[%s548] sm:$0xff]
      %v737 = vld [vmem:[%s548 + $0x8] sm:$0xff]
      %v738 = vld [vmem:[%s532] sm:$0xff]
      %v739 = vld [vmem:[%s532 + $0x8] sm:$0xff]
      %v740 = vadd.f32 %v734, %v738
      %v741 = vadd.f32 %v735, %v739
      %743 = vset.pattern.permute.xlu0 0
      %744 = vperm.xlu0 %743, %v736
      %v745 = vpop.permute.xlu0 %744
      %748 = vset.pattern.permute.xlu0 0
      %749 = vperm.xlu0 %748, %v737
      %v750 = vpop.permute.xlu0 %749
      %v752 = vmul.f32 %v745, %v740
      %v753 = vmul.f32 %v750, %v741
      %v754 = vld [vmem:[%s8] sm:$0x7]
      %756 = vset.pattern.permute.xlu0 0
      %757 = vperm.xlu0 %756, %v752
      %v758 = vpop.permute.xlu0 %757
      %761 = vset.pattern.permute.xlu0 0
      %762 = vperm.xlu0 %761, %v753
      %v763 = vpop.permute.xlu0 %762
      %v765 = vperm.slane %v754, 0
      %v766 = vmul.f32 %v758, %v765
      %v767 = vmul.f32 %v763, %v765
      %768 = vset.pattern.permute.xlu0 1
      %769 = vperm.xlu0 %768, %v752
      %v770 = vpop.permute.xlu0 %769
      %772 = vset.pattern.permute.xlu0 1
      %773 = vperm.xlu0 %772, %v753
      %v774 = vpop.permute.xlu0 %773
      %v776 = vperm.slane %v754, 1
      %v777 = vmul.f32 %v770, %v776
      %v778 = vmul.f32 %v774, %v776
      %v779 = vadd.f32 %v766, %v777
      %v780 = vadd.f32 %v767, %v778
      %781 = vset.pattern.permute.xlu0 2
      %782 = vperm.xlu0 %781, %v752
      %v783 = vpop.permute.xlu0 %782
      %785 = vset.pattern.permute.xlu0 2
      %786 = vperm.xlu0 %785, %v753
      %v787 = vpop.permute.xlu0 %786
      %v789 = vperm.slane %v754, 2
      %v790 = vmul.f32 %v783, %v789
      %v791 = vmul.f32 %v787, %v789
      %v792 = vadd.f32 %v779, %v790
      %v793 = vadd.f32 %v780, %v791
      %v794 = vld [vmem:[%s542] sm:$0xf]
      %v795 = vld [vmem:[%s542 + $0x4] sm:$0xf]
      %v796 = vld [vmem:[%s9] sm:$0xf]
      %v797 = vld [vmem:[%s9 + $0x4] sm:$0xf]
      %v798 = vld [vmem:[%s9 + $0x8] sm:$0xf]
      %v799 = vld [vmem:[%s9 + $0xc] sm:$0xf]
      %v800 = vld [vmem:[%s9 + $0x10] sm:$0xf]
      %v801 = vld [vmem:[%s9 + $0x14] sm:$0xf]
      %v802 = vld [vmem:[%s9 + $0x18] sm:$0xf]
      %v803 = vld [vmem:[%s9 + $0x1c] sm:$0xf]
      %v804 = vld [vmem:[%s9 + $0x20] sm:$0xf]
      %v805 = vld [vmem:[%s9 + $0x24] sm:$0xf]
      %v806 = vld [vmem:[%s9 + $0x28] sm:$0xf]
      %v807 = vld [vmem:[%s9 + $0x2c] sm:$0xf]
      %v808 = vld [vmem:[%s9 + $0x30] sm:$0xf]
      %v809 = vld [vmem:[%s9 + $0x34] sm:$0xf]
      %v810 = vld [vmem:[%s9 + $0x38] sm:$0xf]
      %v811 = vld [vmem:[%s9 + $0x3c] sm:$0xf]
      %v814 = vunpack.c.l.b16 %v794
      %v815 = vunpack.c.l.b16 %v795
      %v816 = vpack.c.b16 %v815, %v814
      %v834 = vunpack.c.l.b16 %v796
      %v835 = vunpack.c.l.b16 %v797
      %v836 = vunpack.c.l.b16 %v798
      %v837 = vunpack.c.l.b16 %v799
      %v838 = vunpack.c.l.b16 %v800
      %v839 = vunpack.c.l.b16 %v801
      %v840 = vunpack.c.l.b16 %v802
      %v841 = vunpack.c.l.b16 %v803
      %v842 = vunpack.c.l.b16 %v804
      %v843 = vunpack.c.l.b16 %v805
      %v844 = vunpack.c.l.b16 %v806
      %v845 = vunpack.c.l.b16 %v807
      %v846 = vunpack.c.l.b16 %v808
      %v847 = vunpack.c.l.b16 %v809
      %v848 = vunpack.c.l.b16 %v810
      %v849 = vunpack.c.l.b16 %v811
      %v850 = vpack.c.b16 %v835, %v834
      %v851 = vpack.c.b16 %v837, %v836
      %v852 = vpack.c.b16 %v839, %v838
      %v853 = vpack.c.b16 %v841, %v840
      %v854 = vpack.c.b16 %v843, %v842
      %v855 = vpack.c.b16 %v845, %v844
      %v856 = vpack.c.b16 %v847, %v846
      %v857 = vpack.c.b16 %v849, %v848
      %866 = vmatpush.bf16.msra.mxu0 %v857
      %867 = vmatpush.bf16.msra.mxu0 %v856
      %868 = vmatpush.bf16.msra.mxu0 %v855
      %869 = vmatpush.bf16.msra.mxu0 %v854
      %870 = vmatpush.bf16.msra.mxu0 %v853
      %871 = vmatpush.bf16.msra.mxu0 %v852
      %872 = vmatpush.bf16.msra.mxu0 %v851
      %873 = vmatpush.bf16.msra.mxu0 %v850
      %874 = vmatmul.bf16.gmra.mxu0 %v816
      %v875 = vpop.f32.mrf.mxu0
      %v876 = vadd.f32 0.0, %v875
      %v877 = vpop.f32.mrf.mxu0
      %v878 = vadd.f32 0.0, %v877
      %879 = vdwg.mxu0
      %v880 = vadd.f32 %v792, %v876
      %v881 = vadd.f32 %v793, %v878
      %v882 = vld [vmem:[%s10] sm:$0x1]
      %v884 = vperm.slane %v882, 0
      %v886 = vadd.f32 %v880, %v884
      %v887 = vadd.f32 %v881, %v884
      %vm888 = vcmp.ge.f32.partialorder %v886, 0.0
      %vm889 = vcmp.ge.f32.partialorder %v887, 0.0
      %v890 = vmul.f32 %v886, 0.01
      %v891 = vmul.f32 %v887, 0.01
      %v892 = vsel %vm888, %v886, %v890
      %v893 = vsel %vm889, %v887, %v891
      %v894 = vpack.c.bf16 %v893, %v892
      %v895 = vld [vmem:[%s11] sm:$0xf]
      %v896 = vld [vmem:[%s11 + $0x4] sm:$0xf]
      %v897 = vld [vmem:[%s11 + $0x8] sm:$0xf]
      %v898 = vld [vmem:[%s11 + $0xc] sm:$0xf]
      %v899 = vld [vmem:[%s11 + $0x10] sm:$0xf]
      %v900 = vld [vmem:[%s11 + $0x14] sm:$0xf]
      %v901 = vld [vmem:[%s11 + $0x18] sm:$0xf]
      %v902 = vld [vmem:[%s11 + $0x1c] sm:$0xf]
      %v903 = vld [vmem:[%s11 + $0x20] sm:$0xf]
      %v904 = vld [vmem:[%s11 + $0x24] sm:$0xf]
      %v905 = vld [vmem:[%s11 + $0x28] sm:$0xf]
      %v906 = vld [vmem:[%s11 + $0x2c] sm:$0xf]
      %v907 = vld [vmem:[%s11 + $0x30] sm:$0xf]
      %v908 = vld [vmem:[%s11 + $0x34] sm:$0xf]
      %v909 = vld [vmem:[%s11 + $0x38] sm:$0xf]
      %v910 = vld [vmem:[%s11 + $0x3c] sm:$0xf]
      %v911 = vld [vmem:[%s12] sm:$0x1]
      %v913 = vperm.slane %v911, 0
      %v931 = vunpack.c.l.b16 %v895
      %v932 = vunpack.c.l.b16 %v896
      %v933 = vunpack.c.l.b16 %v897
      %v934 = vunpack.c.l.b16 %v898
      %v935 = vunpack.c.l.b16 %v899
      %v936 = vunpack.c.l.b16 %v900
      %v937 = vunpack.c.l.b16 %v901
      %v938 = vunpack.c.l.b16 %v902
      %v939 = vunpack.c.l.b16 %v903
      %v940 = vunpack.c.l.b16 %v904
      %v941 = vunpack.c.l.b16 %v905
      %v942 = vunpack.c.l.b16 %v906
      %v943 = vunpack.c.l.b16 %v907
      %v944 = vunpack.c.l.b16 %v908
      %v945 = vunpack.c.l.b16 %v909
      %v946 = vunpack.c.l.b16 %v910
      %v947 = vpack.c.b16 %v932, %v931
      %v948 = vpack.c.b16 %v934, %v933
      %v949 = vpack.c.b16 %v936, %v935
      %v950 = vpack.c.b16 %v938, %v937
      %v951 = vpack.c.b16 %v940, %v939
      %v952 = vpack.c.b16 %v942, %v941
      %v953 = vpack.c.b16 %v944, %v943
      %v954 = vpack.c.b16 %v946, %v945
      %963 = vmatpush.bf16.msra.mxu0 %v954
      %964 = vmatpush.bf16.msra.mxu0 %v953
      %965 = vmatpush.bf16.msra.mxu0 %v952
      %966 = vmatpush.bf16.msra.mxu0 %v951
      %967 = vmatpush.bf16.msra.mxu0 %v950
      %968 = vmatpush.bf16.msra.mxu0 %v949
      %969 = vmatpush.bf16.msra.mxu0 %v948
      %970 = vmatpush.bf16.msra.mxu0 %v947
      %971 = vmatmul.bf16.gmra.mxu0 %v894
      %v972 = vpop.f32.mrf.mxu0
      %v973 = vadd.f32 %v913, %v972
      %v974 = vpop.f32.mrf.mxu0
      %v975 = vadd.f32 %v913, %v974
      %976 = vdwg.mxu0
      %v977 = vadd.f32 %v560, %v973
      %v978 = vadd.f32 %v561, %v975
      %979 = vst [vmem:[%s558] sm:$0xff] %v977
      %980 = vst [vmem:[%s558 + $0x8] sm:$0xff] %v978
      %s981 = smul.u32 2, %s29
      %p982 = scmp.lt.s32.totalorder %s28, 1
      %s983 = scalar_select %p982, %s28, 1
      %p984 = scmp.lt.s32.totalorder %s981, 1
      %s985 = scalar_select %p984, %s981, 1
      %s986 = smul.addr %s983, 2
      %s987 = sadd.s32 %s985, %s986
      %s988 = smul.addr %s987, 8
      %s989 = scalar_lea.vmem %s13, %s988
      // Predicated region
      $region73: #{generator_forward.11} parent=71 // pred_check
        %p990 = pneg %p353
      $region74: #{generator_forward.11} parent=71 // pred_check_branch
        %992 = sbr.rel (%p990) target = $region76
      $region75: #{generator_forward.11} parent=71 // pred_region
        %s993 = smul.u32 2, %s29
      $region76: #{generator_forward.11} parent=71 // pred_fallthru
        _
    $region72: #{generator_forward.11} parent=5 // pred_fallthru
      _
    %p994 = scmp.le.s32.totalorder 2, %s19
    // Predicated region
    $region77: #{generator_forward.11} parent=5 // pred_check
      %p995 = pneg %p994
    $region78: #{generator_forward.11} parent=5 // pred_check_branch
      %997 = sbr.rel (%p995) target = $region80
    $region79: #{generator_forward.11} parent=5 // pred_region
      %s998 = ssub.s32 %s19, 2
      // Predicated region
      $region81: #{generator_forward.11} parent=79 // pred_check
        %p999 = pneg %p359
      $region82: #{generator_forward.11} parent=79 // pred_check_branch
        %1001 = sbr.rel (%p999) target = $region84
      $region83: #{generator_forward.11} parent=79 // pred_region
        %s1002 = smul.u32 2, %s31
        %p1003 = scmp.lt.s32.totalorder %s30, 1
        %s1004 = scalar_select %p1003, %s30, 1
        %p1005 = scmp.lt.s32.totalorder %s1002, 1
        %s1006 = scalar_select %p1005, %s1002, 1
        %s1007 = smul.addr %s1004, 2
        %s1008 = sadd.s32 %s1006, %s1007
        %s1009 = smul.addr %s1008, 8
        %s1010 = scalar_lea.vmem %s13, %s1009
      $region84: #{generator_forward.11} parent=79 // pred_fallthru
        _
    $region80: #{generator_forward.11} parent=5 // pred_fallthru
      _
  $region6: #{generator_forward.11} parent=0 // loop_footer
    %s23 = sadd.s32 1, %s19
  $region7: #{generator_forward.11} parent=0 // loop_footer_branch
    %18 = sbr.rel target = $region3
  $region8: #{generator_forward.11} parent=0 // loop_exit
    _

// kernel: generator_forward.13
$region0: #{generator_forward.13}
  #allocation0 [shape = 'u32[]', space=smem, size = 0x4, offset = 0x4, fixed_abs, tag = 'smem constant byte address 0x4 - core index']
  #allocation1 [shape = 'u32[72,128]{1,0:T(1,128)}', space=vmem, size = 0x9000, scoped, tag = 'internal scratch']
  %s0 = inlined_call_operand.vmem [shape: f32[2,16,128], index: 0, kind: input, shape index: {}]
  %s1 = inlined_call_operand.vmem [shape: f32[2,1,128], index: 1, kind: input, shape index: {}]
  %s2 = inlined_call_operand.vmem [shape: bf16[128,128], index: 2, kind: input, shape index: {}]
  %s3 = inlined_call_operand.vmem [shape: bf16[128,64], index: 3, kind: input, shape index: {}]
  %s4 = inlined_call_operand.vmem [shape: f32[1,64], index: 4, kind: input, shape index: {}]
  %s5 = inlined_call_operand.vmem [shape: bf16[3,64], index: 5, kind: input, shape index: {}]
  %s6 = inlined_call_operand.vmem [shape: f32[3,1], index: 6, kind: input, shape index: {}]
  %s7 = inlined_call_operand.vmem [shape: f32[2,3,16], index: 7, kind: output, shape index: {}]
  %s8 = sld [smem:[#allocation0]]
  $region61: #{generator_forward.13} parent=0
    _
  %s10 = ssub.s32 1, %s8
  %s11 = scalar_select 0, %s10, %s8
  loop: start=0, step=1, limit=4
  $region2: #{generator_forward.13} parent=0 // loop_pre_header
    _
  $region3: #{generator_forward.13} parent=0 // loop_header
    %s13 = sphi 0, %s17
    %p14 = scmp.ge.s32.totalorder %s13, 4
    %s20 = sphi 0, %s32
    %s21 = sphi 0, %s28
    %s22 = sphi 0, %s20
    %s23 = sphi 0, %s21
    %s24 = sphi 0, %s22
    %s25 = sphi 0, %s23
    %s37 = sphi 0, %s39
    %s40 = sphi 0, %s37
    %s41 = sphi 0, %s40
    %s57 = sphi 0, %s41
    %s63 = sphi 0, %s65
    %s66 = sphi 0, %s63
    %s67 = sphi 0, %s66
    %s83 = sphi 0, %s67
    %s87 = sphi 0, %s87
    %s89 = sphi 0, %s87
    %s90 = sphi 0, %s89
    %s104 = sphi 0, %s90
    %s108 = sphi 0, %s108
    %s110 = sphi 0, %s108
    %s111 = sphi 0, %s110
    %s125 = sphi 0, %s111
    %s129 = sphi 0, %s129
    %s131 = sphi 0, %s129
    %s132 = sphi 0, %s131
    %s146 = sphi 0, %s132
    %s150 = sphi 0, %s150
    %s152 = sphi 0, %s150
    %s153 = sphi 0, %s152
    %s167 = sphi 0, %s153
    %s171 = sphi 0, %s171
    %s173 = sphi 0, %s171
    %s174 = sphi 0, %s173
    %s188 = sphi 0, %s174
    %s196 = sphi 0, %s198
    %s199 = sphi 0, %s196
    %s200 = sphi 0, %s199
    %s216 = sphi 0, %s200
  $region4: #{generator_forward.13} parent=0 // loop_header_branch
    %16 = sbr.rel (%p14) target = $region8
  $region5: #{generator_forward.13} parent=0 // loop_body
    %s18 = ssub.s32 %s13, 1
    %s19 = ssub.s32 %s13, 2
    %s26 = sadd.s32 1, %s21
    %p27 = scmp.ge.s32.totalorder %s26, 1
    %s28 = scalar_select %p27, 0, %s26
    %s29 = sadd.s32 1, %s20
    %s30 = scalar_select %p27, %s29, %s20
    %p31 = scmp.ge.s32.totalorder %s30, 2
    %s32 = scalar_select %p31, 0, %s30
    %s33 = ssub.s32 %s20, %s32
    %s34 = ssub.s32 %s21, %s28
    %s35 = sor.u32 %s33, %s34
    %p36 = scmp.eq.s32.totalorder %s35, 0
    %s38 = sadd.s32 %s37, 1
    %s39 = scalar_select %p36, %s37, %s38
    %p42 = pneg %p36
    %p43 = scmp.eq.s32.totalorder %s13, 1
    %p44 = por %p42, %p43
    %p45 = scmp.ne.s32.totalorder %s37, %s40
    %p46 = scmp.eq.s32.totalorder %s13, 0
    %p47 = por %p45, %p46
    %p48 = scmp.ne.s32.totalorder %s37, %s40
    %p49 = scmp.eq.s32.totalorder %s18, 1
    %p50 = por %p48, %p49
    %p51 = scmp.ne.s32.totalorder %s40, %s41
    %p52 = scmp.eq.s32.totalorder %s18, 0
    %p53 = por %p51, %p52
    %p54 = scmp.ne.s32.totalorder %s40, %s41
    %p55 = scmp.eq.s32.totalorder %s19, 1
    %p56 = por %p54, %p55
    %p58 = scmp.ne.s32.totalorder %s41, %s57
    %p59 = scmp.eq.s32.totalorder %s19, 0
    %p60 = por %p58, %p59
    %s61 = ssub.s32 %s20, %s32
    %p62 = scmp.eq.s32.totalorder %s61, 0
    %s64 = sadd.s32 %s63, 1
    %s65 = scalar_select %p62, %s63, %s64
    %p68 = pneg %p62
    %p69 = scmp.eq.s32.totalorder %s13, 1
    %p70 = por %p68, %p69
    %p71 = scmp.ne.s32.totalorder %s63, %s66
    %p72 = scmp.eq.s32.totalorder %s13, 0
    %p73 = por %p71, %p72
    %p74 = scmp.ne.s32.totalorder %s63, %s66
    %p75 = scmp.eq.s32.totalorder %s18, 1
    %p76 = por %p74, %p75
    %p77 = scmp.ne.s32.totalorder %s66, %s67
    %p78 = scmp.eq.s32.totalorder %s18, 0
    %p79 = por %p77, %p78
    %p80 = scmp.ne.s32.totalorder %s66, %s67
    %p81 = scmp.eq.s32.totalorder %s19, 1
    %p82 = por %p80, %p81
    %p84 = scmp.ne.s32.totalorder %s67, %s83
    %p85 = scmp.eq.s32.totalorder %s19, 0
    %p86 = por %p84, %p85
    %s88 = sadd.s32 %s87, 1
    %p91 = scmp.eq.s32.totalorder %s13, 1
    %p92 = scmp.ne.s32.totalorder %s87, %s89
    %p93 = scmp.eq.s32.totalorder %s13, 0
    %p94 = por %p92, %p93
    %p95 = scmp.ne.s32.totalorder %s87, %s89
    %p96 = scmp.eq.s32.totalorder %s18, 1
    %p97 = por %p95, %p96
    %p98 = scmp.ne.s32.totalorder %s89, %s90
    %p99 = scmp.eq.s32.totalorder %s18, 0
    %p100 = por %p98, %p99
    %p101 = scmp.ne.s32.totalorder %s89, %s90
    %p102 = scmp.eq.s32.totalorder %s19, 1
    %p103 = por %p101, %p102
    %p105 = scmp.ne.s32.totalorder %s90, %s104
    %p106 = scmp.eq.s32.totalorder %s19, 0
    %p107 = por %p105, %p106
    %s109 = sadd.s32 %s108, 1
    %p112 = scmp.eq.s32.totalorder %s13, 1
    %p113 = scmp.ne.s32.totalorder %s108, %s110
    %p114 = scmp.eq.s32.totalorder %s13, 0
    %p115 = por %p113, %p114
    %p116 = scmp.ne.s32.totalorder %s108, %s110
    %p117 = scmp.eq.s32.totalorder %s18, 1
    %p118 = por %p116, %p117
    %p119 = scmp.ne.s32.totalorder %s110, %s111
    %p120 = scmp.eq.s32.totalorder %s18, 0
    %p121 = por %p119, %p120
    %p122 = scmp.ne.s32.totalorder %s110, %s111
    %p123 = scmp.eq.s32.totalorder %s19, 1
    %p124 = por %p122, %p123
    %p126 = scmp.ne.s32.totalorder %s111, %s125
    %p127 = scmp.eq.s32.totalorder %s19, 0
    %p128 = por %p126, %p127
    %s130 = sadd.s32 %s129, 1
    %p133 = scmp.eq.s32.totalorder %s13, 1
    %p134 = scmp.ne.s32.totalorder %s129, %s131
    %p135 = scmp.eq.s32.totalorder %s13, 0
    %p136 = por %p134, %p135
    %p137 = scmp.ne.s32.totalorder %s129, %s131
    %p138 = scmp.eq.s32.totalorder %s18, 1
    %p139 = por %p137, %p138
    %p140 = scmp.ne.s32.totalorder %s131, %s132
    %p141 = scmp.eq.s32.totalorder %s18, 0
    %p142 = por %p140, %p141
    %p143 = scmp.ne.s32.totalorder %s131, %s132
    %p144 = scmp.eq.s32.totalorder %s19, 1
    %p145 = por %p143, %p144
    %p147 = scmp.ne.s32.totalorder %s132, %s146
    %p148 = scmp.eq.s32.totalorder %s19, 0
    %p149 = por %p147, %p148
    %s151 = sadd.s32 %s150, 1
    %p154 = scmp.eq.s32.totalorder %s13, 1
    %p155 = scmp.ne.s32.totalorder %s150, %s152
    %p156 = scmp.eq.s32.totalorder %s13, 0
    %p157 = por %p155, %p156
    %p158 = scmp.ne.s32.totalorder %s150, %s152
    %p159 = scmp.eq.s32.totalorder %s18, 1
    %p160 = por %p158, %p159
    %p161 = scmp.ne.s32.totalorder %s152, %s153
    %p162 = scmp.eq.s32.totalorder %s18, 0
    %p163 = por %p161, %p162
    %p164 = scmp.ne.s32.totalorder %s152, %s153
    %p165 = scmp.eq.s32.totalorder %s19, 1
    %p166 = por %p164, %p165
    %p168 = scmp.ne.s32.totalorder %s153, %s167
    %p169 = scmp.eq.s32.totalorder %s19, 0
    %p170 = por %p168, %p169
    %s172 = sadd.s32 %s171, 1
    %p175 = scmp.eq.s32.totalorder %s13, 1
    %p176 = scmp.ne.s32.totalorder %s171, %s173
    %p177 = scmp.eq.s32.totalorder %s13, 0
    %p178 = por %p176, %p177
    %p179 = scmp.ne.s32.totalorder %s171, %s173
    %p180 = scmp.eq.s32.totalorder %s18, 1
    %p181 = por %p179, %p180
    %p182 = scmp.ne.s32.totalorder %s173, %s174
    %p183 = scmp.eq.s32.totalorder %s18, 0
    %p184 = por %p182, %p183
    %p185 = scmp.ne.s32.totalorder %s173, %s174
    %p186 = scmp.eq.s32.totalorder %s19, 1
    %p187 = por %p185, %p186
    %p189 = scmp.ne.s32.totalorder %s174, %s188
    %p190 = scmp.eq.s32.totalorder %s19, 0
    %p191 = por %p189, %p190
    %s192 = ssub.s32 %s20, %s32
    %s193 = ssub.s32 %s21, %s28
    %s194 = sor.u32 %s192, %s193
    %p195 = scmp.eq.s32.totalorder %s194, 0
    %s197 = sadd.s32 %s196, 1
    %s198 = scalar_select %p195, %s196, %s197
    %p201 = pneg %p195
    %p202 = scmp.eq.s32.totalorder %s13, 1
    %p203 = por %p201, %p202
    %p204 = scmp.ne.s32.totalorder %s196, %s199
    %p205 = scmp.eq.s32.totalorder %s13, 0
    %p206 = por %p204, %p205
    %p207 = scmp.ne.s32.totalorder %s196, %s199
    %p208 = scmp.eq.s32.totalorder %s18, 1
    %p209 = por %p207, %p208
    %p210 = scmp.ne.s32.totalorder %s199, %s200
    %p211 = scmp.eq.s32.totalorder %s18, 0
    %p212 = por %p210, %p211
    %p213 = scmp.ne.s32.totalorder %s199, %s200
    %p214 = scmp.eq.s32.totalorder %s19, 1
    %p215 = por %p213, %p214
    %p217 = scmp.ne.s32.totalorder %s200, %s216
    %p218 = scmp.eq.s32.totalorder %s19, 0
    %p219 = por %p217, %p218
    %p220 = scmp.le.s32.totalorder 1, %s13
    %p221 = scmp.lt.s32.totalorder %s13, 3
    %p222 = pnand %p220, %p221
    %p223 = pneg %p222
    // Predicated region
    $region9: #{generator_forward.13} parent=5 // pred_check
      _
    $region10: #{generator_forward.13} parent=5 // pred_check_branch
      %225 = sbr.rel (%p222) target = $region12
    $region11: #{generator_forward.13} parent=5 // pred_region
      %s226 = ssub.s32 %s13, 1
      // Predicated region
      $region13: #{generator_forward.13} parent=11 // pred_check
        %p227 = pneg %p100
      $region14: #{generator_forward.13} parent=11 // pred_check_branch
        %229 = sbr.rel (%p227) target = $region16
      $region15: #{generator_forward.13} parent=11 // pred_region
        _
      $region16: #{generator_forward.13} parent=11 // pred_fallthru
        _
      // Predicated region
      $region17: #{generator_forward.13} parent=11 // pred_check
        %p230 = pneg %p121
      $region18: #{generator_forward.13} parent=11 // pred_check_branch
        %232 = sbr.rel (%p230) target = $region20
      $region19: #{generator_forward.13} parent=11 // pred_region
        _
      $region20: #{generator_forward.13} parent=11 // pred_fallthru
        _
      // Predicated region
      $region21: #{generator_forward.13} parent=11 // pred_check
        %p233 = pneg %p142
      $region22: #{generator_forward.13} parent=11 // pred_check_branch
        %235 = sbr.rel (%p233) target = $region24
      $region23: #{generator_forward.13} parent=11 // pred_region
        _
      $region24: #{generator_forward.13} parent=11 // pred_fallthru
        _
      // Predicated region
      $region25: #{generator_forward.13} parent=11 // pred_check
        %p236 = pneg %p163
      $region26: #{generator_forward.13} parent=11 // pred_check_branch
        %238 = sbr.rel (%p236) target = $region28
      $region27: #{generator_forward.13} parent=11 // pred_region
        _
      $region28: #{generator_forward.13} parent=11 // pred_fallthru
        _
      // Predicated region
      $region29: #{generator_forward.13} parent=11 // pred_check
        %p239 = pneg %p184
      $region30: #{generator_forward.13} parent=11 // pred_check_branch
        %241 = sbr.rel (%p239) target = $region32
      $region31: #{generator_forward.13} parent=11 // pred_region
        _
      $region32: #{generator_forward.13} parent=11 // pred_fallthru
        _
    $region12: #{generator_forward.13} parent=5 // pred_fallthru
      _
    %p242 = scmp.lt.s32.totalorder %s13, 2
    // Predicated region
    $region33: #{generator_forward.13} parent=5 // pred_check
      %p243 = pneg %p242
    $region34: #{generator_forward.13} parent=5 // pred_check_branch
      %245 = sbr.rel (%p243) target = $region36
    $region35: #{generator_forward.13} parent=5 // pred_region
      // Predicated region
      $region37: #{generator_forward.13} parent=35 // pred_check
        %p246 = pneg %p47
      $region38: #{generator_forward.13} parent=35 // pred_check_branch
        %248 = sbr.rel (%p246) target = $region40
      $region39: #{generator_forward.13} parent=35 // pred_region
        %s249 = smul.u32 2, %s21
        %p250 = scmp.lt.s32.totalorder %s20, 1
        %s251 = scalar_select %p250, %s20, 1
        %p252 = scmp.lt.s32.totalorder %s249, 1
        %s253 = scalar_select %p252, %s249, 1
        %s254 = smul.addr %s251, 2
        %s255 = sadd.s32 %s253, %s254
        %s256 = smul.addr %s255, 8
        %s257 = scalar_lea.vmem %s0, %s256
        %s258 = smul.u32 2, %s21
      $region40: #{generator_forward.13} parent=35 // pred_fallthru
        _
      // Predicated region
      $region41: #{generator_forward.13} parent=35 // pred_check
        %p259 = pneg %p73
      $region42: #{generator_forward.13} parent=35 // pred_check_branch
        %261 = sbr.rel (%p259) target = $region44
      $region43: #{generator_forward.13} parent=35 // pred_region
        %p262 = scmp.lt.s32.totalorder %s20, 1
        %s263 = scalar_select %p262, %s20, 1
        %s264 = scalar_lea.vmem %s1, %s263
      $region44: #{generator_forward.13} parent=35 // pred_fallthru
        _
    $region36: #{generator_forward.13} parent=5 // pred_fallthru
      _
    %p265 = scmp.le.s32.totalorder 1, %s13
    %p266 = scmp.lt.s32.totalorder %s13, 3
    %p267 = pnand %p265, %p266
    %p268 = pneg %p267
    // Predicated region
    $region45: #{generator_forward.13} parent=5 // pred_check
      _
    $region46: #{generator_forward.13} parent=5 // pred_check_branch
      %270 = sbr.rel (%p267) target = $region48
    $region47: #{generator_forward.13} parent=5 // pred_region
      %s271 = ssub.s32 %s13, 1
      %s272 = smul.u32 2, %s23
      %p273 = scmp.lt.s32.totalorder %s22, 1
      %s274 = scalar_select %p273, %s22, 1
      %p275 = scmp.lt.s32.totalorder %s272, 1
      %s276 = scalar_select %p275, %s272, 1
      %s277 = smul.addr %s274, 2
      %s278 = sadd.s32 %s276, %s277
      %s279 = smul.addr %s278, 8
      %s280 = scalar_lea.vmem %s0, %s279
      %p281 = pneg %p53
      %p282 = pneg %p50
      %p283 = scmp.lt.s32.totalorder %s22, 1
      %s284 = scalar_select %p283, %s22, 1
      %s285 = scalar_lea.vmem %s1, %s284
      %p286 = pneg %p79
      %p287 = pneg %p76
      %p288 = pneg %p100
      %p289 = pneg %p97
      %p290 = pneg %p121
      %p291 = pneg %p118
      %p292 = pneg %p142
      %p293 = pneg %p139
      %p294 = pneg %p163
      %p295 = pneg %p160
      %p296 = pneg %p184
      %p297 = pneg %p181
      %p298 = pneg %p212
      %p299 = pneg %p209
      %p300 = scmp.lt.s32.totalorder %s22, 1
      %s301 = scalar_select %p300, %s22, 1
      %p302 = scmp.lt.s32.totalorder %s23, 0
      %s303 = scalar_select %p302, %s23, 0
      %s304 = sadd.s32 %s303, %s301
      %s305 = smul.addr %s304, 4
      %s306 = scalar_lea.vmem %s7, %s305
      %s307 = smul.u32 2, %s23
      %p308 = scmp.lt.s32.totalorder %s22, 1
      %s309 = scalar_select %p308, %s22, 1
      %p310 = scmp.lt.s32.totalorder %s307, 1
      %s311 = scalar_select %p310, %s307, 1
      %s312 = smul.addr %s309, 2
      %s313 = sadd.s32 %s311, %s312
      %s314 = smul.addr %s313, 8
      %s315 = scalar_lea.vmem %s0, %s314
      %s316 = smul.u32 2, %s23
      %p317 = scmp.lt.s32.totalorder %s22, 1
      %s318 = scalar_select %p317, %s22, 1
      %s319 = scalar_lea.vmem %s1, %s318
      %p320 = scmp.lt.s32.totalorder %s22, 1
      %s321 = scalar_select %p320, %s22, 1
      %p322 = scmp.lt.s32.totalorder %s23, 0
      %s323 = scalar_select %p322, %s23, 0
      %s324 = sadd.s32 %s323, %s321
      %s325 = smul.addr %s324, 4
      %s326 = scalar_lea.vmem %s7, %s325
      %v328 = vld [vmem:[%s315] sm:$0xff]
      %v329 = vld [vmem:[%s315 + $0x8] sm:$0xff]
      %v330 = vpack.c.bf16 %v329, %v328
      %v331 = vld [vmem:[%s2] sm:$0xf]
      %v332 = vld [vmem:[%s2 + $0x4] sm:$0xf]
      %v333 = vld [vmem:[%s2 + $0x8] sm:$0xf]
      %v334 = vld [vmem:[%s2 + $0xc] sm:$0xf]
      %v335 = vld [vmem:[%s2 + $0x10] sm:$0xf]
      %v336 = vld [vmem:[%s2 + $0x14] sm:$0xf]
      %v337 = vld [vmem:[%s2 + $0x18] sm:$0xf]
      %v338 = vld [vmem:[%s2 + $0x1c] sm:$0xf]
      %v339 = vld [vmem:[%s2 + $0x20] sm:$0xf]
      %v340 = vld [vmem:[%s2 + $0x24] sm:$0xf]
      %v341 = vld [vmem:[%s2 + $0x28] sm:$0xf]
      %v342 = vld [vmem:[%s2 + $0x2c] sm:$0xf]
      %v343 = vld [vmem:[%s2 + $0x30] sm:$0xf]
      %v344 = vld [vmem:[%s2 + $0x34] sm:$0xf]
      %v345 = vld [vmem:[%s2 + $0x38] sm:$0xf]
      %v346 = vld [vmem:[%s2 + $0x3c] sm:$0xf]
      %v347 = vld [vmem:[%s319] sm:$0x1]
      %v349 = vperm.slane %v347, 0
      %v367 = vunpack.c.l.b16 %v331
      %v368 = vunpack.c.l.b16 %v332
      %v369 = vunpack.c.l.b16 %v333
      %v370 = vunpack.c.l.b16 %v334
      %v371 = vunpack.c.l.b16 %v335
      %v372 = vunpack.c.l.b16 %v336
      %v373 = vunpack.c.l.b16 %v337
      %v374 = vunpack.c.l.b16 %v338
      %v375 = vunpack.c.l.b16 %v339
      %v376 = vunpack.c.l.b16 %v340
      %v377 = vunpack.c.l.b16 %v341
      %v378 = vunpack.c.l.b16 %v342
      %v379 = vunpack.c.l.b16 %v343
      %v380 = vunpack.c.l.b16 %v344
      %v381 = vunpack.c.l.b16 %v345
      %v382 = vunpack.c.l.b16 %v346
      %v383 = vpack.c.b16 %v368, %v367
      %v384 = vpack.c.b16 %v370, %v369
      %v385 = vpack.c.b16 %v372, %v371
      %v386 = vpack.c.b16 %v374, %v373
      %v387 = vpack.c.b16 %v376, %v375
      %v388 = vpack.c.b16 %v378, %v377
      %v389 = vpack.c.b16 %v380, %v379
      %v390 = vpack.c.b16 %v382, %v381
      %399 = vmatpush.bf16.msra.mxu0 %v390
      %400 = vmatpush.bf16.msra.mxu0 %v389
      %401 = vmatpush.bf16.msra.mxu0 %v388
      %402 = vmatpush.bf16.msra.mxu0 %v387
      %403 = vmatpush.bf16.msra.mxu0 %v386
      %404 = vmatpush.bf16.msra.mxu0 %v385
      %405 = vmatpush.bf16.msra.mxu0 %v384
      %406 = vmatpush.bf16.msra.mxu0 %v383
      %407 = vmatmul.bf16.gmra.mxu0 %v330
      %v408 = vpop.f32.mrf.mxu0
      %v409 = vadd.f32 %v349, %v408
      %v410 = vpop.f32.mrf.mxu0
      %v411 = vadd.f32 %v349, %v410
      %412 = vdwg.mxu0
      %vm413 = vcmp.ge.f32.partialorder %v409, 0.0
      %vm414 = vcmp.ge.f32.partialorder %v411, 0.0
      %v415 = vmul.f32 %v409, 0.01
      %v416 = vmul.f32 %v411, 0.01
      %v417 = vsel %vm413, %v409, %v415
      %v418 = vsel %vm414, %v411, %v416
      %v419 = vpack.c.bf16 %v418, %v417
      %v420 = vld [vmem:[%s3] sm:$0xf]
      %v421 = vld [vmem:[%s3 + $0x4] sm:$0xf]
      %v422 = vld [vmem:[%s3 + $0x8] sm:$0xf]
      %v423 = vld [vmem:[%s3 + $0xc] sm:$0xf]
      %v424 = vld [vmem:[%s3 + $0x10] sm:$0xf]
      %v425 = vld [vmem:[%s3 + $0x14] sm:$0xf]
      %v426 = vld [vmem:[%s3 + $0x18] sm:$0xf]
      %v427 = vld [vmem:[%s3 + $0x1c] sm:$0xf]
      %v428 = vld [vmem:[%s3 + $0x20] sm:$0xf]
      %v429 = vld [vmem:[%s3 + $0x24] sm:$0xf]
      %v430 = vld [vmem:[%s3 + $0x28] sm:$0xf]
      %v431 = vld [vmem:[%s3 + $0x2c] sm:$0xf]
      %v432 = vld [vmem:[%s3 + $0x30] sm:$0xf]
      %v433 = vld [vmem:[%s3 + $0x34] sm:$0xf]
      %v434 = vld [vmem:[%s3 + $0x38] sm:$0xf]
      %v435 = vld [vmem:[%s3 + $0x3c] sm:$0xf]
      %v436 = vld [vmem:[%s4] sm:$0x1]
      %v438 = vperm.slane %v436, 0
      %v456 = vunpack.c.l.b16 %v420
      %v457 = vunpack.c.l.b16 %v421
      %v458 = vunpack.c.l.b16 %v422
      %v459 = vunpack.c.l.b16 %v423
      %v460 = vunpack.c.l.b16 %v424
      %v461 = vunpack.c.l.b16 %v425
      %v462 = vunpack.c.l.b16 %v426
      %v463 = vunpack.c.l.b16 %v427
      %v464 = vunpack.c.l.b16 %v428
      %v465 = vunpack.c.l.b16 %v429
      %v466 = vunpack.c.l.b16 %v430
      %v467 = vunpack.c.l.b16 %v431
      %v468 = vunpack.c.l.b16 %v432
      %v469 = vunpack.c.l.b16 %v433
      %v470 = vunpack.c.l.b16 %v434
      %v471 = vunpack.c.l.b16 %v435
      %v472 = vpack.c.b16 %v457, %v456
      %v473 = vpack.c.b16 %v459, %v458
      %v474 = vpack.c.b16 %v461, %v460
      %v475 = vpack.c.b16 %v463, %v462
      %v476 = vpack.c.b16 %v465, %v464
      %v477 = vpack.c.b16 %v467, %v466
      %v478 = vpack.c.b16 %v469, %v468
      %v479 = vpack.c.b16 %v471, %v470
      %488 = vmatpush.bf16.msra.mxu0 %v479
      %489 = vmatpush.bf16.msra.mxu0 %v478
      %490 = vmatpush.bf16.msra.mxu0 %v477
      %491 = vmatpush.bf16.msra.mxu0 %v476
      %492 = vmatpush.bf16.msra.mxu0 %v475
      %493 = vmatpush.bf16.msra.mxu0 %v474
      %494 = vmatpush.bf16.msra.mxu0 %v473
      %495 = vmatpush.bf16.msra.mxu0 %v472
      %496 = vmatmul.bf16.gmra.mxu0 %v419
      %v497 = vpop.f32.mrf.mxu0
      %v498 = vadd.f32 %v438, %v497
      %v499 = vpop.f32.mrf.mxu0
      %v500 = vadd.f32 %v438, %v499
      %501 = vdwg.mxu0
      %vm502 = vcmp.ge.f32.partialorder %v498, 0.0
      %vm503 = vcmp.ge.f32.partialorder %v500, 0.0
      %v504 = vmul.f32 %v498, 0.01
      %v505 = vmul.f32 %v500, 0.01
      %v506 = vsel %vm502, %v498, %v504
      %v507 = vsel %vm503, %v500, %v505
      %v508 = vld [vmem:[%s5] sm:$0x3]
      %v509 = vpack.c.bf16 %v507, %v506
      %v510 = vld [vmem:[%s6] sm:$0x7]
      %512 = vset.pattern.permute.xlu0 0
      %513 = vperm.xlu0 %512, %v510
      %v514 = vpop.permute.xlu0 %513
      %vm516 = vcmask 523264
      %v518 = vsel %vm516, %v508, 0
      %v521 = vsel %vm516, %v509, 0
      %523 = vmatpush.bf16.xpose.msra.mxu0 0
      %524 = vmatpush.bf16.xpose.msra.mxu0 0
      %525 = vmatpush.bf16.xpose.msra.mxu0 0
      %526 = vmatpush.bf16.xpose.msra.mxu0 0
      %527 = vmatpush.bf16.xpose.msra.mxu0 0
      %528 = vmatpush.bf16.xpose.msra.mxu0 0
      %529 = vmatpush.bf16.xpose.msra.mxu0 0
      %530 = vmatpush.bf16.xpose.msra.mxu0 %v521
      %531 = vmatmul.bf16.gmra.mxu0 %v518
      %v532 = vpop.f32.mrf.mxu0
      %v533 = vadd.f32 %v514, %v532
      %v534 = vpop.f32.mrf.mxu0
      %535 = vdwg.mxu0
      %v536 = vtanh.pop %v533
      %vm537 = vcmask 124928
      %538 = vst.msk [vmem:[%s326] sm:$0x7] %vm537, %v536
      %p539 = scmp.lt.s32.totalorder %s22, 1
      %s540 = scalar_select %p539, %s22, 1
      %p541 = scmp.lt.s32.totalorder %s23, 0
      %s542 = scalar_select %p541, %s23, 0
      %s543 = sadd.s32 %s542, %s540
      %s544 = smul.addr %s543, 4
      %s545 = scalar_lea.vmem %s7, %s544
      // Predicated region
      $region49: #{generator_forward.13} parent=47 // pred_check
        %p546 = pneg %p209
      $region50: #{generator_forward.13} parent=47 // pred_check_branch
        %548 = sbr.rel (%p546) target = $region52
      $region51: #{generator_forward.13} parent=47 // pred_region
        _
      $region52: #{generator_forward.13} parent=47 // pred_fallthru
        _
    $region48: #{generator_forward.13} parent=5 // pred_fallthru
      _
    %p549 = scmp.le.s32.totalorder 2, %s13
    // Predicated region
    $region53: #{generator_forward.13} parent=5 // pred_check
      %p550 = pneg %p549
    $region54: #{generator_forward.13} parent=5 // pred_check_branch
      %552 = sbr.rel (%p550) target = $region56
    $region55: #{generator_forward.13} parent=5 // pred_region
      %s553 = ssub.s32 %s13, 2
      // Predicated region
      $region57: #{generator_forward.13} parent=55 // pred_check
        %p554 = pneg %p215
      $region58: #{generator_forward.13} parent=55 // pred_check_branch
        %556 = sbr.rel (%p554) target = $region60
      $region59: #{generator_forward.13} parent=55 // pred_region
        %p557 = scmp.lt.s32.totalorder %s24, 1
        %s558 = scalar_select %p557, %s24, 1
        %p559 = scmp.lt.s32.totalorder %s25, 0
        %s560 = scalar_select %p559, %s25, 0
        %s561 = sadd.s32 %s560, %s558
        %s562 = smul.addr %s561, 4
        %s563 = scalar_lea.vmem %s7, %s562
      $region60: #{generator_forward.13} parent=55 // pred_fallthru
        _
    $region56: #{generator_forward.13} parent=5 // pred_fallthru
      _
  $region6: #{generator_forward.13} parent=0 // loop_footer
    %s17 = sadd.s32 1, %s13
  $region7: #{generator_forward.13} parent=0 // loop_footer_branch
    %12 = sbr.rel target = $region3
  $region8: #{generator_forward.13} parent=0 // loop_exit
    _

</llo_original>
